<compile_context>
chip_gen: v6e
topology: v6e:2x2x1
jax: 0.10.0
libtpu: 0.0.40
codegen_flags: <defaults>
</compile_context>

<pallas_src>
import functools
import math

import jax
import jax.numpy as jnp
from jax.experimental import pallas as pl
from jax.experimental.pallas import tpu as pltpu

_MXU_DTYPE = jnp.float32  # cast point for MXU inputs (bf16 in production)


# ----------------------------- small helpers -------------------------------

def _pick_tile(dim, candidates):
    for c in candidates:
        if c <= dim and dim % c == 0:
            return c
    return dim


@functools.lru_cache(maxsize=None)
def _vmem_limit_bytes():
    # Generation-aware scoped-VMEM raise: ~75% of physical, capped at 100 MiB.
    cap = 64 * 1024 * 1024
    try:
        cap = int(pltpu.get_tpu_info().vmem_capacity_bytes)
    except Exception:
        pass
    return int(min(cap * 3 // 4, 100 * 1024 * 1024))


def _deinterleave_perm(n_heads, head_dim):
    # per-head permutation: [0,2,4,...,1,3,5,...] -> rotate-half RoPE basis
    idx = jnp.arange(n_heads * head_dim, dtype=jnp.int32).reshape(
        n_heads, head_dim // 2, 2)
    return jnp.concatenate([idx[..., 0], idx[..., 1]], axis=-1).reshape(-1)


def prepare_params(raw, n_heads, n_kv_heads, head_dim):
    """One-time parameter preprocessing (no per-call weight transposes)."""
    dq = n_heads * head_dim
    dkv = n_kv_heads * head_dim
    pq = _deinterleave_perm(n_heads, head_dim)
    pk = _deinterleave_perm(n_kv_heads, head_dim)
    wq_p = raw['wq'][pq, :]                     # (dq, D)  permuted output features
    wk_p = raw['wk'][pk, :]                     # (dkv, D)
    w_qkv_t = jnp.concatenate([wq_p, wk_p, raw['wv']], axis=0).T   # (D, dq+2*dkv)
    d_model = raw['wo'].shape[0]
    wo_h = raw['wo'].T.reshape(n_heads, head_dim, d_model)         # (H, hd, D)
    return dict(
        w_qkv_t=w_qkv_t,
        wo_h=wo_h,
        q_ln_w=raw['q_norm_w'][pq].reshape(1, dq),
        q_ln_b=raw['q_norm_b'][pq].reshape(1, dq),
        k_ln_w=raw['k_norm_w'][pk].reshape(1, dkv),
        k_ln_b=raw['k_norm_b'][pk].reshape(1, dkv),
    )


# ------------------ kernel 1: fused QKV proj + LN + RoPE --------------------

def _qkv_ln_rope_kernel(x_ref, w_ref, qw_ref, qb_ref, kw_ref, kb_ref,
                        cos_ref, sin_ref, q_ref, k_ref, v_ref, acc_ref,
                        *, n_heads, n_kv_heads, head_dim, eps):
    kk = pl.program_id(2)

    @pl.when(kk == 0)
    def _init():
        acc_ref[...] = jnp.zeros_like(acc_ref)

    acc_ref[...] += jnp.dot(
        x_ref[0].astype(_MXU_DTYPE), w_ref[...].astype(_MXU_DTYPE),
        preferred_element_type=jnp.float32)

    @pl.when(kk == pl.num_programs(2) - 1)
    def _epilogue():
        dq = n_heads * head_dim
        dkv = n_kv_heads * head_dim
        half = head_dim // 2
        acc = acc_ref[...]
        q = acc[:, :dq]
        k = acc[:, dq:dq + dkv]
        v = acc[:, dq + dkv:]

        def _ln(t, w, b):
            mu = jnp.mean(t, axis=-1, keepdims=True)
            var = jnp.mean((t - mu) ** 2, axis=-1, keepdims=True)
            return (t - mu) * jax.lax.rsqrt(var + eps) * w + b

        qn = _ln(q, qw_ref[...], qb_ref[...])
        kn = _ln(k, kw_ref[...], kb_ref[...])
        c = cos_ref[...]   # (tm, half); row for CLS position is identity
        s = sin_ref[...]

        def _rope(th):      # th: (tm, head_dim), de-interleaved basis
            t1 = th[:, :half]
            t2 = th[:, half:]
            return jnp.concatenate([t1 * c - t2 * s, t1 * s + t2 * c], axis=1)

        for h in range(n_heads):
            lo = h * head_dim
            q_ref[0, h] = _rope(qn[:, lo:lo + head_dim]).astype(q_ref.dtype)
        for g in range(n_kv_heads):
            lo = g * head_dim
            k_ref[0, g] = _rope(kn[:, lo:lo + head_dim]).astype(k_ref.dtype)
            v_ref[0, g] = v[:, lo:lo + head_dim].astype(v_ref.dtype)


def qkv_project(x, p, cos_half, sin_half, cfg, *, tm=None, tk=None):
    B, S, D = x.shape
    H, Hkv, hd = cfg['n_heads'], cfg['n_kv_heads'], cfg['head_dim']
    dq, dkv = H * hd, Hkv * hd
    dtot = dq + 2 * dkv
    tm = tm or _pick_tile(S, (256, 128, 64, 32, 16, 8))
    tk = tk or _pick_tile(D, (512, 256, 128))
    grid = (B, S // tm, D // tk)
    kernel = functools.partial(_qkv_ln_rope_kernel, n_heads=H, n_kv_heads=Hkv,
                               head_dim=hd, eps=cfg['eps'])
    return pl.pallas_call(
        kernel,
        grid=grid,
        out_shape=(jax.ShapeDtypeStruct((B, H, S, hd), x.dtype),
                   jax.ShapeDtypeStruct((B, Hkv, S, hd), x.dtype),
                   jax.ShapeDtypeStruct((B, Hkv, S, hd), x.dtype)),
        in_specs=[
            pl.BlockSpec((1, tm, tk), lambda b, i, k: (b, i, k)),
            pl.BlockSpec((tk, dtot), lambda b, i, k: (k, 0)),
            pl.BlockSpec((1, dq), lambda b, i, k: (0, 0)),
            pl.BlockSpec((1, dq), lambda b, i, k: (0, 0)),
            pl.BlockSpec((1, dkv), lambda b, i, k: (0, 0)),
            pl.BlockSpec((1, dkv), lambda b, i, k: (0, 0)),
            pl.BlockSpec((tm, hd // 2), lambda b, i, k: (i, 0)),
            pl.BlockSpec((tm, hd // 2), lambda b, i, k: (i, 0)),
        ],
        out_specs=(
            pl.BlockSpec((1, H, tm, hd), lambda b, i, k: (b, 0, i, 0)),
            pl.BlockSpec((1, Hkv, tm, hd), lambda b, i, k: (b, 0, i, 0)),
            pl.BlockSpec((1, Hkv, tm, hd), lambda b, i, k: (b, 0, i, 0)),
        ),
        scratch_shapes=[pltpu.VMEM((tm, dtot), jnp.float32)],
        compiler_params=pltpu.CompilerParams(
            dimension_semantics=("parallel", "parallel", "arbitrary"),
            vmem_limit_bytes=_vmem_limit_bytes()),
    )(x, p['w_qkv_t'], p['q_ln_w'], p['q_ln_b'], p['k_ln_w'], p['k_ln_b'],
      cos_half, sin_half)


# ---------------- kernel 2: flash attention (online softmax) ----------------

def _flash_attn_kernel(q_ref, k_ref, v_ref, o_ref, m_sc, l_sc, acc_sc, *, scale):
    j = pl.program_id(3)

    @pl.when(j == 0)
    def _init():
        m_sc[...] = jnp.full_like(m_sc, -jnp.inf)
        l_sc[...] = jnp.zeros_like(l_sc)
        acc_sc[...] = jnp.zeros_like(acc_sc)

    q = q_ref[0, 0].astype(jnp.float32) * scale
    k = k_ref[0, 0].astype(jnp.float32)
    v = v_ref[0, 0].astype(jnp.float32)
    s = jax.lax.dot_general(q.astype(_MXU_DTYPE), k.astype(_MXU_DTYPE),
                            (((1,), (1,)), ((), ())),
                            preferred_element_type=jnp.float32)      # (tq, tkv)

    m_prev = m_sc[...]
    m_new = jnp.maximum(m_prev, jnp.max(s, axis=-1, keepdims=True))
    alpha = jnp.exp(m_prev - m_new)
    p = jnp.exp(s - m_new)
    l_sc[...] = alpha * l_sc[...] + jnp.sum(p, axis=-1, keepdims=True)
    acc_sc[...] = alpha * acc_sc[...] + jnp.dot(
        p.astype(_MXU_DTYPE), v.astype(_MXU_DTYPE),
        preferred_element_type=jnp.float32)
    m_sc[...] = m_new

    @pl.when(j == pl.num_programs(3) - 1)
    def _finalize():
        o_ref[0, 0] = (acc_sc[...] * pl.reciprocal(l_sc[...], approx=True)
                       ).astype(o_ref.dtype)


def flash_attention(q, k, v, *, n_rep, tq=None, tkv=None):
    B, H, S, hd = q.shape
    scale = 1.0 / math.sqrt(hd)
    tq = tq or _pick_tile(S, (256, 128, 64, 32, 16, 8))
    tkv = tkv or _pick_tile(S, (512, 256, 128, 64, 32, 16, 8))
    grid = (B, H, S // tq, S // tkv)
    return pl.pallas_call(
        functools.partial(_flash_attn_kernel, scale=scale),
        grid=grid,
        out_shape=jax.ShapeDtypeStruct((B, H, S, hd), q.dtype),
        in_specs=[
            pl.BlockSpec((1, 1, tq, hd), lambda b, h, i, j: (b, h, i, 0)),
            pl.BlockSpec((1, 1, tkv, hd), lambda b, h, i, j: (b, h // n_rep, j, 0)),
            pl.BlockSpec((1, 1, tkv, hd), lambda b, h, i, j: (b, h // n_rep, j, 0)),
        ],
        out_specs=pl.BlockSpec((1, 1, tq, hd), lambda b, h, i, j: (b, h, i, 0)),
        scratch_shapes=[pltpu.VMEM((tq, 1), jnp.float32),
                        pltpu.VMEM((tq, 1), jnp.float32),
                        pltpu.VMEM((tq, hd), jnp.float32)],
        compiler_params=pltpu.CompilerParams(
            dimension_semantics=("parallel", "parallel", "parallel", "arbitrary"),
            vmem_limit_bytes=_vmem_limit_bytes()),
    )(q, k, v)


# ------------- kernel 3: output projection from (B, H, S, hd) ---------------

def _out_proj_kernel(o_ref, w_ref, y_ref, *, n_heads):
    tm = o_ref.shape[2]
    tn = w_ref.shape[2]
    acc = jnp.zeros((tm, tn), jnp.float32)
    for h in range(n_heads):
        acc = acc + jnp.dot(o_ref[0, h].astype(_MXU_DTYPE),
                            w_ref[h].astype(_MXU_DTYPE),
                            preferred_element_type=jnp.float32)
    y_ref[0] = acc.astype(y_ref.dtype)


def out_project(o, wo_h, *, tm=None, tn=None):
    B, H, S, hd = o.shape
    D = wo_h.shape[2]
    tm = tm or _pick_tile(S, (256, 128, 64, 32, 16, 8))
    tn = tn or _pick_tile(D, (256, 128))
    grid = (B, S // tm, D // tn)
    return pl.pallas_call(
        functools.partial(_out_proj_kernel, n_heads=H),
        grid=grid,
        out_shape=jax.ShapeDtypeStruct((B, S, D), o.dtype),
        in_specs=[
            pl.BlockSpec((1, H, tm, hd), lambda b, i, j: (b, 0, i, 0)),
            pl.BlockSpec((H, hd, tn), lambda b, i, j: (0, 0, j)),
        ],
        out_specs=pl.BlockSpec((1, tm, tn), lambda b, i, j: (b, i, j)),
        compiler_params=pltpu.CompilerParams(
            dimension_semantics=("parallel", "parallel", "parallel"),
            vmem_limit_bytes=_vmem_limit_bytes()),
    )(o, wo_h)


# ----------------------------- module forward -------------------------------

def attention_forward(x, cos_half, sin_half, p, cfg, *,
                      tm=None, tk=None, tq=None, tkv=None, tn=None):
    q, k, v = qkv_project(x, p, cos_half, sin_half, cfg, tm=tm, tk=tk)
    n_rep = cfg['n_heads'] // cfg['n_kv_heads']
    o = flash_attention(q, k, v, n_rep=n_rep, tq=tq, tkv=tkv)
    return out_project(o, p['wo_h'], tm=tm, tn=tn)


# ------------------------- pure-JAX reference check --------------------------

def _ref_layernorm(x, w, b, eps):
    mu = jnp.mean(x, axis=-1, keepdims=True)
    var = jnp.mean((x - mu) ** 2, axis=-1, keepdims=True)
    return (x - mu) * jax.lax.rsqrt(var + eps) * w + b


def _ref_rope_interleaved(x, cos, sin):
    b, s, hx, hd = x.shape
    xr = x.reshape(b, s, hx, hd // 2, 2)
    xe, xo = xr[..., 0], xr[..., 1]
    c = cos[None, :, None, :]
    sn = sin[None, :, None, :]
    return jnp.stack([xe * c - xo * sn, xe * sn + xo * c], axis=-1).reshape(b, s, hx, hd)


def ref_attention(x, cos, sin, raw, cfg):
    B, S, D = x.shape
    H, Hkv, hd = cfg['n_heads'], cfg['n_kv_heads'], cfg['head_dim']
    eps = cfg['eps']
    xq = _ref_layernorm(x @ raw['wq'].T, raw['q_norm_w'], raw['q_norm_b'], eps)
    xk = _ref_layernorm(x @ raw['wk'].T, raw['k_norm_w'], raw['k_norm_b'], eps)
    xv = x @ raw['wv'].T
    xq = _ref_rope_interleaved(xq.reshape(B, S, H, hd), cos, sin)
    xk = _ref_rope_interleaved(xk.reshape(B, S, Hkv, hd), cos, sin)
    xv = xv.reshape(B, S, Hkv, hd)
    n_rep = H // Hkv
    if n_rep > 1:
        xk = jnp.repeat(xk, n_rep, axis=2)
        xv = jnp.repeat(xv, n_rep, axis=2)
    q, k, v = (t.transpose(0, 2, 1, 3) for t in (xq, xk, xv))
    sc = jnp.einsum('bhqd,bhkd->bhqk', q, k) / math.sqrt(hd)
    pm = jax.nn.softmax(sc, axis=-1)
    o = jnp.einsum('bhqk,bhkd->bhqd', pm, v).transpose(0, 2, 1, 3).reshape(B, S, D)
    return o @ raw['wo'].T


# --------------------------------- main --------------------------------------

if __name__ == "__main__":
    jax.config.update("jax_default_matmul_precision", "highest")

    def run_case(key, B, S, D, H, Hkv, blocks):
        hd = D // H
        eps = 1e-5
        cfg = dict(n_heads=H, n_kv_heads=Hkv, head_dim=hd, eps=eps)
        ks = jax.random.split(key, 9)
        dq, dkv = H * hd, Hkv * hd

        def xavier(k, out_dim, in_dim):
            lim = math.sqrt(6.0 / (in_dim + out_dim))
            return jax.random.uniform(k, (out_dim, in_dim), jnp.float32, -lim, lim)

        raw = dict(
            wq=xavier(ks[0], dq, D), wk=xavier(ks[1], dkv, D),
            wv=xavier(ks[2], dkv, D), wo=xavier(ks[3], D, dq),
            q_norm_w=1.0 + 0.05 * jax.random.normal(ks[4], (dq,), jnp.float32),
            q_norm_b=0.05 * jax.random.normal(ks[5], (dq,), jnp.float32),
            k_norm_w=1.0 + 0.05 * jax.random.normal(ks[6], (dkv,), jnp.float32),
            k_norm_b=0.05 * jax.random.normal(ks[7], (dkv,), jnp.float32),
        )

        # rotary tables for positions 1..S-1; identity row for the CLS token (pos 0)
        half = hd // 2
        inv_freq = 1.0 / (10000.0 ** (jnp.arange(0, hd, 2, dtype=jnp.float32) / hd))
        pos = jnp.arange(S - 1, dtype=jnp.float32)
        ang = pos[:, None] * inv_freq[None, :]                       # (S-1, half)
        cos = jnp.concatenate([jnp.ones((1, half), jnp.float32), jnp.cos(ang)], 0)
        sin = jnp.concatenate([jnp.zeros((1, half), jnp.float32), jnp.sin(ang)], 0)

        x = jax.random.normal(ks[8], (B, S, D), jnp.float32)

        p = prepare_params(raw, H, Hkv, hd)
        out = attention_forward(x, cos, sin, p, cfg, **blocks)
        out = jax.block_until_ready(out)
        ref = ref_attention(x, cos, sin, raw, cfg)
        assert out.shape == (B, S, D)
        err = float(jnp.max(jnp.abs(out - ref)))
        assert jnp.allclose(out, ref, atol=5e-3, rtol=5e-3), f"max abs err {err}"

    key0, key1 = jax.random.split(jax.random.PRNGKey(0))
    # MHA case; small tile overrides so multi-step grids (K-accumulation, online
    # softmax across KV tiles, row/column tiling) are all exercised.
    run_case(key0, B=2, S=16, D=256, H=4, Hkv=4,
             blocks=dict(tm=8, tk=128, tq=8, tkv=8, tn=128))
    # GQA case (n_kv_heads = n_heads // 2, n_rep = 2) with default tile picker.
    run_case(key1, B=2, S=16, D=256, H=4, Hkv=2, blocks=dict())

    print("KERNEL_OK")
</pallas_src>

<mosaic_0001>
module attributes {stable_mosaic.version = 11 : i64} {
  func.func @_qkv_ln_rope_kernel(%arg0: i32, %arg1: i32, %arg2: i32, %arg3: memref<1x8x128xf32, #tpu.memory_space<vmem>>, %arg4: memref<128x768xf32, #tpu.memory_space<vmem>>, %arg5: memref<1x256xf32, #tpu.memory_space<vmem>>, %arg6: memref<1x256xf32, #tpu.memory_space<vmem>>, %arg7: memref<1x256xf32, #tpu.memory_space<vmem>>, %arg8: memref<1x256xf32, #tpu.memory_space<vmem>>, %arg9: memref<8x32xf32, #tpu.memory_space<vmem>>, %arg10: memref<8x32xf32, #tpu.memory_space<vmem>>, %arg11: memref<1x4x8x64xf32, #tpu.memory_space<vmem>>, %arg12: memref<1x4x8x64xf32, #tpu.memory_space<vmem>>, %arg13: memref<1x4x8x64xf32, #tpu.memory_space<vmem>>, %arg14: memref<8x768xf32, #tpu.memory_space<vmem>>) attributes {dimension_semantics = [#tpu.dimension_semantics<parallel>, #tpu.dimension_semantics<parallel>, #tpu.dimension_semantics<arbitrary>], iteration_bounds = array<i64: 2, 2, 2>, scalar_prefetch = 0 : i64, scratch_operands = 1 : i64, tpu.core_type = #tpu.core_type<tc>, window_params = [{transform_indices = @transform_0, window_bounds = array<i64: 1, 8, 128>}, {transform_indices = @transform_1, window_bounds = array<i64: 128, 768>}, {pipeline_mode = #tpu.pipeline_mode<synchronous>, transform_indices = @transform_2, window_bounds = array<i64: 1, 256>}, {pipeline_mode = #tpu.pipeline_mode<synchronous>, transform_indices = @transform_3, window_bounds = array<i64: 1, 256>}, {pipeline_mode = #tpu.pipeline_mode<synchronous>, transform_indices = @transform_4, window_bounds = array<i64: 1, 256>}, {pipeline_mode = #tpu.pipeline_mode<synchronous>, transform_indices = @transform_5, window_bounds = array<i64: 1, 256>}, {transform_indices = @transform_6, window_bounds = array<i64: 8, 32>}, {transform_indices = @transform_7, window_bounds = array<i64: 8, 32>}, {transform_indices = @transform_8, window_bounds = array<i64: 1, 4, 8, 64>}, {transform_indices = @transform_9, window_bounds = array<i64: 1, 4, 8, 64>}, {transform_indices = @transform_10, window_bounds = array<i64: 1, 4, 8, 64>}]} {
    %c0_i32 = arith.constant 0 : i32
    %0 = arith.cmpi eq, %arg2, %c0_i32 : i32
    %1 = arith.extui %0 : i1 to i32
    %c0_i32_0 = arith.constant 0 : i32
    %2 = arith.cmpi ne, %1, %c0_i32_0 : i32
    scf.if %2 {
      %cst_10 = arith.constant 0.000000e+00 : f32
      %13 = vector.broadcast %cst_10 : f32 to vector<8x768xf32>
      %c0_11 = arith.constant 0 : index
      %c0_12 = arith.constant 0 : index
      %14 = vector.load %arg14[%c0_11, %c0_12] : memref<8x768xf32, #tpu.memory_space<vmem>>, vector<8x768xf32>
      tpu.vector_store %arg14[%c0_11, %c0_12], %13 {strides = array<i32>} : memref<8x768xf32, #tpu.memory_space<vmem>>, vector<8x768xf32>,
    } else {
    }
    %c0 = arith.constant 0 : index
    %c0_1 = arith.constant 0 : index
    %3 = vector.load %arg14[%c0, %c0_1] : memref<8x768xf32, #tpu.memory_space<vmem>>, vector<8x768xf32>
    %c0_2 = arith.constant 0 : index
    %c0_3 = arith.constant 0 : index
    %c0_4 = arith.constant 0 : index
    %4 = vector.load %arg3[%c0_2, %c0_3, %c0_4] : memref<1x8x128xf32, #tpu.memory_space<vmem>>, vector<1x8x128xf32>
    %5 = vector.shape_cast %4 : vector<1x8x128xf32> to vector<8x128xf32>
    %c0_5 = arith.constant 0 : index
    %c0_6 = arith.constant 0 : index
    %6 = vector.load %arg4[%c0_5, %c0_6] : memref<128x768xf32, #tpu.memory_space<vmem>>, vector<128x768xf32>
    %cst = arith.constant dense<0.000000e+00> : vector<8x768xf32>
    %7 = tpu.matmul %5, %6, %cst {dimension_numbers = #tpu.dot_dimension_numbers<[1], [0], [0], [1], [0, 0, 1, 1], [], []>, precision = #tpu.contract_precision<fp32>} : vector<8x128xf32>, vector<128x768xf32>, vector<8x768xf32> -> vector<8x768xf32>
    %8 = arith.addf %3, %7 : vector<8x768xf32>
    %c0_7 = arith.constant 0 : index
    %c0_8 = arith.constant 0 : index
    %9 = vector.load %arg14[%c0_7, %c0_8] : memref<8x768xf32, #tpu.memory_space<vmem>>, vector<8x768xf32>
    tpu.vector_store %arg14[%c0_7, %c0_8], %8 {strides = array<i32>} : memref<8x768xf32, #tpu.memory_space<vmem>>, vector<8x768xf32>,
    %c1_i32 = arith.constant 1 : i32
    %10 = arith.cmpi eq, %arg2, %c1_i32 : i32
    %11 = arith.extui %10 : i1 to i32
    %c0_i32_9 = arith.constant 0 : i32
    %12 = arith.cmpi ne, %11, %c0_i32_9 : i32
    scf.if %12 {
      %c0_10 = arith.constant 0 : index
      %c0_11 = arith.constant 0 : index
      %13 = vector.load %arg14[%c0_10, %c0_11] : memref<8x768xf32, #tpu.memory_space<vmem>>, vector<8x768xf32>
      %14 = vector.extract_strided_slice %13 {offsets = [0, 0], sizes = [8, 256], strides = [1, 1]} : vector<8x768xf32> to vector<8x256xf32>
      %15 = vector.extract_strided_slice %13 {offsets = [0, 256], sizes = [8, 256], strides = [1, 1]} : vector<8x768xf32> to vector<8x256xf32>
      %16 = vector.extract_strided_slice %13 {offsets = [0, 512], sizes = [8, 256], strides = [1, 1]} : vector<8x768xf32> to vector<8x256xf32>
      %c0_12 = arith.constant 0 : index
      %c0_13 = arith.constant 0 : index
      %17 = vector.load %arg5[%c0_12, %c0_13] : memref<1x256xf32, #tpu.memory_space<vmem>>, vector<1x256xf32>
      %c0_14 = arith.constant 0 : index
      %c0_15 = arith.constant 0 : index
      %18 = vector.load %arg6[%c0_14, %c0_15] : memref<1x256xf32, #tpu.memory_space<vmem>>, vector<1x256xf32>
      %cst_16 = arith.constant dense<0.000000e+00> : vector<8xf32>
      %19 = vector.multi_reduction <add>, %14, %cst_16 [1] : vector<8x256xf32> to vector<8xf32>
      %20 = vector.shape_cast %19 : vector<8xf32> to vector<8x1xf32>
      %cst_17 = arith.constant 2.560000e+02 : f32
      %21 = vector.broadcast %cst_17 : f32 to vector<8x1xf32>
      %22 = arith.divf %20, %21 : vector<8x1xf32>
      %23 = vector.broadcast %22 : vector<8x1xf32> to vector<8x256xf32>
      %24 = arith.subf %14, %23 : vector<8x256xf32>
      %25 = arith.mulf %24, %24 : vector<8x256xf32>
      %cst_18 = arith.constant dense<0.000000e+00> : vector<8xf32>
      %26 = vector.multi_reduction <add>, %25, %cst_18 [1] : vector<8x256xf32> to vector<8xf32>
      %27 = vector.shape_cast %26 : vector<8xf32> to vector<8x1xf32>
      %cst_19 = arith.constant 2.560000e+02 : f32
      %28 = vector.broadcast %cst_19 : f32 to vector<8x1xf32>
      %29 = arith.divf %27, %28 : vector<8x1xf32>
      %30 = vector.broadcast %22 : vector<8x1xf32> to vector<8x256xf32>
      %31 = arith.subf %14, %30 : vector<8x256xf32>
      %cst_20 = arith.constant 9.99999974E-6 : f32
      %32 = vector.broadcast %cst_20 : f32 to vector<8x1xf32>
      %33 = arith.addf %29, %32 : vector<8x1xf32>
      %34 = math.rsqrt %33 : vector<8x1xf32>
      %35 = vector.broadcast %34 : vector<8x1xf32> to vector<8x256xf32>
      %36 = arith.mulf %31, %35 : vector<8x256xf32>
      %37 = vector.broadcast %17 : vector<1x256xf32> to vector<8x256xf32>
      %38 = arith.mulf %36, %37 : vector<8x256xf32>
      %39 = vector.broadcast %18 : vector<1x256xf32> to vector<8x256xf32>
      %40 = arith.addf %38, %39 : vector<8x256xf32>
      %c0_21 = arith.constant 0 : index
      %c0_22 = arith.constant 0 : index
      %41 = vector.load %arg7[%c0_21, %c0_22] : memref<1x256xf32, #tpu.memory_space<vmem>>, vector<1x256xf32>
      %c0_23 = arith.constant 0 : index
      %c0_24 = arith.constant 0 : index
      %42 = vector.load %arg8[%c0_23, %c0_24] : memref<1x256xf32, #tpu.memory_space<vmem>>, vector<1x256xf32>
      %cst_25 = arith.constant dense<0.000000e+00> : vector<8xf32>
      %43 = vector.multi_reduction <add>, %15, %cst_25 [1] : vector<8x256xf32> to vector<8xf32>
      %44 = vector.shape_cast %43 : vector<8xf32> to vector<8x1xf32>
      %cst_26 = arith.constant 2.560000e+02 : f32
      %45 = vector.broadcast %cst_26 : f32 to vector<8x1xf32>
      %46 = arith.divf %44, %45 : vector<8x1xf32>
      %47 = vector.broadcast %46 : vector<8x1xf32> to vector<8x256xf32>
      %48 = arith.subf %15, %47 : vector<8x256xf32>
      %49 = arith.mulf %48, %48 : vector<8x256xf32>
      %cst_27 = arith.constant dense<0.000000e+00> : vector<8xf32>
      %50 = vector.multi_reduction <add>, %49, %cst_27 [1] : vector<8x256xf32> to vector<8xf32>
      %51 = vector.shape_cast %50 : vector<8xf32> to vector<8x1xf32>
      %cst_28 = arith.constant 2.560000e+02 : f32
      %52 = vector.broadcast %cst_28 : f32 to vector<8x1xf32>
      %53 = arith.divf %51, %52 : vector<8x1xf32>
      %54 = vector.broadcast %46 : vector<8x1xf32> to vector<8x256xf32>
      %55 = arith.subf %15, %54 : vector<8x256xf32>
      %cst_29 = arith.constant 9.99999974E-6 : f32
      %56 = vector.broadcast %cst_29 : f32 to vector<8x1xf32>
      %57 = arith.addf %53, %56 : vector<8x1xf32>
      %58 = math.rsqrt %57 : vector<8x1xf32>
      %59 = vector.broadcast %58 : vector<8x1xf32> to vector<8x256xf32>
      %60 = arith.mulf %55, %59 : vector<8x256xf32>
      %61 = vector.broadcast %41 : vector<1x256xf32> to vector<8x256xf32>
      %62 = arith.mulf %60, %61 : vector<8x256xf32>
      %63 = vector.broadcast %42 : vector<1x256xf32> to vector<8x256xf32>
      %64 = arith.addf %62, %63 : vector<8x256xf32>
      %c0_30 = arith.constant 0 : index
      %c0_31 = arith.constant 0 : index
      %65 = vector.load %arg9[%c0_30, %c0_31] : memref<8x32xf32, #tpu.memory_space<vmem>>, vector<8x32xf32>
      %c0_32 = arith.constant 0 : index
      %c0_33 = arith.constant 0 : index
      %66 = vector.load %arg10[%c0_32, %c0_33] : memref<8x32xf32, #tpu.memory_space<vmem>>, vector<8x32xf32>
      %67 = vector.extract_strided_slice %40 {offsets = [0, 0], sizes = [8, 64], strides = [1, 1]} : vector<8x256xf32> to vector<8x64xf32>
      %68 = vector.extract_strided_slice %67 {offsets = [0, 0], sizes = [8, 32], strides = [1, 1]} : vector<8x64xf32> to vector<8x32xf32>
      %69 = vector.extract_strided_slice %67 {offsets = [0, 32], sizes = [8, 32], strides = [1, 1]} : vector<8x64xf32> to vector<8x32xf32>
      %70 = arith.mulf %68, %65 : vector<8x32xf32>
      %71 = arith.mulf %69, %66 : vector<8x32xf32>
      %72 = arith.subf %70, %71 : vector<8x32xf32>
      %73 = arith.mulf %68, %66 : vector<8x32xf32>
      %74 = arith.mulf %69, %65 : vector<8x32xf32>
      %75 = arith.addf %73, %74 : vector<8x32xf32>
      %76 = tpu.concatenate %72, %75 in 1 : vector<8x32xf32>, vector<8x32xf32> -> vector<8x64xf32>
      %c0_34 = arith.constant 0 : index
      %c0_35 = arith.constant 0 : index
      %c0_36 = arith.constant 0 : index
      %c0_37 = arith.constant 0 : index
      %77 = vector.load %arg11[%c0_34, %c0_35, %c0_36, %c0_37] : memref<1x4x8x64xf32, #tpu.memory_space<vmem>>, vector<1x1x8x64xf32>
      %78 = vector.shape_cast %77 : vector<1x1x8x64xf32> to vector<8x64xf32>
      %79 = vector.shape_cast %76 : vector<8x64xf32> to vector<1x1x8x64xf32>
      tpu.vector_store %arg11[%c0_34, %c0_35, %c0_36, %c0_37], %79 {strides = array<i32>} : memref<1x4x8x64xf32, #tpu.memory_space<vmem>>, vector<1x1x8x64xf32>,
      %80 = vector.extract_strided_slice %40 {offsets = [0, 64], sizes = [8, 64], strides = [1, 1]} : vector<8x256xf32> to vector<8x64xf32>
      %81 = vector.extract_strided_slice %80 {offsets = [0, 0], sizes = [8, 32], strides = [1, 1]} : vector<8x64xf32> to vector<8x32xf32>
      %82 = vector.extract_strided_slice %80 {offsets = [0, 32], sizes = [8, 32], strides = [1, 1]} : vector<8x64xf32> to vector<8x32xf32>
      %83 = arith.mulf %81, %65 : vector<8x32xf32>
      %84 = arith.mulf %82, %66 : vector<8x32xf32>
      %85 = arith.subf %83, %84 : vector<8x32xf32>
      %86 = arith.mulf %81, %66 : vector<8x32xf32>
      %87 = arith.mulf %82, %65 : vector<8x32xf32>
      %88 = arith.addf %86, %87 : vector<8x32xf32>
      %89 = tpu.concatenate %85, %88 in 1 : vector<8x32xf32>, vector<8x32xf32> -> vector<8x64xf32>
      %c0_38 = arith.constant 0 : index
      %c1 = arith.constant 1 : index
      %c0_39 = arith.constant 0 : index
      %c0_40 = arith.constant 0 : index
      %90 = vector.load %arg11[%c0_38, %c1, %c0_39, %c0_40] : memref<1x4x8x64xf32, #tpu.memory_space<vmem>>, vector<1x1x8x64xf32>
      %91 = vector.shape_cast %90 : vector<1x1x8x64xf32> to vector<8x64xf32>
      %92 = vector.shape_cast %89 : vector<8x64xf32> to vector<1x1x8x64xf32>
      tpu.vector_store %arg11[%c0_38, %c1, %c0_39, %c0_40], %92 {strides = array<i32>} : memref<1x4x8x64xf32, #tpu.memory_space<vmem>>, vector<1x1x8x64xf32>,
      %93 = vector.extract_strided_slice %40 {offsets = [0, 128], sizes = [8, 64], strides = [1, 1]} : vector<8x256xf32> to vector<8x64xf32>
      %94 = vector.extract_strided_slice %93 {offsets = [0, 0], sizes = [8, 32], strides = [1, 1]} : vector<8x64xf32> to vector<8x32xf32>
      %95 = vector.extract_strided_slice %93 {offsets = [0, 32], sizes = [8, 32], strides = [1, 1]} : vector<8x64xf32> to vector<8x32xf32>
      %96 = arith.mulf %94, %65 : vector<8x32xf32>
      %97 = arith.mulf %95, %66 : vector<8x32xf32>
      %98 = arith.subf %96, %97 : vector<8x32xf32>
      %99 = arith.mulf %94, %66 : vector<8x32xf32>
      %100 = arith.mulf %95, %65 : vector<8x32xf32>
      %101 = arith.addf %99, %100 : vector<8x32xf32>
      %102 = tpu.concatenate %98, %101 in 1 : vector<8x32xf32>, vector<8x32xf32> -> vector<8x64xf32>
      %c0_41 = arith.constant 0 : index
      %c2 = arith.constant 2 : index
      %c0_42 = arith.constant 0 : index
      %c0_43 = arith.constant 0 : index
      %103 = vector.load %arg11[%c0_41, %c2, %c0_42, %c0_43] : memref<1x4x8x64xf32, #tpu.memory_space<vmem>>, vector<1x1x8x64xf32>
      %104 = vector.shape_cast %103 : vector<1x1x8x64xf32> to vector<8x64xf32>
      %105 = vector.shape_cast %102 : vector<8x64xf32> to vector<1x1x8x64xf32>
      tpu.vector_store %arg11[%c0_41, %c2, %c0_42, %c0_43], %105 {strides = array<i32>} : memref<1x4x8x64xf32, #tpu.memory_space<vmem>>, vector<1x1x8x64xf32>,
      %106 = vector.extract_strided_slice %40 {offsets = [0, 192], sizes = [8, 64], strides = [1, 1]} : vector<8x256xf32> to vector<8x64xf32>
      %107 = vector.extract_strided_slice %106 {offsets = [0, 0], sizes = [8, 32], strides = [1, 1]} : vector<8x64xf32> to vector<8x32xf32>
      %108 = vector.extract_strided_slice %106 {offsets = [0, 32], sizes = [8, 32], strides = [1, 1]} : vector<8x64xf32> to vector<8x32xf32>
      %109 = arith.mulf %107, %65 : vector<8x32xf32>
      %110 = arith.mulf %108, %66 : vector<8x32xf32>
      %111 = arith.subf %109, %110 : vector<8x32xf32>
      %112 = arith.mulf %107, %66 : vector<8x32xf32>
      %113 = arith.mulf %108, %65 : vector<8x32xf32>
      %114 = arith.addf %112, %113 : vector<8x32xf32>
      %115 = tpu.concatenate %111, %114 in 1 : vector<8x32xf32>, vector<8x32xf32> -> vector<8x64xf32>
      %c0_44 = arith.constant 0 : index
      %c3 = arith.constant 3 : index
      %c0_45 = arith.constant 0 : index
      %c0_46 = arith.constant 0 : index
      %116 = vector.load %arg11[%c0_44, %c3, %c0_45, %c0_46] : memref<1x4x8x64xf32, #tpu.memory_space<vmem>>, vector<1x1x8x64xf32>
      %117 = vector.shape_cast %116 : vector<1x1x8x64xf32> to vector<8x64xf32>
      %118 = vector.shape_cast %115 : vector<8x64xf32> to vector<1x1x8x64xf32>
      tpu.vector_store %arg11[%c0_44, %c3, %c0_45, %c0_46], %118 {strides = array<i32>} : memref<1x4x8x64xf32, #tpu.memory_space<vmem>>, vector<1x1x8x64xf32>,
      %119 = vector.extract_strided_slice %64 {offsets = [0, 0], sizes = [8, 64], strides = [1, 1]} : vector<8x256xf32> to vector<8x64xf32>
      %120 = vector.extract_strided_slice %119 {offsets = [0, 0], sizes = [8, 32], strides = [1, 1]} : vector<8x64xf32> to vector<8x32xf32>
      %121 = vector.extract_strided_slice %119 {offsets = [0, 32], sizes = [8, 32], strides = [1, 1]} : vector<8x64xf32> to vector<8x32xf32>
      %122 = arith.mulf %120, %65 : vector<8x32xf32>
      %123 = arith.mulf %121, %66 : vector<8x32xf32>
      %124 = arith.subf %122, %123 : vector<8x32xf32>
      %125 = arith.mulf %120, %66 : vector<8x32xf32>
      %126 = arith.mulf %121, %65 : vector<8x32xf32>
      %127 = arith.addf %125, %126 : vector<8x32xf32>
      %128 = tpu.concatenate %124, %127 in 1 : vector<8x32xf32>, vector<8x32xf32> -> vector<8x64xf32>
      %c0_47 = arith.constant 0 : index
      %c0_48 = arith.constant 0 : index
      %c0_49 = arith.constant 0 : index
      %c0_50 = arith.constant 0 : index
      %129 = vector.load %arg12[%c0_47, %c0_48, %c0_49, %c0_50] : memref<1x4x8x64xf32, #tpu.memory_space<vmem>>, vector<1x1x8x64xf32>
      %130 = vector.shape_cast %129 : vector<1x1x8x64xf32> to vector<8x64xf32>
      %131 = vector.shape_cast %128 : vector<8x64xf32> to vector<1x1x8x64xf32>
      tpu.vector_store %arg12[%c0_47, %c0_48, %c0_49, %c0_50], %131 {strides = array<i32>} : memref<1x4x8x64xf32, #tpu.memory_space<vmem>>, vector<1x1x8x64xf32>,
      %132 = vector.extract_strided_slice %16 {offsets = [0, 0], sizes = [8, 64], strides = [1, 1]} : vector<8x256xf32> to vector<8x64xf32>
      %c0_51 = arith.constant 0 : index
      %c0_52 = arith.constant 0 : index
      %c0_53 = arith.constant 0 : index
      %c0_54 = arith.constant 0 : index
      %133 = vector.load %arg13[%c0_51, %c0_52, %c0_53, %c0_54] : memref<1x4x8x64xf32, #tpu.memory_space<vmem>>, vector<1x1x8x64xf32>
      %134 = vector.shape_cast %133 : vector<1x1x8x64xf32> to vector<8x64xf32>
      %135 = vector.shape_cast %132 : vector<8x64xf32> to vector<1x1x8x64xf32>
      tpu.vector_store %arg13[%c0_51, %c0_52, %c0_53, %c0_54], %135 {strides = array<i32>} : memref<1x4x8x64xf32, #tpu.memory_space<vmem>>, vector<1x1x8x64xf32>,
      %136 = vector.extract_strided_slice %64 {offsets = [0, 64], sizes = [8, 64], strides = [1, 1]} : vector<8x256xf32> to vector<8x64xf32>
      %137 = vector.extract_strided_slice %136 {offsets = [0, 0], sizes = [8, 32], strides = [1, 1]} : vector<8x64xf32> to vector<8x32xf32>
      %138 = vector.extract_strided_slice %136 {offsets = [0, 32], sizes = [8, 32], strides = [1, 1]} : vector<8x64xf32> to vector<8x32xf32>
      %139 = arith.mulf %137, %65 : vector<8x32xf32>
      %140 = arith.mulf %138, %66 : vector<8x32xf32>
      %141 = arith.subf %139, %140 : vector<8x32xf32>
      %142 = arith.mulf %137, %66 : vector<8x32xf32>
      %143 = arith.mulf %138, %65 : vector<8x32xf32>
      %144 = arith.addf %142, %143 : vector<8x32xf32>
      %145 = tpu.concatenate %141, %144 in 1 : vector<8x32xf32>, vector<8x32xf32> -> vector<8x64xf32>
      %c0_55 = arith.constant 0 : index
      %c1_56 = arith.constant 1 : index
      %c0_57 = arith.constant 0 : index
      %c0_58 = arith.constant 0 : index
      %146 = vector.load %arg12[%c0_55, %c1_56, %c0_57, %c0_58] : memref<1x4x8x64xf32, #tpu.memory_space<vmem>>, vector<1x1x8x64xf32>
      %147 = vector.shape_cast %146 : vector<1x1x8x64xf32> to vector<8x64xf32>
      %148 = vector.shape_cast %145 : vector<8x64xf32> to vector<1x1x8x64xf32>
      tpu.vector_store %arg12[%c0_55, %c1_56, %c0_57, %c0_58], %148 {strides = array<i32>} : memref<1x4x8x64xf32, #tpu.memory_space<vmem>>, vector<1x1x8x64xf32>,
      %149 = vector.extract_strided_slice %16 {offsets = [0, 64], sizes = [8, 64], strides = [1, 1]} : vector<8x256xf32> to vector<8x64xf32>
      %c0_59 = arith.constant 0 : index
      %c1_60 = arith.constant 1 : index
      %c0_61 = arith.constant 0 : index
      %c0_62 = arith.constant 0 : index
      %150 = vector.load %arg13[%c0_59, %c1_60, %c0_61, %c0_62] : memref<1x4x8x64xf32, #tpu.memory_space<vmem>>, vector<1x1x8x64xf32>
      %151 = vector.shape_cast %150 : vector<1x1x8x64xf32> to vector<8x64xf32>
      %152 = vector.shape_cast %149 : vector<8x64xf32> to vector<1x1x8x64xf32>
      tpu.vector_store %arg13[%c0_59, %c1_60, %c0_61, %c0_62], %152 {strides = array<i32>} : memref<1x4x8x64xf32, #tpu.memory_space<vmem>>, vector<1x1x8x64xf32>,
      %153 = vector.extract_strided_slice %64 {offsets = [0, 128], sizes = [8, 64], strides = [1, 1]} : vector<8x256xf32> to vector<8x64xf32>
      %154 = vector.extract_strided_slice %153 {offsets = [0, 0], sizes = [8, 32], strides = [1, 1]} : vector<8x64xf32> to vector<8x32xf32>
      %155 = vector.extract_strided_slice %153 {offsets = [0, 32], sizes = [8, 32], strides = [1, 1]} : vector<8x64xf32> to vector<8x32xf32>
      %156 = arith.mulf %154, %65 : vector<8x32xf32>
      %157 = arith.mulf %155, %66 : vector<8x32xf32>
      %158 = arith.subf %156, %157 : vector<8x32xf32>
      %159 = arith.mulf %154, %66 : vector<8x32xf32>
      %160 = arith.mulf %155, %65 : vector<8x32xf32>
      %161 = arith.addf %159, %160 : vector<8x32xf32>
      %162 = tpu.concatenate %158, %161 in 1 : vector<8x32xf32>, vector<8x32xf32> -> vector<8x64xf32>
      %c0_63 = arith.constant 0 : index
      %c2_64 = arith.constant 2 : index
      %c0_65 = arith.constant 0 : index
      %c0_66 = arith.constant 0 : index
      %163 = vector.load %arg12[%c0_63, %c2_64, %c0_65, %c0_66] : memref<1x4x8x64xf32, #tpu.memory_space<vmem>>, vector<1x1x8x64xf32>
      %164 = vector.shape_cast %163 : vector<1x1x8x64xf32> to vector<8x64xf32>
      %165 = vector.shape_cast %162 : vector<8x64xf32> to vector<1x1x8x64xf32>
      tpu.vector_store %arg12[%c0_63, %c2_64, %c0_65, %c0_66], %165 {strides = array<i32>} : memref<1x4x8x64xf32, #tpu.memory_space<vmem>>, vector<1x1x8x64xf32>,
      %166 = vector.extract_strided_slice %16 {offsets = [0, 128], sizes = [8, 64], strides = [1, 1]} : vector<8x256xf32> to vector<8x64xf32>
      %c0_67 = arith.constant 0 : index
      %c2_68 = arith.constant 2 : index
      %c0_69 = arith.constant 0 : index
      %c0_70 = arith.constant 0 : index
      %167 = vector.load %arg13[%c0_67, %c2_68, %c0_69, %c0_70] : memref<1x4x8x64xf32, #tpu.memory_space<vmem>>, vector<1x1x8x64xf32>
      %168 = vector.shape_cast %167 : vector<1x1x8x64xf32> to vector<8x64xf32>
      %169 = vector.shape_cast %166 : vector<8x64xf32> to vector<1x1x8x64xf32>
      tpu.vector_store %arg13[%c0_67, %c2_68, %c0_69, %c0_70], %169 {strides = array<i32>} : memref<1x4x8x64xf32, #tpu.memory_space<vmem>>, vector<1x1x8x64xf32>,
      %170 = vector.extract_strided_slice %64 {offsets = [0, 192], sizes = [8, 64], strides = [1, 1]} : vector<8x256xf32> to vector<8x64xf32>
      %171 = vector.extract_strided_slice %170 {offsets = [0, 0], sizes = [8, 32], strides = [1, 1]} : vector<8x64xf32> to vector<8x32xf32>
      %172 = vector.extract_strided_slice %170 {offsets = [0, 32], sizes = [8, 32], strides = [1, 1]} : vector<8x64xf32> to vector<8x32xf32>
      %173 = arith.mulf %171, %65 : vector<8x32xf32>
      %174 = arith.mulf %172, %66 : vector<8x32xf32>
      %175 = arith.subf %173, %174 : vector<8x32xf32>
      %176 = arith.mulf %171, %66 : vector<8x32xf32>
      %177 = arith.mulf %172, %65 : vector<8x32xf32>
      %178 = arith.addf %176, %177 : vector<8x32xf32>
      %179 = tpu.concatenate %175, %178 in 1 : vector<8x32xf32>, vector<8x32xf32> -> vector<8x64xf32>
      %c0_71 = arith.constant 0 : index
      %c3_72 = arith.constant 3 : index
      %c0_73 = arith.constant 0 : index
      %c0_74 = arith.constant 0 : index
      %180 = vector.load %arg12[%c0_71, %c3_72, %c0_73, %c0_74] : memref<1x4x8x64xf32, #tpu.memory_space<vmem>>, vector<1x1x8x64xf32>
      %181 = vector.shape_cast %180 : vector<1x1x8x64xf32> to vector<8x64xf32>
      %182 = vector.shape_cast %179 : vector<8x64xf32> to vector<1x1x8x64xf32>
      tpu.vector_store %arg12[%c0_71, %c3_72, %c0_73, %c0_74], %182 {strides = array<i32>} : memref<1x4x8x64xf32, #tpu.memory_space<vmem>>, vector<1x1x8x64xf32>,
      %183 = vector.extract_strided_slice %16 {offsets = [0, 192], sizes = [8, 64], strides = [1, 1]} : vector<8x256xf32> to vector<8x64xf32>
      %c0_75 = arith.constant 0 : index
      %c3_76 = arith.constant 3 : index
      %c0_77 = arith.constant 0 : index
      %c0_78 = arith.constant 0 : index
      %184 = vector.load %arg13[%c0_75, %c3_76, %c0_77, %c0_78] : memref<1x4x8x64xf32, #tpu.memory_space<vmem>>, vector<1x1x8x64xf32>
      %185 = vector.shape_cast %184 : vector<1x1x8x64xf32> to vector<8x64xf32>
      %186 = vector.shape_cast %183 : vector<8x64xf32> to vector<1x1x8x64xf32>
      tpu.vector_store %arg13[%c0_75, %c3_76, %c0_77, %c0_78], %186 {strides = array<i32>} : memref<1x4x8x64xf32, #tpu.memory_space<vmem>>, vector<1x1x8x64xf32>,
    } else {
    }
    return
  }
  func.func @transform_0(%arg0: i32, %arg1: i32, %arg2: i32) -> (i32, i32, i32) {
    %c0_i32 = arith.constant 0 : i32
    return %arg0, %arg1, %arg2 : i32, i32, i32
  }
  func.func @transform_1(%arg0: i32, %arg1: i32, %arg2: i32) -> (i32, i32) {
    %c0_i32 = arith.constant 0 : i32
    %c0_i32_0 = arith.constant 0 : i32
    return %arg2, %c0_i32 : i32, i32
  }
  func.func @transform_2(%arg0: i32, %arg1: i32, %arg2: i32) -> (i32, i32) {
    %c0_i32 = arith.constant 0 : i32
    %c0_i32_0 = arith.constant 0 : i32
    %c0_i32_1 = arith.constant 0 : i32
    return %c0_i32, %c0_i32_0 : i32, i32
  }
  func.func @transform_3(%arg0: i32, %arg1: i32, %arg2: i32) -> (i32, i32) {
    %c0_i32 = arith.constant 0 : i32
    %c0_i32_0 = arith.constant 0 : i32
    %c0_i32_1 = arith.constant 0 : i32
    return %c0_i32, %c0_i32_0 : i32, i32
  }
  func.func @transform_4(%arg0: i32, %arg1: i32, %arg2: i32) -> (i32, i32) {
    %c0_i32 = arith.constant 0 : i32
    %c0_i32_0 = arith.constant 0 : i32
    %c0_i32_1 = arith.constant 0 : i32
    return %c0_i32, %c0_i32_0 : i32, i32
  }
  func.func @transform_5(%arg0: i32, %arg1: i32, %arg2: i32) -> (i32, i32) {
    %c0_i32 = arith.constant 0 : i32
    %c0_i32_0 = arith.constant 0 : i32
    %c0_i32_1 = arith.constant 0 : i32
    return %c0_i32, %c0_i32_0 : i32, i32
  }
  func.func @transform_6(%arg0: i32, %arg1: i32, %arg2: i32) -> (i32, i32) {
    %c0_i32 = arith.constant 0 : i32
    %c0_i32_0 = arith.constant 0 : i32
    return %arg1, %c0_i32 : i32, i32
  }
  func.func @transform_7(%arg0: i32, %arg1: i32, %arg2: i32) -> (i32, i32) {
    %c0_i32 = arith.constant 0 : i32
    %c0_i32_0 = arith.constant 0 : i32
    return %arg1, %c0_i32 : i32, i32
  }
  func.func @transform_8(%arg0: i32, %arg1: i32, %arg2: i32) -> (i32, i32, i32, i32) {
    %c0_i32 = arith.constant 0 : i32
    %c0_i32_0 = arith.constant 0 : i32
    %c0_i32_1 = arith.constant 0 : i32
    return %arg0, %c0_i32, %arg1, %c0_i32_0 : i32, i32, i32, i32
  }
  func.func @transform_9(%arg0: i32, %arg1: i32, %arg2: i32) -> (i32, i32, i32, i32) {
    %c0_i32 = arith.constant 0 : i32
    %c0_i32_0 = arith.constant 0 : i32
    %c0_i32_1 = arith.constant 0 : i32
    return %arg0, %c0_i32, %arg1, %c0_i32_0 : i32, i32, i32, i32
  }
  func.func @transform_10(%arg0: i32, %arg1: i32, %arg2: i32) -> (i32, i32, i32, i32) {
    %c0_i32 = arith.constant 0 : i32
    %c0_i32_0 = arith.constant 0 : i32
    %c0_i32_1 = arith.constant 0 : i32
    return %arg0, %c0_i32, %arg1, %c0_i32_0 : i32, i32, i32, i32
  }
}

</mosaic_0001>

<llo_original>
// kernel: tpu_custom_call.1
$region0: #{tpu_custom_call.1}
  #allocation0 [shape = 'u32[]', space=smem, size = 0x4, offset = 0x4, fixed_abs, tag = 'smem constant byte address 0x4 - core index']
  #allocation1 [shape = 'u32[144,128]{1,0:T(1,128)}', space=vmem, size = 0x12000, scoped, tag = 'internal scratch']
  #allocation2 [shape = 'f32[8,768]{1,0:T(8,128)}', space=vmem, size = 0x6000, scoped, tag = 'scratch operand']
  %s0 = inlined_call_operand.hbm [shape: f32[2,16,256], index: 0, kind: input, shape index: {}]
  %s1 = inlined_call_operand.hbm [shape: f32[256,768], index: 1, kind: input, shape index: {}]
  %s2 = inlined_call_operand.vmem [shape: f32[1,256], index: 2, kind: input, shape index: {}]
  %s3 = inlined_call_operand.vmem [shape: f32[1,256], index: 3, kind: input, shape index: {}]
  %s4 = inlined_call_operand.vmem [shape: f32[1,256], index: 4, kind: input, shape index: {}]
  %s5 = inlined_call_operand.vmem [shape: f32[1,256], index: 5, kind: input, shape index: {}]
  %s6 = inlined_call_operand.hbm [shape: f32[16,32], index: 6, kind: input, shape index: {}]
  %s7 = inlined_call_operand.hbm [shape: f32[16,32], index: 7, kind: input, shape index: {}]
  %s8 = inlined_call_operand.hbm [shape: f32[2,4,16,64], index: 8, kind: output, shape index: {0}]
  %s9 = inlined_call_operand.hbm [shape: f32[2,4,16,64], index: 9, kind: output, shape index: {1}]
  %s10 = inlined_call_operand.hbm [shape: f32[2,4,16,64], index: 10, kind: output, shape index: {2}]
  %11 = xla_tuple %s8, %s9, %s10
  %s12 = sld [smem:[#allocation0]]
  $region105: #{tpu_custom_call.1} parent=0
    _
  %s14 = ssub.s32 1, %s12
  %s15 = scalar_select 0, %s14, %s12
  $region1: #{tpu_custom_call.1} parent=0
    #allocation3 [shape = 'u8[8192]{0}', space=vmem, size = 0x2000, scoped, tag = 'input window, operand 0']
    #allocation4 [shape = 's32[2]{0}', space=sflag, size = 0x8, scoped, tag = 'scoped memory for tpu_custom_call.1']
    #allocation5 [shape = 's32[2]{0}', space=sflag, size = 0x8, scoped, tag = 'scoped memory for tpu_custom_call.1']
    #allocation6 [shape = 'u8[786432]{0}', space=vmem, size = 0xc0000, scoped, tag = 'input window, operand 1']
    #allocation7 [shape = 's32[2]{0}', space=sflag, size = 0x8, scoped, tag = 'scoped memory for tpu_custom_call.1']
    #allocation8 [shape = 'u8[8192]{0}', space=vmem, size = 0x2000, scoped, tag = 'input window, operand 6']
    #allocation9 [shape = 'u8[8192]{0}', space=vmem, size = 0x2000, scoped, tag = 'input window, operand 7']
    #allocation10 [shape = 's32[2]{0}', space=sflag, size = 0x8, scoped, tag = 'scoped memory for tpu_custom_call.1']
    #allocation11 [shape = 'u8[32768]{0}', space=vmem, size = 0x8000, scoped, tag = 'output window, operand 0']
    #allocation12 [shape = 'u8[32768]{0}', space=vmem, size = 0x8000, scoped, tag = 'output window, operand 1']
    #allocation13 [shape = 's32[2]{0}', space=sflag, size = 0x8, scoped, tag = 'scoped memory for tpu_custom_call.1']
    #allocation14 [shape = 'u8[32768]{0}', space=vmem, size = 0x8000, scoped, tag = 'output window, operand 2']
    %16 = vsyncpa [#allocation4], 0
    %s17 = scalar_lea.sflag [#allocation4], 1
    %18 = vsyncpa %s17, 0
    %19 = vsyncpa [#allocation7], 0
    %s20 = scalar_lea.sflag [#allocation7], 1
    %21 = vsyncpa %s20, 0
    %22 = vsyncpa [#allocation10], 0
    %s23 = scalar_lea.sflag [#allocation10], 1
    %24 = vsyncpa %s23, 0
    %25 = vsyncpa [#allocation5], 0
    %s26 = scalar_lea.sflag [#allocation5], 1
    %27 = vsyncpa %s26, 0
    %28 = vsyncpa [#allocation13], 0
    %s29 = scalar_lea.sflag [#allocation13], 1
    %30 = vsyncpa %s29, 0
    loop: start=0, step=1, limit=10
    $region2: #{tpu_custom_call.1} parent=1 // loop_pre_header
      _
    $region3: #{tpu_custom_call.1} parent=1 // loop_header
      %s32 = sphi 0, %s36
      %p33 = scmp.ge.s32.totalorder %s32, 10
      %s39 = sphi 0, %s58
      %s40 = sphi 0, %s54
      %s41 = sphi 0, %s50
      %s42 = sphi 0, %s39
      %s43 = sphi 0, %s40
      %s44 = sphi 0, %s41
      %s45 = sphi 0, %s42
      %s46 = sphi 0, %s43
      %s47 = sphi 0, %s44
      %s65 = sphi 0, %s67
      %s68 = sphi 0, %s65
      %s69 = sphi 0, %s68
      %s85 = sphi 0, %s69
      %s91 = sphi 0, %s93
      %s94 = sphi 0, %s91
      %s95 = sphi 0, %s94
      %s111 = sphi 0, %s95
      %s115 = sphi 0, %s115
      %s117 = sphi 0, %s115
      %s118 = sphi 0, %s117
      %s132 = sphi 0, %s118
      %s136 = sphi 0, %s136
      %s138 = sphi 0, %s136
      %s139 = sphi 0, %s138
      %s153 = sphi 0, %s139
      %s157 = sphi 0, %s157
      %s159 = sphi 0, %s157
      %s160 = sphi 0, %s159
      %s174 = sphi 0, %s160
      %s178 = sphi 0, %s178
      %s180 = sphi 0, %s178
      %s181 = sphi 0, %s180
      %s195 = sphi 0, %s181
      %s201 = sphi 0, %s203
      %s204 = sphi 0, %s201
      %s205 = sphi 0, %s204
      %s221 = sphi 0, %s205
      %s227 = sphi 0, %s229
      %s230 = sphi 0, %s227
      %s231 = sphi 0, %s230
      %s247 = sphi 0, %s231
      %s255 = sphi 0, %s257
      %s258 = sphi 0, %s255
      %s259 = sphi 0, %s258
      %s275 = sphi 0, %s259
      %s283 = sphi 0, %s285
      %s286 = sphi 0, %s283
      %s287 = sphi 0, %s286
      %s303 = sphi 0, %s287
      %s311 = sphi 0, %s313
      %s314 = sphi 0, %s311
      %s315 = sphi 0, %s314
      %s331 = sphi 0, %s315
    $region4: #{tpu_custom_call.1} parent=1 // loop_header_branch
      %35 = sbr.rel (%p33) target = $region8
    $region5: #{tpu_custom_call.1} parent=1 // loop_body
      %s37 = ssub.s32 %s32, 1
      %s38 = ssub.s32 %s32, 2
      %s48 = sadd.s32 1, %s41
      %p49 = scmp.ge.s32.totalorder %s48, 2
      %s50 = scalar_select %p49, 0, %s48
      %s51 = sadd.s32 1, %s40
      %s52 = scalar_select %p49, %s51, %s40
      %p53 = scmp.ge.s32.totalorder %s52, 2
      %s54 = scalar_select %p53, 0, %s52
      %s55 = sadd.s32 1, %s39
      %s56 = scalar_select %p53, %s55, %s39
      %p57 = scmp.ge.s32.totalorder %s56, 2
      %s58 = scalar_select %p57, 0, %s56
      %s59 = ssub.s32 %s39, %s58
      %s60 = ssub.s32 %s40, %s54
      %s61 = sor.u32 %s59, %s60
      %s62 = ssub.s32 %s41, %s50
      %s63 = sor.u32 %s61, %s62
      %p64 = scmp.eq.s32.totalorder %s63, 0
      %s66 = sadd.s32 %s65, 1
      %s67 = scalar_select %p64, %s65, %s66
      %p70 = pneg %p64
      %p71 = scmp.eq.s32.totalorder %s32, 7
      %p72 = por %p70, %p71
      %p73 = scmp.ne.s32.totalorder %s65, %s68
      %p74 = scmp.eq.s32.totalorder %s32, 0
      %p75 = por %p73, %p74
      %p76 = scmp.ne.s32.totalorder %s65, %s68
      %p77 = scmp.eq.s32.totalorder %s37, 7
      %p78 = por %p76, %p77
      %p79 = scmp.ne.s32.totalorder %s68, %s69
      %p80 = scmp.eq.s32.totalorder %s37, 0
      %p81 = por %p79, %p80
      %p82 = scmp.ne.s32.totalorder %s68, %s69
      %p83 = scmp.eq.s32.totalorder %s38, 7
      %p84 = por %p82, %p83
      %p86 = scmp.ne.s32.totalorder %s69, %s85
      %p87 = scmp.eq.s32.totalorder %s38, 0
      %p88 = por %p86, %p87
      %s89 = ssub.s32 %s41, %s50
      %p90 = scmp.eq.s32.totalorder %s89, 0
      %s92 = sadd.s32 %s91, 1
      %s93 = scalar_select %p90, %s91, %s92
      %p96 = pneg %p90
      %p97 = scmp.eq.s32.totalorder %s32, 7
      %p98 = por %p96, %p97
      %p99 = scmp.ne.s32.totalorder %s91, %s94
      %p100 = scmp.eq.s32.totalorder %s32, 0
      %p101 = por %p99, %p100
      %p102 = scmp.ne.s32.totalorder %s91, %s94
      %p103 = scmp.eq.s32.totalorder %s37, 7
      %p104 = por %p102, %p103
      %p105 = scmp.ne.s32.totalorder %s94, %s95
      %p106 = scmp.eq.s32.totalorder %s37, 0
      %p107 = por %p105, %p106
      %p108 = scmp.ne.s32.totalorder %s94, %s95
      %p109 = scmp.eq.s32.totalorder %s38, 7
      %p110 = por %p108, %p109
      %p112 = scmp.ne.s32.totalorder %s95, %s111
      %p113 = scmp.eq.s32.totalorder %s38, 0
      %p114 = por %p112, %p113
      %s116 = sadd.s32 %s115, 1
      %p119 = scmp.eq.s32.totalorder %s32, 7
      %p120 = scmp.ne.s32.totalorder %s115, %s117
      %p121 = scmp.eq.s32.totalorder %s32, 0
      %p122 = por %p120, %p121
      %p123 = scmp.ne.s32.totalorder %s115, %s117
      %p124 = scmp.eq.s32.totalorder %s37, 7
      %p125 = por %p123, %p124
      %p126 = scmp.ne.s32.totalorder %s117, %s118
      %p127 = scmp.eq.s32.totalorder %s37, 0
      %p128 = por %p126, %p127
      %p129 = scmp.ne.s32.totalorder %s117, %s118
      %p130 = scmp.eq.s32.totalorder %s38, 7
      %p131 = por %p129, %p130
      %p133 = scmp.ne.s32.totalorder %s118, %s132
      %p134 = scmp.eq.s32.totalorder %s38, 0
      %p135 = por %p133, %p134
      %s137 = sadd.s32 %s136, 1
      %p140 = scmp.eq.s32.totalorder %s32, 7
      %p141 = scmp.ne.s32.totalorder %s136, %s138
      %p142 = scmp.eq.s32.totalorder %s32, 0
      %p143 = por %p141, %p142
      %p144 = scmp.ne.s32.totalorder %s136, %s138
      %p145 = scmp.eq.s32.totalorder %s37, 7
      %p146 = por %p144, %p145
      %p147 = scmp.ne.s32.totalorder %s138, %s139
      %p148 = scmp.eq.s32.totalorder %s37, 0
      %p149 = por %p147, %p148
      %p150 = scmp.ne.s32.totalorder %s138, %s139
      %p151 = scmp.eq.s32.totalorder %s38, 7
      %p152 = por %p150, %p151
      %p154 = scmp.ne.s32.totalorder %s139, %s153
      %p155 = scmp.eq.s32.totalorder %s38, 0
      %p156 = por %p154, %p155
      %s158 = sadd.s32 %s157, 1
      %p161 = scmp.eq.s32.totalorder %s32, 7
      %p162 = scmp.ne.s32.totalorder %s157, %s159
      %p163 = scmp.eq.s32.totalorder %s32, 0
      %p164 = por %p162, %p163
      %p165 = scmp.ne.s32.totalorder %s157, %s159
      %p166 = scmp.eq.s32.totalorder %s37, 7
      %p167 = por %p165, %p166
      %p168 = scmp.ne.s32.totalorder %s159, %s160
      %p169 = scmp.eq.s32.totalorder %s37, 0
      %p170 = por %p168, %p169
      %p171 = scmp.ne.s32.totalorder %s159, %s160
      %p172 = scmp.eq.s32.totalorder %s38, 7
      %p173 = por %p171, %p172
      %p175 = scmp.ne.s32.totalorder %s160, %s174
      %p176 = scmp.eq.s32.totalorder %s38, 0
      %p177 = por %p175, %p176
      %s179 = sadd.s32 %s178, 1
      %p182 = scmp.eq.s32.totalorder %s32, 7
      %p183 = scmp.ne.s32.totalorder %s178, %s180
      %p184 = scmp.eq.s32.totalorder %s32, 0
      %p185 = por %p183, %p184
      %p186 = scmp.ne.s32.totalorder %s178, %s180
      %p187 = scmp.eq.s32.totalorder %s37, 7
      %p188 = por %p186, %p187
      %p189 = scmp.ne.s32.totalorder %s180, %s181
      %p190 = scmp.eq.s32.totalorder %s37, 0
      %p191 = por %p189, %p190
      %p192 = scmp.ne.s32.totalorder %s180, %s181
      %p193 = scmp.eq.s32.totalorder %s38, 7
      %p194 = por %p192, %p193
      %p196 = scmp.ne.s32.totalorder %s181, %s195
      %p197 = scmp.eq.s32.totalorder %s38, 0
      %p198 = por %p196, %p197
      %s199 = ssub.s32 %s40, %s54
      %p200 = scmp.eq.s32.totalorder %s199, 0
      %s202 = sadd.s32 %s201, 1
      %s203 = scalar_select %p200, %s201, %s202
      %p206 = pneg %p200
      %p207 = scmp.eq.s32.totalorder %s32, 7
      %p208 = por %p206, %p207
      %p209 = scmp.ne.s32.totalorder %s201, %s204
      %p210 = scmp.eq.s32.totalorder %s32, 0
      %p211 = por %p209, %p210
      %p212 = scmp.ne.s32.totalorder %s201, %s204
      %p213 = scmp.eq.s32.totalorder %s37, 7
      %p214 = por %p212, %p213
      %p215 = scmp.ne.s32.totalorder %s204, %s205
      %p216 = scmp.eq.s32.totalorder %s37, 0
      %p217 = por %p215, %p216
      %p218 = scmp.ne.s32.totalorder %s204, %s205
      %p219 = scmp.eq.s32.totalorder %s38, 7
      %p220 = por %p218, %p219
      %p222 = scmp.ne.s32.totalorder %s205, %s221
      %p223 = scmp.eq.s32.totalorder %s38, 0
      %p224 = por %p222, %p223
      %s225 = ssub.s32 %s40, %s54
      %p226 = scmp.eq.s32.totalorder %s225, 0
      %s228 = sadd.s32 %s227, 1
      %s229 = scalar_select %p226, %s227, %s228
      %p232 = pneg %p226
      %p233 = scmp.eq.s32.totalorder %s32, 7
      %p234 = por %p232, %p233
      %p235 = scmp.ne.s32.totalorder %s227, %s230
      %p236 = scmp.eq.s32.totalorder %s32, 0
      %p237 = por %p235, %p236
      %p238 = scmp.ne.s32.totalorder %s227, %s230
      %p239 = scmp.eq.s32.totalorder %s37, 7
      %p240 = por %p238, %p239
      %p241 = scmp.ne.s32.totalorder %s230, %s231
      %p242 = scmp.eq.s32.totalorder %s37, 0
      %p243 = por %p241, %p242
      %p244 = scmp.ne.s32.totalorder %s230, %s231
      %p245 = scmp.eq.s32.totalorder %s38, 7
      %p246 = por %p244, %p245
      %p248 = scmp.ne.s32.totalorder %s231, %s247
      %p249 = scmp.eq.s32.totalorder %s38, 0
      %p250 = por %p248, %p249
      %s251 = ssub.s32 %s39, %s58
      %s252 = ssub.s32 %s40, %s54
      %s253 = sor.u32 %s251, %s252
      %p254 = scmp.eq.s32.totalorder %s253, 0
      %s256 = sadd.s32 %s255, 1
      %s257 = scalar_select %p254, %s255, %s256
      %p260 = pneg %p254
      %p261 = scmp.eq.s32.totalorder %s32, 7
      %p262 = por %p260, %p261
      %p263 = scmp.ne.s32.totalorder %s255, %s258
      %p264 = scmp.eq.s32.totalorder %s32, 0
      %p265 = por %p263, %p264
      %p266 = scmp.ne.s32.totalorder %s255, %s258
      %p267 = scmp.eq.s32.totalorder %s37, 7
      %p268 = por %p266, %p267
      %p269 = scmp.ne.s32.totalorder %s258, %s259
      %p270 = scmp.eq.s32.totalorder %s37, 0
      %p271 = por %p269, %p270
      %p272 = scmp.ne.s32.totalorder %s258, %s259
      %p273 = scmp.eq.s32.totalorder %s38, 7
      %p274 = por %p272, %p273
      %p276 = scmp.ne.s32.totalorder %s259, %s275
      %p277 = scmp.eq.s32.totalorder %s38, 0
      %p278 = por %p276, %p277
      %s279 = ssub.s32 %s39, %s58
      %s280 = ssub.s32 %s40, %s54
      %s281 = sor.u32 %s279, %s280
      %p282 = scmp.eq.s32.totalorder %s281, 0
      %s284 = sadd.s32 %s283, 1
      %s285 = scalar_select %p282, %s283, %s284
      %p288 = pneg %p282
      %p289 = scmp.eq.s32.totalorder %s32, 7
      %p290 = por %p288, %p289
      %p291 = scmp.ne.s32.totalorder %s283, %s286
      %p292 = scmp.eq.s32.totalorder %s32, 0
      %p293 = por %p291, %p292
      %p294 = scmp.ne.s32.totalorder %s283, %s286
      %p295 = scmp.eq.s32.totalorder %s37, 7
      %p296 = por %p294, %p295
      %p297 = scmp.ne.s32.totalorder %s286, %s287
      %p298 = scmp.eq.s32.totalorder %s37, 0
      %p299 = por %p297, %p298
      %p300 = scmp.ne.s32.totalorder %s286, %s287
      %p301 = scmp.eq.s32.totalorder %s38, 7
      %p302 = por %p300, %p301
      %p304 = scmp.ne.s32.totalorder %s287, %s303
      %p305 = scmp.eq.s32.totalorder %s38, 0
      %p306 = por %p304, %p305
      %s307 = ssub.s32 %s39, %s58
      %s308 = ssub.s32 %s40, %s54
      %s309 = sor.u32 %s307, %s308
      %p310 = scmp.eq.s32.totalorder %s309, 0
      %s312 = sadd.s32 %s311, 1
      %s313 = scalar_select %p310, %s311, %s312
      %p316 = pneg %p310
      %p317 = scmp.eq.s32.totalorder %s32, 7
      %p318 = por %p316, %p317
      %p319 = scmp.ne.s32.totalorder %s311, %s314
      %p320 = scmp.eq.s32.totalorder %s32, 0
      %p321 = por %p319, %p320
      %p322 = scmp.ne.s32.totalorder %s311, %s314
      %p323 = scmp.eq.s32.totalorder %s37, 7
      %p324 = por %p322, %p323
      %p325 = scmp.ne.s32.totalorder %s314, %s315
      %p326 = scmp.eq.s32.totalorder %s37, 0
      %p327 = por %p325, %p326
      %p328 = scmp.ne.s32.totalorder %s314, %s315
      %p329 = scmp.eq.s32.totalorder %s38, 7
      %p330 = por %p328, %p329
      %p332 = scmp.ne.s32.totalorder %s315, %s331
      %p333 = scmp.eq.s32.totalorder %s38, 0
      %p334 = por %p332, %p333
      %p335 = scmp.le.s32.totalorder 1, %s32
      %p336 = scmp.lt.s32.totalorder %s32, 9
      %p337 = pnand %p335, %p336
      %p338 = pneg %p337
      // Predicated region
      $region9: #{tpu_custom_call.1} parent=5 // pred_check
        _
      $region10: #{tpu_custom_call.1} parent=5 // pred_check_branch
        %340 = sbr.rel (%p337) target = $region12
      $region11: #{tpu_custom_call.1} parent=5 // pred_region
        %s341 = ssub.s32 %s32, 1
        // Predicated region
        $region13: #{tpu_custom_call.1} parent=11 // pred_check
          %p342 = pneg %p128
        $region14: #{tpu_custom_call.1} parent=11 // pred_check_branch
          %344 = sbr.rel (%p342) target = $region16
        $region15: #{tpu_custom_call.1} parent=11 // pred_region
          _
        $region16: #{tpu_custom_call.1} parent=11 // pred_fallthru
          _
        // Predicated region
        $region17: #{tpu_custom_call.1} parent=11 // pred_check
          %p345 = pneg %p149
        $region18: #{tpu_custom_call.1} parent=11 // pred_check_branch
          %347 = sbr.rel (%p345) target = $region20
        $region19: #{tpu_custom_call.1} parent=11 // pred_region
          _
        $region20: #{tpu_custom_call.1} parent=11 // pred_fallthru
          _
        // Predicated region
        $region21: #{tpu_custom_call.1} parent=11 // pred_check
          %p348 = pneg %p170
        $region22: #{tpu_custom_call.1} parent=11 // pred_check_branch
          %350 = sbr.rel (%p348) target = $region24
        $region23: #{tpu_custom_call.1} parent=11 // pred_region
          _
        $region24: #{tpu_custom_call.1} parent=11 // pred_fallthru
          _
        // Predicated region
        $region25: #{tpu_custom_call.1} parent=11 // pred_check
          %p351 = pneg %p191
        $region26: #{tpu_custom_call.1} parent=11 // pred_check_branch
          %353 = sbr.rel (%p351) target = $region28
        $region27: #{tpu_custom_call.1} parent=11 // pred_region
          _
        $region28: #{tpu_custom_call.1} parent=11 // pred_fallthru
          _
      $region12: #{tpu_custom_call.1} parent=5 // pred_fallthru
        _
      %p354 = scmp.lt.s32.totalorder %s32, 8
      // Predicated region
      $region29: #{tpu_custom_call.1} parent=5 // pred_check
        %p355 = pneg %p354
      $region30: #{tpu_custom_call.1} parent=5 // pred_check_branch
        %357 = sbr.rel (%p355) target = $region32
      $region31: #{tpu_custom_call.1} parent=5 // pred_region
        // Predicated region
        $region33: #{tpu_custom_call.1} parent=31 // pred_check
          %p358 = pneg %p75
        $region34: #{tpu_custom_call.1} parent=31 // pred_check_branch
          %360 = sbr.rel (%p358) target = $region36
        $region35: #{tpu_custom_call.1} parent=31 // pred_region
          %s361 = sand.u32 %s65, 1
          %s362 = scalar_lea.sflag [#allocation4], %s361
          %s363 = sand.u32 %s65, 1
          %s364 = smul.addr %s363, 8
          %s365 = scalar_lea.vmem [#allocation3], %s364
          %s367 = ssub.s32 128, 128
          %368 = vsyncadd %s362, %s367
          %s369 = smul.addr %s40, 2
          %s370 = sadd.s32 %s41, %s369
          %s371 = smul.addr %s39, 4
          %s372 = sadd.s32 %s370, %s371
          %s373 = smul.addr %s372, 128
          %s374 = scalar_lea.hbm %s0, %s373
          %s376 = sshll.u32 %s365, 4
          %s377 = int_to_ptr.vmem [resolvable:$true] %s376
          %379 = dma.hbm_to_vmem [thread:$0]  %s374, 128, %s377, %s362
        $region36: #{tpu_custom_call.1} parent=31 // pred_fallthru
          _
        // Predicated region
        $region37: #{tpu_custom_call.1} parent=31 // pred_check
          %p380 = pneg %p101
        $region38: #{tpu_custom_call.1} parent=31 // pred_check_branch
          %382 = sbr.rel (%p380) target = $region40
        $region39: #{tpu_custom_call.1} parent=31 // pred_region
          %s383 = sand.u32 %s32, 1
          %s384 = scalar_lea.sflag [#allocation7], %s383
          %s385 = sand.u32 %s91, 1
          %s386 = smul.addr %s385, 768
          %s387 = scalar_lea.vmem [#allocation6], %s386
          %s388 = smul.u32 16, %s41
          %s390 = ssub.s32 12288, 12288
          %391 = vsyncadd %s384, %s390
          %s392 = smul.addr %s388, 6
          %s393 = smul.addr %s392, 128
          %s394 = scalar_lea.hbm %s1, %s393
          %s395 = sshll.u32 %s387, 4
          %s396 = int_to_ptr.vmem [resolvable:$true] %s395
          %401 = dma.hbm_to_vmem [thread:$0]  %s394, 12288, %s396, %s384, 768, 768, 48
        $region40: #{tpu_custom_call.1} parent=31 // pred_fallthru
          _
        // Predicated region
        $region41: #{tpu_custom_call.1} parent=31 // pred_check
          %p402 = pneg %p211
        $region42: #{tpu_custom_call.1} parent=31 // pred_check_branch
          %404 = sbr.rel (%p402) target = $region44
        $region43: #{tpu_custom_call.1} parent=31 // pred_region
          %s405 = sand.u32 %s32, 1
          %s406 = scalar_lea.sflag [#allocation7], %s405
          %s407 = sand.u32 %s201, 1
          %s408 = smul.addr %s407, 8
          %s409 = scalar_lea.vmem [#allocation8], %s408
          %s411 = ssub.s32 128, 128
          %412 = vsyncadd %s406, %s411
          %s413 = smul.addr %s40, 128
          %s414 = scalar_lea.hbm %s6, %s413
          %s416 = sshll.u32 %s409, 4
          %s417 = int_to_ptr.vmem [resolvable:$true] %s416
          %419 = dma.hbm_to_vmem [thread:$0]  %s414, 128, %s417, %s406
        $region44: #{tpu_custom_call.1} parent=31 // pred_fallthru
          _
        // Predicated region
        $region45: #{tpu_custom_call.1} parent=31 // pred_check
          %p420 = pneg %p237
        $region46: #{tpu_custom_call.1} parent=31 // pred_check_branch
          %422 = sbr.rel (%p420) target = $region48
        $region47: #{tpu_custom_call.1} parent=31 // pred_region
          %s423 = sand.u32 %s227, 1
          %s424 = scalar_lea.sflag [#allocation10], %s423
          %s425 = sand.u32 %s227, 1
          %s426 = smul.addr %s425, 8
          %s427 = scalar_lea.vmem [#allocation9], %s426
          %s429 = ssub.s32 128, 128
          %430 = vsyncadd %s424, %s429
          %s431 = smul.addr %s40, 128
          %s432 = scalar_lea.hbm %s7, %s431
          %s434 = sshll.u32 %s427, 4
          %s435 = int_to_ptr.vmem [resolvable:$true] %s434
          %437 = dma.hbm_to_vmem [thread:$0]  %s432, 128, %s435, %s424
        $region48: #{tpu_custom_call.1} parent=31 // pred_fallthru
          _
      $region32: #{tpu_custom_call.1} parent=5 // pred_fallthru
        _
      %p438 = scmp.le.s32.totalorder 1, %s32
      %p439 = scmp.lt.s32.totalorder %s32, 9
      %p440 = pnand %p438, %p439
      %p441 = pneg %p440
      // Predicated region
      $region49: #{tpu_custom_call.1} parent=5 // pred_check
        _
      $region50: #{tpu_custom_call.1} parent=5 // pred_check_branch
        %443 = sbr.rel (%p440) target = $region52
      $region51: #{tpu_custom_call.1} parent=5 // pred_region
        %s444 = ssub.s32 %s32, 1
        %s445 = sand.u32 %s68, 1
        %s446 = scalar_lea.sflag [#allocation4], %s445
        %s447 = sand.u32 %s68, 1
        %s448 = smul.addr %s447, 8
        %s449 = scalar_lea.vmem [#allocation3], %s448
        // Predicated region
        $region53: #{tpu_custom_call.1} parent=51 // pred_check
          %p450 = pneg %p81
        $region54: #{tpu_custom_call.1} parent=51 // pred_check_branch
          %452 = sbr.rel (%p450) target = $region56
        $region55: #{tpu_custom_call.1} parent=51 // pred_region
          %453 = dma.done %s446, 128
        $region56: #{tpu_custom_call.1} parent=51 // pred_fallthru
          _
        %s454 = sand.u32 %s37, 1
        %s455 = scalar_lea.sflag [#allocation7], %s454
        %s456 = sand.u32 %s94, 1
        %s457 = smul.addr %s456, 768
        %s458 = scalar_lea.vmem [#allocation6], %s457
        // Predicated region
        $region57: #{tpu_custom_call.1} parent=51 // pred_check
          %p459 = pneg %p107
        $region58: #{tpu_custom_call.1} parent=51 // pred_check_branch
          %461 = sbr.rel (%p459) target = $region60
        $region59: #{tpu_custom_call.1} parent=51 // pred_region
          %462 = dma.done %s455, 12288
        $region60: #{tpu_custom_call.1} parent=51 // pred_fallthru
          _
        %s463 = sand.u32 %s37, 1
        %s464 = scalar_lea.sflag [#allocation7], %s463
        %s465 = sand.u32 %s204, 1
        %s466 = smul.addr %s465, 8
        %s467 = scalar_lea.vmem [#allocation8], %s466
        // Predicated region
        $region61: #{tpu_custom_call.1} parent=51 // pred_check
          %p468 = pneg %p217
        $region62: #{tpu_custom_call.1} parent=51 // pred_check_branch
          %470 = sbr.rel (%p468) target = $region64
        $region63: #{tpu_custom_call.1} parent=51 // pred_region
          %471 = dma.done %s464, 128
        $region64: #{tpu_custom_call.1} parent=51 // pred_fallthru
          _
        %s472 = sand.u32 %s230, 1
        %s473 = scalar_lea.sflag [#allocation10], %s472
        %s474 = sand.u32 %s230, 1
        %s475 = smul.addr %s474, 8
        %s476 = scalar_lea.vmem [#allocation9], %s475
        // Predicated region
        $region65: #{tpu_custom_call.1} parent=51 // pred_check
          %p477 = pneg %p243
        $region66: #{tpu_custom_call.1} parent=51 // pred_check_branch
          %479 = sbr.rel (%p477) target = $region68
        $region67: #{tpu_custom_call.1} parent=51 // pred_region
          %480 = dma.done %s473, 128
        $region68: #{tpu_custom_call.1} parent=51 // pred_fallthru
          _
        %s481 = sand.u32 %s68, 1
        %s482 = scalar_lea.sflag [#allocation4], %s481
        %s483 = sand.u32 %s68, 1
        %s484 = smul.addr %s483, 8
        %s485 = scalar_lea.vmem [#allocation3], %s484
        %p486 = pneg %p81
        %p487 = pneg %p78
        %s488 = sand.u32 %s37, 1
        %s489 = scalar_lea.sflag [#allocation7], %s488
        %s490 = sand.u32 %s94, 1
        %s491 = smul.addr %s490, 768
        %s492 = scalar_lea.vmem [#allocation6], %s491
        %p493 = pneg %p107
        %p494 = pneg %p104
        %p495 = pneg %p128
        %p496 = pneg %p125
        %p497 = pneg %p149
        %p498 = pneg %p146
        %p499 = pneg %p170
        %p500 = pneg %p167
        %p501 = pneg %p191
        %p502 = pneg %p188
        %s503 = sand.u32 %s37, 1
        %s504 = scalar_lea.sflag [#allocation7], %s503
        %s505 = sand.u32 %s204, 1
        %s506 = smul.addr %s505, 8
        %s507 = scalar_lea.vmem [#allocation8], %s506
        %p508 = pneg %p217
        %p509 = pneg %p214
        %s510 = sand.u32 %s230, 1
        %s511 = scalar_lea.sflag [#allocation10], %s510
        %s512 = sand.u32 %s230, 1
        %s513 = smul.addr %s512, 8
        %s514 = scalar_lea.vmem [#allocation9], %s513
        %p515 = pneg %p243
        %p516 = pneg %p240
        %p517 = pneg %p271
        %p518 = pneg %p268
        %s519 = sand.u32 %s258, 1
        %s520 = scalar_lea.sflag [#allocation5], %s519
        %s521 = sand.u32 %s258, 1
        %s522 = smul.addr %s521, 32
        %s523 = scalar_lea.vmem [#allocation11], %s522
        %p524 = pneg %p299
        %p525 = pneg %p296
        %s526 = sand.u32 %s37, 1
        %s527 = scalar_lea.sflag [#allocation13], %s526
        %s528 = sand.u32 %s286, 1
        %s529 = smul.addr %s528, 32
        %s530 = scalar_lea.vmem [#allocation12], %s529
        %p531 = pneg %p327
        %p532 = pneg %p324
        %s533 = sand.u32 %s37, 1
        %s534 = scalar_lea.sflag [#allocation13], %s533
        %s535 = sand.u32 %s314, 1
        %s536 = smul.addr %s535, 32
        %s537 = scalar_lea.vmem [#allocation14], %s536
        %s538 = smul.u32 16, %s44
        %p539 = scmp.eq.s32.totalorder %s44, 0
        // Predicated region
        $region69: #{tpu_custom_call.1} parent=51 // pred_check
          %p540 = pneg %p539
        $region70: #{tpu_custom_call.1} parent=51 // pred_check_branch
          %542 = sbr.rel (%p540) target = $region72
        $region71: #{tpu_custom_call.1} parent=51 // pred_region
          %543 = vst [vmem:[#allocation2] sm:$0xff] 0.0
          %544 = vst [vmem:[#allocation2 + $0x8] sm:$0xff] 0.0
          %545 = vst [vmem:[#allocation2 + $0x10] sm:$0xff] 0.0
          %546 = vst [vmem:[#allocation2 + $0x18] sm:$0xff] 0.0
          %547 = vst [vmem:[#allocation2 + $0x20] sm:$0xff] 0.0
          %548 = vst [vmem:[#allocation2 + $0x28] sm:$0xff] 0.0
        $region72: #{tpu_custom_call.1} parent=51 // pred_fallthru
          _
        %v549 = vld [vmem:[#allocation2] sm:$0xff]
        %v550 = vld [vmem:[#allocation2 + $0x8] sm:$0xff]
        %v551 = vld [vmem:[#allocation2 + $0x10] sm:$0xff]
        %v552 = vld [vmem:[#allocation2 + $0x18] sm:$0xff]
        %v553 = vld [vmem:[#allocation2 + $0x20] sm:$0xff]
        %v554 = vld [vmem:[#allocation2 + $0x28] sm:$0xff]
        %v555 = vld [vmem:[%s449] sm:$0xff]
        %v556 = vld [vmem:[%s458] sm:$0xff]
        %v557 = vld [vmem:[%s458 + $0x8] sm:$0xff]
        %v558 = vld [vmem:[%s458 + $0x10] sm:$0xff]
        %v559 = vld [vmem:[%s458 + $0x18] sm:$0xff]
        %v560 = vld [vmem:[%s458 + $0x20] sm:$0xff]
        %v561 = vld [vmem:[%s458 + $0x28] sm:$0xff]
        %v562 = vld [vmem:[%s458 + $0x30] sm:$0xff]
        %v563 = vld [vmem:[%s458 + $0x38] sm:$0xff]
        %v564 = vld [vmem:[%s458 + $0x40] sm:$0xff]
        %v565 = vld [vmem:[%s458 + $0x48] sm:$0xff]
        %v566 = vld [vmem:[%s458 + $0x50] sm:$0xff]
        %v567 = vld [vmem:[%s458 + $0x58] sm:$0xff]
        %v568 = vld [vmem:[%s458 + $0x60] sm:$0xff]
        %v569 = vld [vmem:[%s458 + $0x68] sm:$0xff]
        %v570 = vld [vmem:[%s458 + $0x70] sm:$0xff]
        %v571 = vld [vmem:[%s458 + $0x78] sm:$0xff]
        %v572 = vld [vmem:[%s458 + $0x80] sm:$0xff]
        %v573 = vld [vmem:[%s458 + $0x88] sm:$0xff]
        %v574 = vld [vmem:[%s458 + $0x90] sm:$0xff]
        %v575 = vld [vmem:[%s458 + $0x98] sm:$0xff]
        %v576 = vld [vmem:[%s458 + $0xa0] sm:$0xff]
        %v577 = vld [vmem:[%s458 + $0xa8] sm:$0xff]
        %v578 = vld [vmem:[%s458 + $0xb0] sm:$0xff]
        %v579 = vld [vmem:[%s458 + $0xb8] sm:$0xff]
        %v580 = vld [vmem:[%s458 + $0xc0] sm:$0xff]
        %v581 = vld [vmem:[%s458 + $0xc8] sm:$0xff]
        %v582 = vld [vmem:[%s458 + $0xd0] sm:$0xff]
        %v583 = vld [vmem:[%s458 + $0xd8] sm:$0xff]
        %v584 = vld [vmem:[%s458 + $0xe0] sm:$0xff]
        %v585 = vld [vmem:[%s458 + $0xe8] sm:$0xff]
        %v586 = vld [vmem:[%s458 + $0xf0] sm:$0xff]
        %v587 = vld [vmem:[%s458 + $0xf8] sm:$0xff]
        %v588 = vld [vmem:[%s458 + $0x100] sm:$0xff]
        %v589 = vld [vmem:[%s458 + $0x108] sm:$0xff]
        %v590 = vld [vmem:[%s458 + $0x110] sm:$0xff]
        %v591 = vld [vmem:[%s458 + $0x118] sm:$0xff]
        %v592 = vld [vmem:[%s458 + $0x120] sm:$0xff]
        %v593 = vld [vmem:[%s458 + $0x128] sm:$0xff]
        %v594 = vld [vmem:[%s458 + $0x130] sm:$0xff]
        %v595 = vld [vmem:[%s458 + $0x138] sm:$0xff]
        %v596 = vld [vmem:[%s458 + $0x140] sm:$0xff]
        %v597 = vld [vmem:[%s458 + $0x148] sm:$0xff]
        %v598 = vld [vmem:[%s458 + $0x150] sm:$0xff]
        %v599 = vld [vmem:[%s458 + $0x158] sm:$0xff]
        %v600 = vld [vmem:[%s458 + $0x160] sm:$0xff]
        %v601 = vld [vmem:[%s458 + $0x168] sm:$0xff]
        %v602 = vld [vmem:[%s458 + $0x170] sm:$0xff]
        %v603 = vld [vmem:[%s458 + $0x178] sm:$0xff]
        %v604 = vld [vmem:[%s458 + $0x180] sm:$0xff]
        %v605 = vld [vmem:[%s458 + $0x188] sm:$0xff]
        %v606 = vld [vmem:[%s458 + $0x190] sm:$0xff]
        %v607 = vld [vmem:[%s458 + $0x198] sm:$0xff]
        %v608 = vld [vmem:[%s458 + $0x1a0] sm:$0xff]
        %v609 = vld [vmem:[%s458 + $0x1a8] sm:$0xff]
        %v610 = vld [vmem:[%s458 + $0x1b0] sm:$0xff]
        %v611 = vld [vmem:[%s458 + $0x1b8] sm:$0xff]
        %v612 = vld [vmem:[%s458 + $0x1c0] sm:$0xff]
        %v613 = vld [vmem:[%s458 + $0x1c8] sm:$0xff]
        %v614 = vld [vmem:[%s458 + $0x1d0] sm:$0xff]
        %v615 = vld [vmem:[%s458 + $0x1d8] sm:$0xff]
        %v616 = vld [vmem:[%s458 + $0x1e0] sm:$0xff]
        %v617 = vld [vmem:[%s458 + $0x1e8] sm:$0xff]
        %v618 = vld [vmem:[%s458 + $0x1f0] sm:$0xff]
        %v619 = vld [vmem:[%s458 + $0x1f8] sm:$0xff]
        %v620 = vld [vmem:[%s458 + $0x200] sm:$0xff]
        %v621 = vld [vmem:[%s458 + $0x208] sm:$0xff]
        %v622 = vld [vmem:[%s458 + $0x210] sm:$0xff]
        %v623 = vld [vmem:[%s458 + $0x218] sm:$0xff]
        %v624 = vld [vmem:[%s458 + $0x220] sm:$0xff]
        %v625 = vld [vmem:[%s458 + $0x228] sm:$0xff]
        %v626 = vld [vmem:[%s458 + $0x230] sm:$0xff]
        %v627 = vld [vmem:[%s458 + $0x238] sm:$0xff]
        %v628 = vld [vmem:[%s458 + $0x240] sm:$0xff]
        %v629 = vld [vmem:[%s458 + $0x248] sm:$0xff]
        %v630 = vld [vmem:[%s458 + $0x250] sm:$0xff]
        %v631 = vld [vmem:[%s458 + $0x258] sm:$0xff]
        %v632 = vld [vmem:[%s458 + $0x260] sm:$0xff]
        %v633 = vld [vmem:[%s458 + $0x268] sm:$0xff]
        %v634 = vld [vmem:[%s458 + $0x270] sm:$0xff]
        %v635 = vld [vmem:[%s458 + $0x278] sm:$0xff]
        %v636 = vld [vmem:[%s458 + $0x280] sm:$0xff]
        %v637 = vld [vmem:[%s458 + $0x288] sm:$0xff]
        %v638 = vld [vmem:[%s458 + $0x290] sm:$0xff]
        %v639 = vld [vmem:[%s458 + $0x298] sm:$0xff]
        %v640 = vld [vmem:[%s458 + $0x2a0] sm:$0xff]
        %v641 = vld [vmem:[%s458 + $0x2a8] sm:$0xff]
        %v642 = vld [vmem:[%s458 + $0x2b0] sm:$0xff]
        %v643 = vld [vmem:[%s458 + $0x2b8] sm:$0xff]
        %v644 = vld [vmem:[%s458 + $0x2c0] sm:$0xff]
        %v645 = vld [vmem:[%s458 + $0x2c8] sm:$0xff]
        %v646 = vld [vmem:[%s458 + $0x2d0] sm:$0xff]
        %v647 = vld [vmem:[%s458 + $0x2d8] sm:$0xff]
        %v648 = vld [vmem:[%s458 + $0x2e0] sm:$0xff]
        %v649 = vld [vmem:[%s458 + $0x2e8] sm:$0xff]
        %v650 = vld [vmem:[%s458 + $0x2f0] sm:$0xff]
        %v651 = vld [vmem:[%s458 + $0x2f8] sm:$0xff]
        %v652 = vand.u32 %v647, 4294901760
        %653 = vmatprep.subr.mxu0 %v652
        %v654 = vand.u32 %v646, 4294901760
        %655 = vmatpush1.msra.mxu0 %v654
        %v656 = vand.u32 %v641, 4294901760
        %657 = vmatprep.subr.mxu0 %v656
        %v658 = vand.u32 %v640, 4294901760
        %659 = vmatpush1.msra.mxu0 %v658
        %v660 = vand.u32 %v635, 4294901760
        %661 = vmatprep.subr.mxu0 %v660
        %v662 = vand.u32 %v634, 4294901760
        %663 = vmatpush1.msra.mxu0 %v662
        %v664 = vand.u32 %v629, 4294901760
        %665 = vmatprep.subr.mxu0 %v664
        %v666 = vand.u32 %v628, 4294901760
        %667 = vmatpush1.msra.mxu0 %v666
        %v668 = vand.u32 %v623, 4294901760
        %669 = vmatprep.subr.mxu0 %v668
        %v670 = vand.u32 %v622, 4294901760
        %671 = vmatpush1.msra.mxu0 %v670
        %v672 = vand.u32 %v617, 4294901760
        %673 = vmatprep.subr.mxu0 %v672
        %v674 = vand.u32 %v616, 4294901760
        %675 = vmatpush1.msra.mxu0 %v674
        %v676 = vand.u32 %v611, 4294901760
        %677 = vmatprep.subr.mxu0 %v676
        %v678 = vand.u32 %v610, 4294901760
        %679 = vmatpush1.msra.mxu0 %v678
        %v680 = vand.u32 %v605, 4294901760
        %681 = vmatprep.subr.mxu0 %v680
        %v682 = vand.u32 %v604, 4294901760
        %683 = vmatpush1.msra.mxu0 %v682
        %v684 = vand.u32 %v599, 4294901760
        %685 = vmatprep.subr.mxu0 %v684
        %v686 = vand.u32 %v598, 4294901760
        %687 = vmatpush1.msra.mxu0 %v686
        %v688 = vand.u32 %v593, 4294901760
        %689 = vmatprep.subr.mxu0 %v688
        %v690 = vand.u32 %v592, 4294901760
        %691 = vmatpush1.msra.mxu0 %v690
        %v692 = vand.u32 %v587, 4294901760
        %693 = vmatprep.subr.mxu0 %v692
        %v694 = vand.u32 %v586, 4294901760
        %695 = vmatpush1.msra.mxu0 %v694
        %v696 = vand.u32 %v581, 4294901760
        %697 = vmatprep.subr.mxu0 %v696
        %v698 = vand.u32 %v580, 4294901760
        %699 = vmatpush1.msra.mxu0 %v698
        %v700 = vand.u32 %v575, 4294901760
        %701 = vmatprep.subr.mxu0 %v700
        %v702 = vand.u32 %v574, 4294901760
        %703 = vmatpush1.msra.mxu0 %v702
        %v704 = vand.u32 %v569, 4294901760
        %705 = vmatprep.subr.mxu0 %v704
        %v706 = vand.u32 %v568, 4294901760
        %707 = vmatpush1.msra.mxu0 %v706
        %v708 = vand.u32 %v563, 4294901760
        %709 = vmatprep.subr.mxu0 %v708
        %v710 = vand.u32 %v562, 4294901760
        %711 = vmatpush1.msra.mxu0 %v710
        %v712 = vand.u32 %v557, 4294901760
        %713 = vmatprep.subr.mxu0 %v712
        %v714 = vand.u32 %v556, 4294901760
        %715 = vmatpush1.msra.mxu0 %v714
        %716 = vmatprep.subr.mxu0 0.0
        %717 = vmatpush2.msra.mxu0 0.0
        %718 = vmatprep.subr.mxu0 0.0
        %719 = vmatpush2.msra.mxu0 0.0
        %720 = vmatprep.subr.mxu0 0.0
        %721 = vmatpush2.msra.mxu0 0.0
        %722 = vmatprep.subr.mxu0 0.0
        %723 = vmatpush2.msra.mxu0 0.0
        %724 = vmatprep.subr.mxu0 0.0
        %725 = vmatpush2.msra.mxu0 0.0
        %726 = vmatprep.subr.mxu0 0.0
        %727 = vmatpush2.msra.mxu0 0.0
        %728 = vmatprep.subr.mxu0 0.0
        %729 = vmatpush2.msra.mxu0 0.0
        %730 = vmatprep.subr.mxu0 0.0
        %731 = vmatpush2.msra.mxu0 0.0
        %732 = vmatprep.subr.mxu0 0.0
        %733 = vmatpush2.msra.mxu0 0.0
        %734 = vmatprep.subr.mxu0 0.0
        %735 = vmatpush2.msra.mxu0 0.0
        %736 = vmatprep.subr.mxu0 0.0
        %737 = vmatpush2.msra.mxu0 0.0
        %738 = vmatprep.subr.mxu0 0.0
        %739 = vmatpush2.msra.mxu0 0.0
        %740 = vmatprep.subr.mxu0 0.0
        %741 = vmatpush2.msra.mxu0 0.0
        %742 = vmatprep.subr.mxu0 0.0
        %743 = vmatpush2.msra.mxu0 0.0
        %744 = vmatprep.subr.mxu0 0.0
        %745 = vmatpush2.msra.mxu0 0.0
        %746 = vmatprep.subr.mxu0 0.0
        %747 = vmatpush2.msra.mxu0 0.0
        %748 = vmatprep.mubr.f32.mxu0 0.0
        %v749 = vand.u32 %v555, 4294901760
        %v750 = vsub.f32 %v555, %v749
        %v751 = vand.u32 %v750, 4294901760
        %v752 = vsub.f32 %v750, %v751
        %v753 = vand.u32 %v752, 4294901760
        %754 = vmatmul.mubr.f32.gmra.mxu0 %v753
        %v755 = vpop.f32.mrf.mxu0
        %v756 = vadd.f32 0.0, %v755
        %v757 = vpop.f32.mrf.mxu0
        %v758 = vadd.f32 0.0, %v757
        %759 = vdwg.mxu0
        %v760 = vand.u32 %v647, 4294901760
        %v761 = vsub.f32 %v647, %v760
        %v762 = vand.u32 %v761, 4294901760
        %v763 = vsub.f32 %v761, %v762
        %v764 = vand.u32 %v763, 4294901760
        %765 = vmatprep.subr.mxu0 %v764
        %v766 = vand.u32 %v646, 4294901760
        %v767 = vsub.f32 %v646, %v766
        %v768 = vand.u32 %v767, 4294901760
        %v769 = vsub.f32 %v767, %v768
        %v770 = vand.u32 %v769, 4294901760
        %771 = vmatpush1.msra.mxu0 %v770
        %v772 = vand.u32 %v641, 4294901760
        %v773 = vsub.f32 %v641, %v772
        %v774 = vand.u32 %v773, 4294901760
        %v775 = vsub.f32 %v773, %v774
        %v776 = vand.u32 %v775, 4294901760
        %777 = vmatprep.subr.mxu0 %v776
        %v778 = vand.u32 %v640, 4294901760
        %v779 = vsub.f32 %v640, %v778
        %v780 = vand.u32 %v779, 4294901760
        %v781 = vsub.f32 %v779, %v780
        %v782 = vand.u32 %v781, 4294901760
        %783 = vmatpush1.msra.mxu0 %v782
        %v784 = vand.u32 %v635, 4294901760
        %v785 = vsub.f32 %v635, %v784
        %v786 = vand.u32 %v785, 4294901760
        %v787 = vsub.f32 %v785, %v786
        %v788 = vand.u32 %v787, 4294901760
        %789 = vmatprep.subr.mxu0 %v788
        %v790 = vand.u32 %v634, 4294901760
        %v791 = vsub.f32 %v634, %v790
        %v792 = vand.u32 %v791, 4294901760
        %v793 = vsub.f32 %v791, %v792
        %v794 = vand.u32 %v793, 4294901760
        %795 = vmatpush1.msra.mxu0 %v794
        %v796 = vand.u32 %v629, 4294901760
        %v797 = vsub.f32 %v629, %v796
        %v798 = vand.u32 %v797, 4294901760
        %v799 = vsub.f32 %v797, %v798
        %v800 = vand.u32 %v799, 4294901760
        %801 = vmatprep.subr.mxu0 %v800
        %v802 = vand.u32 %v628, 4294901760
        %v803 = vsub.f32 %v628, %v802
        %v804 = vand.u32 %v803, 4294901760
        %v805 = vsub.f32 %v803, %v804
        %v806 = vand.u32 %v805, 4294901760
        %807 = vmatpush1.msra.mxu0 %v806
        %v808 = vand.u32 %v623, 4294901760
        %v809 = vsub.f32 %v623, %v808
        %v810 = vand.u32 %v809, 4294901760
        %v811 = vsub.f32 %v809, %v810
        %v812 = vand.u32 %v811, 4294901760
        %813 = vmatprep.subr.mxu0 %v812
        %v814 = vand.u32 %v622, 4294901760
        %v815 = vsub.f32 %v622, %v814
        %v816 = vand.u32 %v815, 4294901760
        %v817 = vsub.f32 %v815, %v816
        %v818 = vand.u32 %v817, 4294901760
        %819 = vmatpush1.msra.mxu0 %v818
        %v820 = vand.u32 %v617, 4294901760
        %v821 = vsub.f32 %v617, %v820
        %v822 = vand.u32 %v821, 4294901760
        %v823 = vsub.f32 %v821, %v822
        %v824 = vand.u32 %v823, 4294901760
        %825 = vmatprep.subr.mxu0 %v824
        %v826 = vand.u32 %v616, 4294901760
        %v827 = vsub.f32 %v616, %v826
        %v828 = vand.u32 %v827, 4294901760
        %v829 = vsub.f32 %v827, %v828
        %v830 = vand.u32 %v829, 4294901760
        %831 = vmatpush1.msra.mxu0 %v830
        %v832 = vand.u32 %v611, 4294901760
        %v833 = vsub.f32 %v611, %v832
        %v834 = vand.u32 %v833, 4294901760
        %v835 = vsub.f32 %v833, %v834
        %v836 = vand.u32 %v835, 4294901760
        %837 = vmatprep.subr.mxu0 %v836
        %v838 = vand.u32 %v610, 4294901760
        %v839 = vsub.f32 %v610, %v838
        %v840 = vand.u32 %v839, 4294901760
        %v841 = vsub.f32 %v839, %v840
        %v842 = vand.u32 %v841, 4294901760
        %843 = vmatpush1.msra.mxu0 %v842
        %v844 = vand.u32 %v605, 4294901760
        %v845 = vsub.f32 %v605, %v844
        %v846 = vand.u32 %v845, 4294901760
        %v847 = vsub.f32 %v845, %v846
        %v848 = vand.u32 %v847, 4294901760
        %849 = vmatprep.subr.mxu0 %v848
        %v850 = vand.u32 %v604, 4294901760
        %v851 = vsub.f32 %v604, %v850
        %v852 = vand.u32 %v851, 4294901760
        %v853 = vsub.f32 %v851, %v852
        %v854 = vand.u32 %v853, 4294901760
        %855 = vmatpush1.msra.mxu0 %v854
        %v856 = vand.u32 %v599, 4294901760
        %v857 = vsub.f32 %v599, %v856
        %v858 = vand.u32 %v857, 4294901760
        %v859 = vsub.f32 %v857, %v858
        %v860 = vand.u32 %v859, 4294901760
        %861 = vmatprep.subr.mxu0 %v860
        %v862 = vand.u32 %v598, 4294901760
        %v863 = vsub.f32 %v598, %v862
        %v864 = vand.u32 %v863, 4294901760
        %v865 = vsub.f32 %v863, %v864
        %v866 = vand.u32 %v865, 4294901760
        %867 = vmatpush1.msra.mxu0 %v866
        %v868 = vand.u32 %v593, 4294901760
        %v869 = vsub.f32 %v593, %v868
        %v870 = vand.u32 %v869, 4294901760
        %v871 = vsub.f32 %v869, %v870
        %v872 = vand.u32 %v871, 4294901760
        %873 = vmatprep.subr.mxu0 %v872
        %v874 = vand.u32 %v592, 4294901760
        %v875 = vsub.f32 %v592, %v874
        %v876 = vand.u32 %v875, 4294901760
        %v877 = vsub.f32 %v875, %v876
        %v878 = vand.u32 %v877, 4294901760
        %879 = vmatpush1.msra.mxu0 %v878
        %v880 = vand.u32 %v587, 4294901760
        %v881 = vsub.f32 %v587, %v880
        %v882 = vand.u32 %v881, 4294901760
        %v883 = vsub.f32 %v881, %v882
        %v884 = vand.u32 %v883, 4294901760
        %885 = vmatprep.subr.mxu0 %v884
        %v886 = vand.u32 %v586, 4294901760
        %v887 = vsub.f32 %v586, %v886
        %v888 = vand.u32 %v887, 4294901760
        %v889 = vsub.f32 %v887, %v888
        %v890 = vand.u32 %v889, 4294901760
        %891 = vmatpush1.msra.mxu0 %v890
        %v892 = vand.u32 %v581, 4294901760
        %v893 = vsub.f32 %v581, %v892
        %v894 = vand.u32 %v893, 4294901760
        %v895 = vsub.f32 %v893, %v894
        %v896 = vand.u32 %v895, 4294901760
        %897 = vmatprep.subr.mxu0 %v896
        %v898 = vand.u32 %v580, 4294901760
        %v899 = vsub.f32 %v580, %v898
        %v900 = vand.u32 %v899, 4294901760
        %v901 = vsub.f32 %v899, %v900
        %v902 = vand.u32 %v901, 4294901760
        %903 = vmatpush1.msra.mxu0 %v902
        %v904 = vand.u32 %v575, 4294901760
        %v905 = vsub.f32 %v575, %v904
        %v906 = vand.u32 %v905, 4294901760
        %v907 = vsub.f32 %v905, %v906
        %v908 = vand.u32 %v907, 4294901760
        %909 = vmatprep.subr.mxu0 %v908
        %v910 = vand.u32 %v574, 4294901760
        %v911 = vsub.f32 %v574, %v910
        %v912 = vand.u32 %v911, 4294901760
        %v913 = vsub.f32 %v911, %v912
        %v914 = vand.u32 %v913, 4294901760
        %915 = vmatpush1.msra.mxu0 %v914
        %v916 = vand.u32 %v569, 4294901760
        %v917 = vsub.f32 %v569, %v916
        %v918 = vand.u32 %v917, 4294901760
        %v919 = vsub.f32 %v917, %v918
        %v920 = vand.u32 %v919, 4294901760
        %921 = vmatprep.subr.mxu0 %v920
        %v922 = vand.u32 %v568, 4294901760
        %v923 = vsub.f32 %v568, %v922
        %v924 = vand.u32 %v923, 4294901760
        %v925 = vsub.f32 %v923, %v924
        %v926 = vand.u32 %v925, 4294901760
        %927 = vmatpush1.msra.mxu0 %v926
        %v928 = vand.u32 %v563, 4294901760
        %v929 = vsub.f32 %v563, %v928
        %v930 = vand.u32 %v929, 4294901760
        %v931 = vsub.f32 %v929, %v930
        %v932 = vand.u32 %v931, 4294901760
        %933 = vmatprep.subr.mxu0 %v932
        %v934 = vand.u32 %v562, 4294901760
        %v935 = vsub.f32 %v562, %v934
        %v936 = vand.u32 %v935, 4294901760
        %v937 = vsub.f32 %v935, %v936
        %v938 = vand.u32 %v937, 4294901760
        %939 = vmatpush1.msra.mxu0 %v938
        %v940 = vand.u32 %v557, 4294901760
        %v941 = vsub.f32 %v557, %v940
        %v942 = vand.u32 %v941, 4294901760
        %v943 = vsub.f32 %v941, %v942
        %v944 = vand.u32 %v943, 4294901760
        %945 = vmatprep.subr.mxu0 %v944
        %v946 = vand.u32 %v556, 4294901760
        %v947 = vsub.f32 %v556, %v946
        %v948 = vand.u32 %v947, 4294901760
        %v949 = vsub.f32 %v947, %v948
        %v950 = vand.u32 %v949, 4294901760
        %951 = vmatpush1.msra.mxu0 %v950
        %952 = vmatprep.subr.mxu0 0.0
        %953 = vmatpush2.msra.mxu0 0.0
        %954 = vmatprep.subr.mxu0 0.0
        %955 = vmatpush2.msra.mxu0 0.0
        %956 = vmatprep.subr.mxu0 0.0
        %957 = vmatpush2.msra.mxu0 0.0
        %958 = vmatprep.subr.mxu0 0.0
        %959 = vmatpush2.msra.mxu0 0.0
        %960 = vmatprep.subr.mxu0 0.0
        %961 = vmatpush2.msra.mxu0 0.0
        %962 = vmatprep.subr.mxu0 0.0
        %963 = vmatpush2.msra.mxu0 0.0
        %964 = vmatprep.subr.mxu0 0.0
        %965 = vmatpush2.msra.mxu0 0.0
        %966 = vmatprep.subr.mxu0 0.0
        %967 = vmatpush2.msra.mxu0 0.0
        %968 = vmatprep.subr.mxu0 0.0
        %969 = vmatpush2.msra.mxu0 0.0
        %970 = vmatprep.subr.mxu0 0.0
        %971 = vmatpush2.msra.mxu0 0.0
        %972 = vmatprep.subr.mxu0 0.0
        %973 = vmatpush2.msra.mxu0 0.0
        %974 = vmatprep.subr.mxu0 0.0
        %975 = vmatpush2.msra.mxu0 0.0
        %976 = vmatprep.subr.mxu0 0.0
        %977 = vmatpush2.msra.mxu0 0.0
        %978 = vmatprep.subr.mxu0 0.0
        %979 = vmatpush2.msra.mxu0 0.0
        %980 = vmatprep.subr.mxu0 0.0
        %981 = vmatpush2.msra.mxu0 0.0
        %982 = vmatprep.subr.mxu0 0.0
        %983 = vmatpush2.msra.mxu0 0.0
        %984 = vmatprep.mubr.f32.mxu0 0.0
        %v985 = vand.u32 %v555, 4294901760
        %986 = vmatmul.mubr.f32.gmra.mxu0 %v985
        %v987 = vpop.f32.mrf.mxu0
        %v988 = vadd.f32 %v756, %v987
        %v989 = vpop.f32.mrf.mxu0
        %v990 = vadd.f32 %v758, %v989
        %991 = vdwg.mxu0
        %v992 = vand.u32 %v647, 4294901760
        %v993 = vsub.f32 %v647, %v992
        %994 = vmatprep.subr.mxu0 %v993
        %v995 = vand.u32 %v646, 4294901760
        %v996 = vsub.f32 %v646, %v995
        %997 = vmatpush1.msra.mxu0 %v996
        %v998 = vand.u32 %v641, 4294901760
        %v999 = vsub.f32 %v641, %v998
        %1000 = vmatprep.subr.mxu0 %v999
        %v1001 = vand.u32 %v640, 4294901760
        %v1002 = vsub.f32 %v640, %v1001
        %1003 = vmatpush1.msra.mxu0 %v1002
        %v1004 = vand.u32 %v635, 4294901760
        %v1005 = vsub.f32 %v635, %v1004
        %1006 = vmatprep.subr.mxu0 %v1005
        %v1007 = vand.u32 %v634, 4294901760
        %v1008 = vsub.f32 %v634, %v1007
        %1009 = vmatpush1.msra.mxu0 %v1008
        %v1010 = vand.u32 %v629, 4294901760
        %v1011 = vsub.f32 %v629, %v1010
        %1012 = vmatprep.subr.mxu0 %v1011
        %v1013 = vand.u32 %v628, 4294901760
        %v1014 = vsub.f32 %v628, %v1013
        %1015 = vmatpush1.msra.mxu0 %v1014
        %v1016 = vand.u32 %v623, 4294901760
        %v1017 = vsub.f32 %v623, %v1016
        %1018 = vmatprep.subr.mxu0 %v1017
        %v1019 = vand.u32 %v622, 4294901760
        %v1020 = vsub.f32 %v622, %v1019
        %1021 = vmatpush1.msra.mxu0 %v1020
        %v1022 = vand.u32 %v617, 4294901760
        %v1023 = vsub.f32 %v617, %v1022
        %1024 = vmatprep.subr.mxu0 %v1023
        %v1025 = vand.u32 %v616, 4294901760
        %v1026 = vsub.f32 %v616, %v1025
        %1027 = vmatpush1.msra.mxu0 %v1026
        %v1028 = vand.u32 %v611, 4294901760
        %v1029 = vsub.f32 %v611, %v1028
        %1030 = vmatprep.subr.mxu0 %v1029
        %v1031 = vand.u32 %v610, 4294901760
        %v1032 = vsub.f32 %v610, %v1031
        %1033 = vmatpush1.msra.mxu0 %v1032
        %v1034 = vand.u32 %v605, 4294901760
        %v1035 = vsub.f32 %v605, %v1034
        %1036 = vmatprep.subr.mxu0 %v1035
        %v1037 = vand.u32 %v604, 4294901760
        %v1038 = vsub.f32 %v604, %v1037
        %1039 = vmatpush1.msra.mxu0 %v1038
        %v1040 = vand.u32 %v599, 4294901760
        %v1041 = vsub.f32 %v599, %v1040
        %1042 = vmatprep.subr.mxu0 %v1041
        %v1043 = vand.u32 %v598, 4294901760
        %v1044 = vsub.f32 %v598, %v1043
        %1045 = vmatpush1.msra.mxu0 %v1044
        %v1046 = vand.u32 %v593, 4294901760
        %v1047 = vsub.f32 %v593, %v1046
        %1048 = vmatprep.subr.mxu0 %v1047
        %v1049 = vand.u32 %v592, 4294901760
        %v1050 = vsub.f32 %v592, %v1049
        %1051 = vmatpush1.msra.mxu0 %v1050
        %v1052 = vand.u32 %v587, 4294901760
        %v1053 = vsub.f32 %v587, %v1052
        %1054 = vmatprep.subr.mxu0 %v1053
        %v1055 = vand.u32 %v586, 4294901760
        %v1056 = vsub.f32 %v586, %v1055
        %1057 = vmatpush1.msra.mxu0 %v1056
        %v1058 = vand.u32 %v581, 4294901760
        %v1059 = vsub.f32 %v581, %v1058
        %1060 = vmatprep.subr.mxu0 %v1059
        %v1061 = vand.u32 %v580, 4294901760
        %v1062 = vsub.f32 %v580, %v1061
        %1063 = vmatpush1.msra.mxu0 %v1062
        %v1064 = vand.u32 %v575, 4294901760
        %v1065 = vsub.f32 %v575, %v1064
        %1066 = vmatprep.subr.mxu0 %v1065
        %v1067 = vand.u32 %v574, 4294901760
        %v1068 = vsub.f32 %v574, %v1067
        %1069 = vmatpush1.msra.mxu0 %v1068
        %v1070 = vand.u32 %v569, 4294901760
        %v1071 = vsub.f32 %v569, %v1070
        %1072 = vmatprep.subr.mxu0 %v1071
        %v1073 = vand.u32 %v568, 4294901760
        %v1074 = vsub.f32 %v568, %v1073
        %1075 = vmatpush1.msra.mxu0 %v1074
        %v1076 = vand.u32 %v563, 4294901760
        %v1077 = vsub.f32 %v563, %v1076
        %1078 = vmatprep.subr.mxu0 %v1077
        %v1079 = vand.u32 %v562, 4294901760
        %v1080 = vsub.f32 %v562, %v1079
        %1081 = vmatpush1.msra.mxu0 %v1080
        %v1082 = vand.u32 %v557, 4294901760
        %v1083 = vsub.f32 %v557, %v1082
        %1084 = vmatprep.subr.mxu0 %v1083
        %v1085 = vand.u32 %v556, 4294901760
        %v1086 = vsub.f32 %v556, %v1085
        %1087 = vmatpush1.msra.mxu0 %v1086
        %1088 = vmatprep.subr.mxu0 0.0
        %1089 = vmatpush2.msra.mxu0 0.0
        %1090 = vmatprep.subr.mxu0 0.0
        %1091 = vmatpush2.msra.mxu0 0.0
        %1092 = vmatprep.subr.mxu0 0.0
        %1093 = vmatpush2.msra.mxu0 0.0
        %1094 = vmatprep.subr.mxu0 0.0
        %1095 = vmatpush2.msra.mxu0 0.0
        %1096 = vmatprep.subr.mxu0 0.0
        %1097 = vmatpush2.msra.mxu0 0.0
        %1098 = vmatprep.subr.mxu0 0.0
        %1099 = vmatpush2.msra.mxu0 0.0
        %1100 = vmatprep.subr.mxu0 0.0
        %1101 = vmatpush2.msra.mxu0 0.0
        %1102 = vmatprep.subr.mxu0 0.0
        %1103 = vmatpush2.msra.mxu0 0.0
        %1104 = vmatprep.subr.mxu0 0.0
        %1105 = vmatpush2.msra.mxu0 0.0
        %1106 = vmatprep.subr.mxu0 0.0
        %1107 = vmatpush2.msra.mxu0 0.0
        %1108 = vmatprep.subr.mxu0 0.0
        %1109 = vmatpush2.msra.mxu0 0.0
        %1110 = vmatprep.subr.mxu0 0.0
        %1111 = vmatpush2.msra.mxu0 0.0
        %1112 = vmatprep.subr.mxu0 0.0
        %1113 = vmatpush2.msra.mxu0 0.0
        %1114 = vmatprep.subr.mxu0 0.0
        %1115 = vmatpush2.msra.mxu0 0.0
        %1116 = vmatprep.subr.mxu0 0.0
        %1117 = vmatpush2.msra.mxu0 0.0
        %1118 = vmatprep.subr.mxu0 0.0
        %1119 = vmatpush2.msra.mxu0 0.0
        %1120 = vmatprep.mubr.f32.mxu0 0.0
        %v1121 = vand.u32 %v555, 4294901760
        %v1122 = vsub.f32 %v555, %v1121
        %1123 = vmatmul.mubr.f32.gmra.mxu0 %v1122
        %v1124 = vpop.f32.mrf.mxu0
        %v1125 = vadd.f32 %v988, %v1124
        %v1126 = vpop.f32.mrf.mxu0
        %v1127 = vadd.f32 %v990, %v1126
        %1128 = vdwg.mxu0
        %v1129 = vand.u32 %v647, 4294901760
        %1130 = vmatprep.subr.mxu0 %v1129
        %v1131 = vand.u32 %v646, 4294901760
        %1132 = vmatpush1.msra.mxu0 %v1131
        %v1133 = vand.u32 %v641, 4294901760
        %1134 = vmatprep.subr.mxu0 %v1133
        %v1135 = vand.u32 %v640, 4294901760
        %1136 = vmatpush1.msra.mxu0 %v1135
        %v1137 = vand.u32 %v635, 4294901760
        %1138 = vmatprep.subr.mxu0 %v1137
        %v1139 = vand.u32 %v634, 4294901760
        %1140 = vmatpush1.msra.mxu0 %v1139
        %v1141 = vand.u32 %v629, 4294901760
        %1142 = vmatprep.subr.mxu0 %v1141
        %v1143 = vand.u32 %v628, 4294901760
        %1144 = vmatpush1.msra.mxu0 %v1143
        %v1145 = vand.u32 %v623, 4294901760
        %1146 = vmatprep.subr.mxu0 %v1145
        %v1147 = vand.u32 %v622, 4294901760
        %1148 = vmatpush1.msra.mxu0 %v1147
        %v1149 = vand.u32 %v617, 4294901760
        %1150 = vmatprep.subr.mxu0 %v1149
        %v1151 = vand.u32 %v616, 4294901760
        %1152 = vmatpush1.msra.mxu0 %v1151
        %v1153 = vand.u32 %v611, 4294901760
        %1154 = vmatprep.subr.mxu0 %v1153
        %v1155 = vand.u32 %v610, 4294901760
        %1156 = vmatpush1.msra.mxu0 %v1155
        %v1157 = vand.u32 %v605, 4294901760
        %1158 = vmatprep.subr.mxu0 %v1157
        %v1159 = vand.u32 %v604, 4294901760
        %1160 = vmatpush1.msra.mxu0 %v1159
        %v1161 = vand.u32 %v599, 4294901760
        %1162 = vmatprep.subr.mxu0 %v1161
        %v1163 = vand.u32 %v598, 4294901760
        %1164 = vmatpush1.msra.mxu0 %v1163
        %v1165 = vand.u32 %v593, 4294901760
        %1166 = vmatprep.subr.mxu0 %v1165
        %v1167 = vand.u32 %v592, 4294901760
        %1168 = vmatpush1.msra.mxu0 %v1167
        %v1169 = vand.u32 %v587, 4294901760
        %1170 = vmatprep.subr.mxu0 %v1169
        %v1171 = vand.u32 %v586, 4294901760
        %1172 = vmatpush1.msra.mxu0 %v1171
        %v1173 = vand.u32 %v581, 4294901760
        %1174 = vmatprep.subr.mxu0 %v1173
        %v1175 = vand.u32 %v580, 4294901760
        %1176 = vmatpush1.msra.mxu0 %v1175
        %v1177 = vand.u32 %v575, 4294901760
        %1178 = vmatprep.subr.mxu0 %v1177
        %v1179 = vand.u32 %v574, 4294901760
        %1180 = vmatpush1.msra.mxu0 %v1179
        %v1181 = vand.u32 %v569, 4294901760
        %1182 = vmatprep.subr.mxu0 %v1181
        %v1183 = vand.u32 %v568, 4294901760
        %1184 = vmatpush1.msra.mxu0 %v1183
        %v1185 = vand.u32 %v563, 4294901760
        %1186 = vmatprep.subr.mxu0 %v1185
        %v1187 = vand.u32 %v562, 4294901760
        %1188 = vmatpush1.msra.mxu0 %v1187
        %v1189 = vand.u32 %v557, 4294901760
        %1190 = vmatprep.subr.mxu0 %v1189
        %v1191 = vand.u32 %v556, 4294901760
        %1192 = vmatpush1.msra.mxu0 %v1191
        %1193 = vmatprep.subr.mxu0 0.0
        %1194 = vmatpush2.msra.mxu0 0.0
        %1195 = vmatprep.subr.mxu0 0.0
        %1196 = vmatpush2.msra.mxu0 0.0
        %1197 = vmatprep.subr.mxu0 0.0
        %1198 = vmatpush2.msra.mxu0 0.0
        %1199 = vmatprep.subr.mxu0 0.0
        %1200 = vmatpush2.msra.mxu0 0.0
        %1201 = vmatprep.subr.mxu0 0.0
        %1202 = vmatpush2.msra.mxu0 0.0
        %1203 = vmatprep.subr.mxu0 0.0
        %1204 = vmatpush2.msra.mxu0 0.0
        %1205 = vmatprep.subr.mxu0 0.0
        %1206 = vmatpush2.msra.mxu0 0.0
        %1207 = vmatprep.subr.mxu0 0.0
        %1208 = vmatpush2.msra.mxu0 0.0
        %1209 = vmatprep.subr.mxu0 0.0
        %1210 = vmatpush2.msra.mxu0 0.0
        %1211 = vmatprep.subr.mxu0 0.0
        %1212 = vmatpush2.msra.mxu0 0.0
        %1213 = vmatprep.subr.mxu0 0.0
        %1214 = vmatpush2.msra.mxu0 0.0
        %1215 = vmatprep.subr.mxu0 0.0
        %1216 = vmatpush2.msra.mxu0 0.0
        %1217 = vmatprep.subr.mxu0 0.0
        %1218 = vmatpush2.msra.mxu0 0.0
        %1219 = vmatprep.subr.mxu0 0.0
        %1220 = vmatpush2.msra.mxu0 0.0
        %1221 = vmatprep.subr.mxu0 0.0
        %1222 = vmatpush2.msra.mxu0 0.0
        %1223 = vmatprep.subr.mxu0 0.0
        %1224 = vmatpush2.msra.mxu0 0.0
        %1225 = vmatprep.mubr.f32.mxu0 0.0
        %v1226 = vand.u32 %v555, 4294901760
        %v1227 = vsub.f32 %v555, %v1226
        %v1228 = vand.u32 %v1227, 4294901760
        %1229 = vmatmul.mubr.f32.gmra.mxu0 %v1228
        %v1230 = vpop.f32.mrf.mxu0
        %v1231 = vadd.f32 %v1125, %v1230
        %v1232 = vpop.f32.mrf.mxu0
        %v1233 = vadd.f32 %v1127, %v1232
        %1234 = vdwg.mxu0
        %v1235 = vand.u32 %v647, 4294901760
        %v1236 = vsub.f32 %v647, %v1235
        %v1237 = vand.u32 %v1236, 4294901760
        %1238 = vmatprep.subr.mxu0 %v1237
        %v1239 = vand.u32 %v646, 4294901760
        %v1240 = vsub.f32 %v646, %v1239
        %v1241 = vand.u32 %v1240, 4294901760
        %1242 = vmatpush1.msra.mxu0 %v1241
        %v1243 = vand.u32 %v641, 4294901760
        %v1244 = vsub.f32 %v641, %v1243
        %v1245 = vand.u32 %v1244, 4294901760
        %1246 = vmatprep.subr.mxu0 %v1245
        %v1247 = vand.u32 %v640, 4294901760
        %v1248 = vsub.f32 %v640, %v1247
        %v1249 = vand.u32 %v1248, 4294901760
        %1250 = vmatpush1.msra.mxu0 %v1249
        %v1251 = vand.u32 %v635, 4294901760
        %v1252 = vsub.f32 %v635, %v1251
        %v1253 = vand.u32 %v1252, 4294901760
        %1254 = vmatprep.subr.mxu0 %v1253
        %v1255 = vand.u32 %v634, 4294901760
        %v1256 = vsub.f32 %v634, %v1255
        %v1257 = vand.u32 %v1256, 4294901760
        %1258 = vmatpush1.msra.mxu0 %v1257
        %v1259 = vand.u32 %v629, 4294901760
        %v1260 = vsub.f32 %v629, %v1259
        %v1261 = vand.u32 %v1260, 4294901760
        %1262 = vmatprep.subr.mxu0 %v1261
        %v1263 = vand.u32 %v628, 4294901760
        %v1264 = vsub.f32 %v628, %v1263
        %v1265 = vand.u32 %v1264, 4294901760
        %1266 = vmatpush1.msra.mxu0 %v1265
        %v1267 = vand.u32 %v623, 4294901760
        %v1268 = vsub.f32 %v623, %v1267
        %v1269 = vand.u32 %v1268, 4294901760
        %1270 = vmatprep.subr.mxu0 %v1269
        %v1271 = vand.u32 %v622, 4294901760
        %v1272 = vsub.f32 %v622, %v1271
        %v1273 = vand.u32 %v1272, 4294901760
        %1274 = vmatpush1.msra.mxu0 %v1273
        %v1275 = vand.u32 %v617, 4294901760
        %v1276 = vsub.f32 %v617, %v1275
        %v1277 = vand.u32 %v1276, 4294901760
        %1278 = vmatprep.subr.mxu0 %v1277
        %v1279 = vand.u32 %v616, 4294901760
        %v1280 = vsub.f32 %v616, %v1279
        %v1281 = vand.u32 %v1280, 4294901760
        %1282 = vmatpush1.msra.mxu0 %v1281
        %v1283 = vand.u32 %v611, 4294901760
        %v1284 = vsub.f32 %v611, %v1283
        %v1285 = vand.u32 %v1284, 4294901760
        %1286 = vmatprep.subr.mxu0 %v1285
        %v1287 = vand.u32 %v610, 4294901760
        %v1288 = vsub.f32 %v610, %v1287
        %v1289 = vand.u32 %v1288, 4294901760
        %1290 = vmatpush1.msra.mxu0 %v1289
        %v1291 = vand.u32 %v605, 4294901760
        %v1292 = vsub.f32 %v605, %v1291
        %v1293 = vand.u32 %v1292, 4294901760
        %1294 = vmatprep.subr.mxu0 %v1293
        %v1295 = vand.u32 %v604, 4294901760
        %v1296 = vsub.f32 %v604, %v1295
        %v1297 = vand.u32 %v1296, 4294901760
        %1298 = vmatpush1.msra.mxu0 %v1297
        %v1299 = vand.u32 %v599, 4294901760
        %v1300 = vsub.f32 %v599, %v1299
        %v1301 = vand.u32 %v1300, 4294901760
        %1302 = vmatprep.subr.mxu0 %v1301
        %v1303 = vand.u32 %v598, 4294901760
        %v1304 = vsub.f32 %v598, %v1303
        %v1305 = vand.u32 %v1304, 4294901760
        %1306 = vmatpush1.msra.mxu0 %v1305
        %v1307 = vand.u32 %v593, 4294901760
        %v1308 = vsub.f32 %v593, %v1307
        %v1309 = vand.u32 %v1308, 4294901760
        %1310 = vmatprep.subr.mxu0 %v1309
        %v1311 = vand.u32 %v592, 4294901760
        %v1312 = vsub.f32 %v592, %v1311
        %v1313 = vand.u32 %v1312, 4294901760
        %1314 = vmatpush1.msra.mxu0 %v1313
        %v1315 = vand.u32 %v587, 4294901760
        %v1316 = vsub.f32 %v587, %v1315
        %v1317 = vand.u32 %v1316, 4294901760
        %1318 = vmatprep.subr.mxu0 %v1317
        %v1319 = vand.u32 %v586, 4294901760
        %v1320 = vsub.f32 %v586, %v1319
        %v1321 = vand.u32 %v1320, 4294901760
        %1322 = vmatpush1.msra.mxu0 %v1321
        %v1323 = vand.u32 %v581, 4294901760
        %v1324 = vsub.f32 %v581, %v1323
        %v1325 = vand.u32 %v1324, 4294901760
        %1326 = vmatprep.subr.mxu0 %v1325
        %v1327 = vand.u32 %v580, 4294901760
        %v1328 = vsub.f32 %v580, %v1327
        %v1329 = vand.u32 %v1328, 4294901760
        %1330 = vmatpush1.msra.mxu0 %v1329
        %v1331 = vand.u32 %v575, 4294901760
        %v1332 = vsub.f32 %v575, %v1331
        %v1333 = vand.u32 %v1332, 4294901760
        %1334 = vmatprep.subr.mxu0 %v1333
        %v1335 = vand.u32 %v574, 4294901760
        %v1336 = vsub.f32 %v574, %v1335
        %v1337 = vand.u32 %v1336, 4294901760
        %1338 = vmatpush1.msra.mxu0 %v1337
        %v1339 = vand.u32 %v569, 4294901760
        %v1340 = vsub.f32 %v569, %v1339
        %v1341 = vand.u32 %v1340, 4294901760
        %1342 = vmatprep.subr.mxu0 %v1341
        %v1343 = vand.u32 %v568, 4294901760
        %v1344 = vsub.f32 %v568, %v1343
        %v1345 = vand.u32 %v1344, 4294901760
        %1346 = vmatpush1.msra.mxu0 %v1345
        %v1347 = vand.u32 %v563, 4294901760
        %v1348 = vsub.f32 %v563, %v1347
        %v1349 = vand.u32 %v1348, 4294901760
        %1350 = vmatprep.subr.mxu0 %v1349
        %v1351 = vand.u32 %v562, 4294901760
        %v1352 = vsub.f32 %v562, %v1351
        %v1353 = vand.u32 %v1352, 4294901760
        %1354 = vmatpush1.msra.mxu0 %v1353
        %v1355 = vand.u32 %v557, 4294901760
        %v1356 = vsub.f32 %v557, %v1355
        %v1357 = vand.u32 %v1356, 4294901760
        %1358 = vmatprep.subr.mxu0 %v1357
        %v1359 = vand.u32 %v556, 4294901760
        %v1360 = vsub.f32 %v556, %v1359
        %v1361 = vand.u32 %v1360, 4294901760
        %1362 = vmatpush1.msra.mxu0 %v1361
        %1363 = vmatprep.subr.mxu0 0.0
        %1364 = vmatpush2.msra.mxu0 0.0
        %1365 = vmatprep.subr.mxu0 0.0
        %1366 = vmatpush2.msra.mxu0 0.0
        %1367 = vmatprep.subr.mxu0 0.0
        %1368 = vmatpush2.msra.mxu0 0.0
        %1369 = vmatprep.subr.mxu0 0.0
        %1370 = vmatpush2.msra.mxu0 0.0
        %1371 = vmatprep.subr.mxu0 0.0
        %1372 = vmatpush2.msra.mxu0 0.0
        %1373 = vmatprep.subr.mxu0 0.0
        %1374 = vmatpush2.msra.mxu0 0.0
        %1375 = vmatprep.subr.mxu0 0.0
        %1376 = vmatpush2.msra.mxu0 0.0
        %1377 = vmatprep.subr.mxu0 0.0
        %1378 = vmatpush2.msra.mxu0 0.0
        %1379 = vmatprep.subr.mxu0 0.0
        %1380 = vmatpush2.msra.mxu0 0.0
        %1381 = vmatprep.subr.mxu0 0.0
        %1382 = vmatpush2.msra.mxu0 0.0
        %1383 = vmatprep.subr.mxu0 0.0
        %1384 = vmatpush2.msra.mxu0 0.0
        %1385 = vmatprep.subr.mxu0 0.0
        %1386 = vmatpush2.msra.mxu0 0.0
        %1387 = vmatprep.subr.mxu0 0.0
        %1388 = vmatpush2.msra.mxu0 0.0
        %1389 = vmatprep.subr.mxu0 0.0
        %1390 = vmatpush2.msra.mxu0 0.0
        %1391 = vmatprep.subr.mxu0 0.0
        %1392 = vmatpush2.msra.mxu0 0.0
        %1393 = vmatprep.subr.mxu0 0.0
        %1394 = vmatpush2.msra.mxu0 0.0
        %1395 = vmatprep.mubr.f32.mxu0 0.0
        %v1396 = vand.u32 %v555, 4294901760
        %1397 = vmatmul.mubr.f32.gmra.mxu0 %v1396
        %v1398 = vpop.f32.mrf.mxu0
        %v1399 = vadd.f32 %v1231, %v1398
        %v1400 = vpop.f32.mrf.mxu0
        %v1401 = vadd.f32 %v1233, %v1400
        %1402 = vdwg.mxu0
        %v1403 = vand.u32 %v647, 4294901760
        %1404 = vmatprep.subr.mxu0 %v1403
        %v1405 = vand.u32 %v646, 4294901760
        %1406 = vmatpush1.msra.mxu0 %v1405
        %v1407 = vand.u32 %v641, 4294901760
        %1408 = vmatprep.subr.mxu0 %v1407
        %v1409 = vand.u32 %v640, 4294901760
        %1410 = vmatpush1.msra.mxu0 %v1409
        %v1411 = vand.u32 %v635, 4294901760
        %1412 = vmatprep.subr.mxu0 %v1411
        %v1413 = vand.u32 %v634, 4294901760
        %1414 = vmatpush1.msra.mxu0 %v1413
        %v1415 = vand.u32 %v629, 4294901760
        %1416 = vmatprep.subr.mxu0 %v1415
        %v1417 = vand.u32 %v628, 4294901760
        %1418 = vmatpush1.msra.mxu0 %v1417
        %v1419 = vand.u32 %v623, 4294901760
        %1420 = vmatprep.subr.mxu0 %v1419
        %v1421 = vand.u32 %v622, 4294901760
        %1422 = vmatpush1.msra.mxu0 %v1421
        %v1423 = vand.u32 %v617, 4294901760
        %1424 = vmatprep.subr.mxu0 %v1423
        %v1425 = vand.u32 %v616, 4294901760
        %1426 = vmatpush1.msra.mxu0 %v1425
        %v1427 = vand.u32 %v611, 4294901760
        %1428 = vmatprep.subr.mxu0 %v1427
        %v1429 = vand.u32 %v610, 4294901760
        %1430 = vmatpush1.msra.mxu0 %v1429
        %v1431 = vand.u32 %v605, 4294901760
        %1432 = vmatprep.subr.mxu0 %v1431
        %v1433 = vand.u32 %v604, 4294901760
        %1434 = vmatpush1.msra.mxu0 %v1433
        %v1435 = vand.u32 %v599, 4294901760
        %1436 = vmatprep.subr.mxu0 %v1435
        %v1437 = vand.u32 %v598, 4294901760
        %1438 = vmatpush1.msra.mxu0 %v1437
        %v1439 = vand.u32 %v593, 4294901760
        %1440 = vmatprep.subr.mxu0 %v1439
        %v1441 = vand.u32 %v592, 4294901760
        %1442 = vmatpush1.msra.mxu0 %v1441
        %v1443 = vand.u32 %v587, 4294901760
        %1444 = vmatprep.subr.mxu0 %v1443
        %v1445 = vand.u32 %v586, 4294901760
        %1446 = vmatpush1.msra.mxu0 %v1445
        %v1447 = vand.u32 %v581, 4294901760
        %1448 = vmatprep.subr.mxu0 %v1447
        %v1449 = vand.u32 %v580, 4294901760
        %1450 = vmatpush1.msra.mxu0 %v1449
        %v1451 = vand.u32 %v575, 4294901760
        %1452 = vmatprep.subr.mxu0 %v1451
        %v1453 = vand.u32 %v574, 4294901760
        %1454 = vmatpush1.msra.mxu0 %v1453
        %v1455 = vand.u32 %v569, 4294901760
        %1456 = vmatprep.subr.mxu0 %v1455
        %v1457 = vand.u32 %v568, 4294901760
        %1458 = vmatpush1.msra.mxu0 %v1457
        %v1459 = vand.u32 %v563, 4294901760
        %1460 = vmatprep.subr.mxu0 %v1459
        %v1461 = vand.u32 %v562, 4294901760
        %1462 = vmatpush1.msra.mxu0 %v1461
        %v1463 = vand.u32 %v557, 4294901760
        %1464 = vmatprep.subr.mxu0 %v1463
        %v1465 = vand.u32 %v556, 4294901760
        %1466 = vmatpush1.msra.mxu0 %v1465
        %1467 = vmatprep.subr.mxu0 0.0
        %1468 = vmatpush2.msra.mxu0 0.0
        %1469 = vmatprep.subr.mxu0 0.0
        %1470 = vmatpush2.msra.mxu0 0.0
        %1471 = vmatprep.subr.mxu0 0.0
        %1472 = vmatpush2.msra.mxu0 0.0
        %1473 = vmatprep.subr.mxu0 0.0
        %1474 = vmatpush2.msra.mxu0 0.0
        %1475 = vmatprep.subr.mxu0 0.0
        %1476 = vmatpush2.msra.mxu0 0.0
        %1477 = vmatprep.subr.mxu0 0.0
        %1478 = vmatpush2.msra.mxu0 0.0
        %1479 = vmatprep.subr.mxu0 0.0
        %1480 = vmatpush2.msra.mxu0 0.0
        %1481 = vmatprep.subr.mxu0 0.0
        %1482 = vmatpush2.msra.mxu0 0.0
        %1483 = vmatprep.subr.mxu0 0.0
        %1484 = vmatpush2.msra.mxu0 0.0
        %1485 = vmatprep.subr.mxu0 0.0
        %1486 = vmatpush2.msra.mxu0 0.0
        %1487 = vmatprep.subr.mxu0 0.0
        %1488 = vmatpush2.msra.mxu0 0.0
        %1489 = vmatprep.subr.mxu0 0.0
        %1490 = vmatpush2.msra.mxu0 0.0
        %1491 = vmatprep.subr.mxu0 0.0
        %1492 = vmatpush2.msra.mxu0 0.0
        %1493 = vmatprep.subr.mxu0 0.0
        %1494 = vmatpush2.msra.mxu0 0.0
        %1495 = vmatprep.subr.mxu0 0.0
        %1496 = vmatpush2.msra.mxu0 0.0
        %1497 = vmatprep.subr.mxu0 0.0
        %1498 = vmatpush2.msra.mxu0 0.0
        %1499 = vmatprep.mubr.f32.mxu0 0.0
        %v1500 = vand.u32 %v555, 4294901760
        %1501 = vmatmul.mubr.f32.gmra.mxu0 %v1500
        %v1502 = vpop.f32.mrf.mxu0
        %v1503 = vadd.f32 %v1399, %v1502
        %v1504 = vpop.f32.mrf.mxu0
        %v1505 = vadd.f32 %v1401, %v1504
        %1506 = vdwg.mxu0
        %v1507 = vand.u32 %v649, 4294901760
        %1508 = vmatprep.subr.mxu0 %v1507
        %v1509 = vand.u32 %v648, 4294901760
        %1510 = vmatpush1.msra.mxu0 %v1509
        %v1511 = vand.u32 %v643, 4294901760
        %1512 = vmatprep.subr.mxu0 %v1511
        %v1513 = vand.u32 %v642, 4294901760
        %1514 = vmatpush1.msra.mxu0 %v1513
        %v1515 = vand.u32 %v637, 4294901760
        %1516 = vmatprep.subr.mxu0 %v1515
        %v1517 = vand.u32 %v636, 4294901760
        %1518 = vmatpush1.msra.mxu0 %v1517
        %v1519 = vand.u32 %v631, 4294901760
        %1520 = vmatprep.subr.mxu0 %v1519
        %v1521 = vand.u32 %v630, 4294901760
        %1522 = vmatpush1.msra.mxu0 %v1521
        %v1523 = vand.u32 %v625, 4294901760
        %1524 = vmatprep.subr.mxu0 %v1523
        %v1525 = vand.u32 %v624, 4294901760
        %1526 = vmatpush1.msra.mxu0 %v1525
        %v1527 = vand.u32 %v619, 4294901760
        %1528 = vmatprep.subr.mxu0 %v1527
        %v1529 = vand.u32 %v618, 4294901760
        %1530 = vmatpush1.msra.mxu0 %v1529
        %v1531 = vand.u32 %v613, 4294901760
        %1532 = vmatprep.subr.mxu0 %v1531
        %v1533 = vand.u32 %v612, 4294901760
        %1534 = vmatpush1.msra.mxu0 %v1533
        %v1535 = vand.u32 %v607, 4294901760
        %1536 = vmatprep.subr.mxu0 %v1535
        %v1537 = vand.u32 %v606, 4294901760
        %1538 = vmatpush1.msra.mxu0 %v1537
        %v1539 = vand.u32 %v601, 4294901760
        %1540 = vmatprep.subr.mxu0 %v1539
        %v1541 = vand.u32 %v600, 4294901760
        %1542 = vmatpush1.msra.mxu0 %v1541
        %v1543 = vand.u32 %v595, 4294901760
        %1544 = vmatprep.subr.mxu0 %v1543
        %v1545 = vand.u32 %v594, 4294901760
        %1546 = vmatpush1.msra.mxu0 %v1545
        %v1547 = vand.u32 %v589, 4294901760
        %1548 = vmatprep.subr.mxu0 %v1547
        %v1549 = vand.u32 %v588, 4294901760
        %1550 = vmatpush1.msra.mxu0 %v1549
        %v1551 = vand.u32 %v583, 4294901760
        %1552 = vmatprep.subr.mxu0 %v1551
        %v1553 = vand.u32 %v582, 4294901760
        %1554 = vmatpush1.msra.mxu0 %v1553
        %v1555 = vand.u32 %v577, 4294901760
        %1556 = vmatprep.subr.mxu0 %v1555
        %v1557 = vand.u32 %v576, 4294901760
        %1558 = vmatpush1.msra.mxu0 %v1557
        %v1559 = vand.u32 %v571, 4294901760
        %1560 = vmatprep.subr.mxu0 %v1559
        %v1561 = vand.u32 %v570, 4294901760
        %1562 = vmatpush1.msra.mxu0 %v1561
        %v1563 = vand.u32 %v565, 4294901760
        %1564 = vmatprep.subr.mxu0 %v1563
        %v1565 = vand.u32 %v564, 4294901760
        %1566 = vmatpush1.msra.mxu0 %v1565
        %v1567 = vand.u32 %v559, 4294901760
        %1568 = vmatprep.subr.mxu0 %v1567
        %v1569 = vand.u32 %v558, 4294901760
        %1570 = vmatpush1.msra.mxu0 %v1569
        %1571 = vmatprep.subr.mxu0 0.0
        %1572 = vmatpush2.msra.mxu0 0.0
        %1573 = vmatprep.subr.mxu0 0.0
        %1574 = vmatpush2.msra.mxu0 0.0
        %1575 = vmatprep.subr.mxu0 0.0
        %1576 = vmatpush2.msra.mxu0 0.0
        %1577 = vmatprep.subr.mxu0 0.0
        %1578 = vmatpush2.msra.mxu0 0.0
        %1579 = vmatprep.subr.mxu0 0.0
        %1580 = vmatpush2.msra.mxu0 0.0
        %1581 = vmatprep.subr.mxu0 0.0
        %1582 = vmatpush2.msra.mxu0 0.0
        %1583 = vmatprep.subr.mxu0 0.0
        %1584 = vmatpush2.msra.mxu0 0.0
        %1585 = vmatprep.subr.mxu0 0.0
        %1586 = vmatpush2.msra.mxu0 0.0
        %1587 = vmatprep.subr.mxu0 0.0
        %1588 = vmatpush2.msra.mxu0 0.0
        %1589 = vmatprep.subr.mxu0 0.0
        %1590 = vmatpush2.msra.mxu0 0.0
        %1591 = vmatprep.subr.mxu0 0.0
        %1592 = vmatpush2.msra.mxu0 0.0
        %1593 = vmatprep.subr.mxu0 0.0
        %1594 = vmatpush2.msra.mxu0 0.0
        %1595 = vmatprep.subr.mxu0 0.0
        %1596 = vmatpush2.msra.mxu0 0.0
        %1597 = vmatprep.subr.mxu0 0.0
        %1598 = vmatpush2.msra.mxu0 0.0
        %1599 = vmatprep.subr.mxu0 0.0
        %1600 = vmatpush2.msra.mxu0 0.0
        %1601 = vmatprep.subr.mxu0 0.0
        %1602 = vmatpush2.msra.mxu0 0.0
        %1603 = vmatprep.mubr.f32.mxu0 0.0
        %v1604 = vand.u32 %v555, 4294901760
        %v1605 = vsub.f32 %v555, %v1604
        %v1606 = vand.u32 %v1605, 4294901760
        %v1607 = vsub.f32 %v1605, %v1606
        %v1608 = vand.u32 %v1607, 4294901760
        %1609 = vmatmul.mubr.f32.gmra.mxu0 %v1608
        %v1610 = vpop.f32.mrf.mxu0
        %v1611 = vadd.f32 0.0, %v1610
        %v1612 = vpop.f32.mrf.mxu0
        %v1613 = vadd.f32 0.0, %v1612
        %1614 = vdwg.mxu0
        %v1615 = vand.u32 %v649, 4294901760
        %v1616 = vsub.f32 %v649, %v1615
        %v1617 = vand.u32 %v1616, 4294901760
        %v1618 = vsub.f32 %v1616, %v1617
        %v1619 = vand.u32 %v1618, 4294901760
        %1620 = vmatprep.subr.mxu0 %v1619
        %v1621 = vand.u32 %v648, 4294901760
        %v1622 = vsub.f32 %v648, %v1621
        %v1623 = vand.u32 %v1622, 4294901760
        %v1624 = vsub.f32 %v1622, %v1623
        %v1625 = vand.u32 %v1624, 4294901760
        %1626 = vmatpush1.msra.mxu0 %v1625
        %v1627 = vand.u32 %v643, 4294901760
        %v1628 = vsub.f32 %v643, %v1627
        %v1629 = vand.u32 %v1628, 4294901760
        %v1630 = vsub.f32 %v1628, %v1629
        %v1631 = vand.u32 %v1630, 4294901760
        %1632 = vmatprep.subr.mxu0 %v1631
        %v1633 = vand.u32 %v642, 4294901760
        %v1634 = vsub.f32 %v642, %v1633
        %v1635 = vand.u32 %v1634, 4294901760
        %v1636 = vsub.f32 %v1634, %v1635
        %v1637 = vand.u32 %v1636, 4294901760
        %1638 = vmatpush1.msra.mxu0 %v1637
        %v1639 = vand.u32 %v637, 4294901760
        %v1640 = vsub.f32 %v637, %v1639
        %v1641 = vand.u32 %v1640, 4294901760
        %v1642 = vsub.f32 %v1640, %v1641
        %v1643 = vand.u32 %v1642, 4294901760
        %1644 = vmatprep.subr.mxu0 %v1643
        %v1645 = vand.u32 %v636, 4294901760
        %v1646 = vsub.f32 %v636, %v1645
        %v1647 = vand.u32 %v1646, 4294901760
        %v1648 = vsub.f32 %v1646, %v1647
        %v1649 = vand.u32 %v1648, 4294901760
        %1650 = vmatpush1.msra.mxu0 %v1649
        %v1651 = vand.u32 %v631, 4294901760
        %v1652 = vsub.f32 %v631, %v1651
        %v1653 = vand.u32 %v1652, 4294901760
        %v1654 = vsub.f32 %v1652, %v1653
        %v1655 = vand.u32 %v1654, 4294901760
        %1656 = vmatprep.subr.mxu0 %v1655
        %v1657 = vand.u32 %v630, 4294901760
        %v1658 = vsub.f32 %v630, %v1657
        %v1659 = vand.u32 %v1658, 4294901760
        %v1660 = vsub.f32 %v1658, %v1659
        %v1661 = vand.u32 %v1660, 4294901760
        %1662 = vmatpush1.msra.mxu0 %v1661
        %v1663 = vand.u32 %v625, 4294901760
        %v1664 = vsub.f32 %v625, %v1663
        %v1665 = vand.u32 %v1664, 4294901760
        %v1666 = vsub.f32 %v1664, %v1665
        %v1667 = vand.u32 %v1666, 4294901760
        %1668 = vmatprep.subr.mxu0 %v1667
        %v1669 = vand.u32 %v624, 4294901760
        %v1670 = vsub.f32 %v624, %v1669
        %v1671 = vand.u32 %v1670, 4294901760
        %v1672 = vsub.f32 %v1670, %v1671
        %v1673 = vand.u32 %v1672, 4294901760
        %1674 = vmatpush1.msra.mxu0 %v1673
        %v1675 = vand.u32 %v619, 4294901760
        %v1676 = vsub.f32 %v619, %v1675
        %v1677 = vand.u32 %v1676, 4294901760
        %v1678 = vsub.f32 %v1676, %v1677
        %v1679 = vand.u32 %v1678, 4294901760
        %1680 = vmatprep.subr.mxu0 %v1679
        %v1681 = vand.u32 %v618, 4294901760
        %v1682 = vsub.f32 %v618, %v1681
        %v1683 = vand.u32 %v1682, 4294901760
        %v1684 = vsub.f32 %v1682, %v1683
        %v1685 = vand.u32 %v1684, 4294901760
        %1686 = vmatpush1.msra.mxu0 %v1685
        %v1687 = vand.u32 %v613, 4294901760
        %v1688 = vsub.f32 %v613, %v1687
        %v1689 = vand.u32 %v1688, 4294901760
        %v1690 = vsub.f32 %v1688, %v1689
        %v1691 = vand.u32 %v1690, 4294901760
        %1692 = vmatprep.subr.mxu0 %v1691
        %v1693 = vand.u32 %v612, 4294901760
        %v1694 = vsub.f32 %v612, %v1693
        %v1695 = vand.u32 %v1694, 4294901760
        %v1696 = vsub.f32 %v1694, %v1695
        %v1697 = vand.u32 %v1696, 4294901760
        %1698 = vmatpush1.msra.mxu0 %v1697
        %v1699 = vand.u32 %v607, 4294901760
        %v1700 = vsub.f32 %v607, %v1699
        %v1701 = vand.u32 %v1700, 4294901760
        %v1702 = vsub.f32 %v1700, %v1701
        %v1703 = vand.u32 %v1702, 4294901760
        %1704 = vmatprep.subr.mxu0 %v1703
        %v1705 = vand.u32 %v606, 4294901760
        %v1706 = vsub.f32 %v606, %v1705
        %v1707 = vand.u32 %v1706, 4294901760
        %v1708 = vsub.f32 %v1706, %v1707
        %v1709 = vand.u32 %v1708, 4294901760
        %1710 = vmatpush1.msra.mxu0 %v1709
        %v1711 = vand.u32 %v601, 4294901760
        %v1712 = vsub.f32 %v601, %v1711
        %v1713 = vand.u32 %v1712, 4294901760
        %v1714 = vsub.f32 %v1712, %v1713
        %v1715 = vand.u32 %v1714, 4294901760
        %1716 = vmatprep.subr.mxu0 %v1715
        %v1717 = vand.u32 %v600, 4294901760
        %v1718 = vsub.f32 %v600, %v1717
        %v1719 = vand.u32 %v1718, 4294901760
        %v1720 = vsub.f32 %v1718, %v1719
        %v1721 = vand.u32 %v1720, 4294901760
        %1722 = vmatpush1.msra.mxu0 %v1721
        %v1723 = vand.u32 %v595, 4294901760
        %v1724 = vsub.f32 %v595, %v1723
        %v1725 = vand.u32 %v1724, 4294901760
        %v1726 = vsub.f32 %v1724, %v1725
        %v1727 = vand.u32 %v1726, 4294901760
        %1728 = vmatprep.subr.mxu0 %v1727
        %v1729 = vand.u32 %v594, 4294901760
        %v1730 = vsub.f32 %v594, %v1729
        %v1731 = vand.u32 %v1730, 4294901760
        %v1732 = vsub.f32 %v1730, %v1731
        %v1733 = vand.u32 %v1732, 4294901760
        %1734 = vmatpush1.msra.mxu0 %v1733
        %v1735 = vand.u32 %v589, 4294901760
        %v1736 = vsub.f32 %v589, %v1735
        %v1737 = vand.u32 %v1736, 4294901760
        %v1738 = vsub.f32 %v1736, %v1737
        %v1739 = vand.u32 %v1738, 4294901760
        %1740 = vmatprep.subr.mxu0 %v1739
        %v1741 = vand.u32 %v588, 4294901760
        %v1742 = vsub.f32 %v588, %v1741
        %v1743 = vand.u32 %v1742, 4294901760
        %v1744 = vsub.f32 %v1742, %v1743
        %v1745 = vand.u32 %v1744, 4294901760
        %1746 = vmatpush1.msra.mxu0 %v1745
        %v1747 = vand.u32 %v583, 4294901760
        %v1748 = vsub.f32 %v583, %v1747
        %v1749 = vand.u32 %v1748, 4294901760
        %v1750 = vsub.f32 %v1748, %v1749
        %v1751 = vand.u32 %v1750, 4294901760
        %1752 = vmatprep.subr.mxu0 %v1751
        %v1753 = vand.u32 %v582, 4294901760
        %v1754 = vsub.f32 %v582, %v1753
        %v1755 = vand.u32 %v1754, 4294901760
        %v1756 = vsub.f32 %v1754, %v1755
        %v1757 = vand.u32 %v1756, 4294901760
        %1758 = vmatpush1.msra.mxu0 %v1757
        %v1759 = vand.u32 %v577, 4294901760
        %v1760 = vsub.f32 %v577, %v1759
        %v1761 = vand.u32 %v1760, 4294901760
        %v1762 = vsub.f32 %v1760, %v1761
        %v1763 = vand.u32 %v1762, 4294901760
        %1764 = vmatprep.subr.mxu0 %v1763
        %v1765 = vand.u32 %v576, 4294901760
        %v1766 = vsub.f32 %v576, %v1765
        %v1767 = vand.u32 %v1766, 4294901760
        %v1768 = vsub.f32 %v1766, %v1767
        %v1769 = vand.u32 %v1768, 4294901760
        %1770 = vmatpush1.msra.mxu0 %v1769
        %v1771 = vand.u32 %v571, 4294901760
        %v1772 = vsub.f32 %v571, %v1771
        %v1773 = vand.u32 %v1772, 4294901760
        %v1774 = vsub.f32 %v1772, %v1773
        %v1775 = vand.u32 %v1774, 4294901760
        %1776 = vmatprep.subr.mxu0 %v1775
        %v1777 = vand.u32 %v570, 4294901760
        %v1778 = vsub.f32 %v570, %v1777
        %v1779 = vand.u32 %v1778, 4294901760
        %v1780 = vsub.f32 %v1778, %v1779
        %v1781 = vand.u32 %v1780, 4294901760
        %1782 = vmatpush1.msra.mxu0 %v1781
        %v1783 = vand.u32 %v565, 4294901760
        %v1784 = vsub.f32 %v565, %v1783
        %v1785 = vand.u32 %v1784, 4294901760
        %v1786 = vsub.f32 %v1784, %v1785
        %v1787 = vand.u32 %v1786, 4294901760
        %1788 = vmatprep.subr.mxu0 %v1787
        %v1789 = vand.u32 %v564, 4294901760
        %v1790 = vsub.f32 %v564, %v1789
        %v1791 = vand.u32 %v1790, 4294901760
        %v1792 = vsub.f32 %v1790, %v1791
        %v1793 = vand.u32 %v1792, 4294901760
        %1794 = vmatpush1.msra.mxu0 %v1793
        %v1795 = vand.u32 %v559, 4294901760
        %v1796 = vsub.f32 %v559, %v1795
        %v1797 = vand.u32 %v1796, 4294901760
        %v1798 = vsub.f32 %v1796, %v1797
        %v1799 = vand.u32 %v1798, 4294901760
        %1800 = vmatprep.subr.mxu0 %v1799
        %v1801 = vand.u32 %v558, 4294901760
        %v1802 = vsub.f32 %v558, %v1801
        %v1803 = vand.u32 %v1802, 4294901760
        %v1804 = vsub.f32 %v1802, %v1803
        %v1805 = vand.u32 %v1804, 4294901760
        %1806 = vmatpush1.msra.mxu0 %v1805
        %1807 = vmatprep.subr.mxu0 0.0
        %1808 = vmatpush2.msra.mxu0 0.0
        %1809 = vmatprep.subr.mxu0 0.0
        %1810 = vmatpush2.msra.mxu0 0.0
        %1811 = vmatprep.subr.mxu0 0.0
        %1812 = vmatpush2.msra.mxu0 0.0
        %1813 = vmatprep.subr.mxu0 0.0
        %1814 = vmatpush2.msra.mxu0 0.0
        %1815 = vmatprep.subr.mxu0 0.0
        %1816 = vmatpush2.msra.mxu0 0.0
        %1817 = vmatprep.subr.mxu0 0.0
        %1818 = vmatpush2.msra.mxu0 0.0
        %1819 = vmatprep.subr.mxu0 0.0
        %1820 = vmatpush2.msra.mxu0 0.0
        %1821 = vmatprep.subr.mxu0 0.0
        %1822 = vmatpush2.msra.mxu0 0.0
        %1823 = vmatprep.subr.mxu0 0.0
        %1824 = vmatpush2.msra.mxu0 0.0
        %1825 = vmatprep.subr.mxu0 0.0
        %1826 = vmatpush2.msra.mxu0 0.0
        %1827 = vmatprep.subr.mxu0 0.0
        %1828 = vmatpush2.msra.mxu0 0.0
        %1829 = vmatprep.subr.mxu0 0.0
        %1830 = vmatpush2.msra.mxu0 0.0
        %1831 = vmatprep.subr.mxu0 0.0
        %1832 = vmatpush2.msra.mxu0 0.0
        %1833 = vmatprep.subr.mxu0 0.0
        %1834 = vmatpush2.msra.mxu0 0.0
        %1835 = vmatprep.subr.mxu0 0.0
        %1836 = vmatpush2.msra.mxu0 0.0
        %1837 = vmatprep.subr.mxu0 0.0
        %1838 = vmatpush2.msra.mxu0 0.0
        %1839 = vmatprep.mubr.f32.mxu0 0.0
        %v1840 = vand.u32 %v555, 4294901760
        %1841 = vmatmul.mubr.f32.gmra.mxu0 %v1840
        %v1842 = vpop.f32.mrf.mxu0
        %v1843 = vadd.f32 %v1611, %v1842
        %v1844 = vpop.f32.mrf.mxu0
        %v1845 = vadd.f32 %v1613, %v1844
        %1846 = vdwg.mxu0
        %v1847 = vand.u32 %v649, 4294901760
        %v1848 = vsub.f32 %v649, %v1847
        %1849 = vmatprep.subr.mxu0 %v1848
        %v1850 = vand.u32 %v648, 4294901760
        %v1851 = vsub.f32 %v648, %v1850
        %1852 = vmatpush1.msra.mxu0 %v1851
        %v1853 = vand.u32 %v643, 4294901760
        %v1854 = vsub.f32 %v643, %v1853
        %1855 = vmatprep.subr.mxu0 %v1854
        %v1856 = vand.u32 %v642, 4294901760
        %v1857 = vsub.f32 %v642, %v1856
        %1858 = vmatpush1.msra.mxu0 %v1857
        %v1859 = vand.u32 %v637, 4294901760
        %v1860 = vsub.f32 %v637, %v1859
        %1861 = vmatprep.subr.mxu0 %v1860
        %v1862 = vand.u32 %v636, 4294901760
        %v1863 = vsub.f32 %v636, %v1862
        %1864 = vmatpush1.msra.mxu0 %v1863
        %v1865 = vand.u32 %v631, 4294901760
        %v1866 = vsub.f32 %v631, %v1865
        %1867 = vmatprep.subr.mxu0 %v1866
        %v1868 = vand.u32 %v630, 4294901760
        %v1869 = vsub.f32 %v630, %v1868
        %1870 = vmatpush1.msra.mxu0 %v1869
        %v1871 = vand.u32 %v625, 4294901760
        %v1872 = vsub.f32 %v625, %v1871
        %1873 = vmatprep.subr.mxu0 %v1872
        %v1874 = vand.u32 %v624, 4294901760
        %v1875 = vsub.f32 %v624, %v1874
        %1876 = vmatpush1.msra.mxu0 %v1875
        %v1877 = vand.u32 %v619, 4294901760
        %v1878 = vsub.f32 %v619, %v1877
        %1879 = vmatprep.subr.mxu0 %v1878
        %v1880 = vand.u32 %v618, 4294901760
        %v1881 = vsub.f32 %v618, %v1880
        %1882 = vmatpush1.msra.mxu0 %v1881
        %v1883 = vand.u32 %v613, 4294901760
        %v1884 = vsub.f32 %v613, %v1883
        %1885 = vmatprep.subr.mxu0 %v1884
        %v1886 = vand.u32 %v612, 4294901760
        %v1887 = vsub.f32 %v612, %v1886
        %1888 = vmatpush1.msra.mxu0 %v1887
        %v1889 = vand.u32 %v607, 4294901760
        %v1890 = vsub.f32 %v607, %v1889
        %1891 = vmatprep.subr.mxu0 %v1890
        %v1892 = vand.u32 %v606, 4294901760
        %v1893 = vsub.f32 %v606, %v1892
        %1894 = vmatpush1.msra.mxu0 %v1893
        %v1895 = vand.u32 %v601, 4294901760
        %v1896 = vsub.f32 %v601, %v1895
        %1897 = vmatprep.subr.mxu0 %v1896
        %v1898 = vand.u32 %v600, 4294901760
        %v1899 = vsub.f32 %v600, %v1898
        %1900 = vmatpush1.msra.mxu0 %v1899
        %v1901 = vand.u32 %v595, 4294901760
        %v1902 = vsub.f32 %v595, %v1901
        %1903 = vmatprep.subr.mxu0 %v1902
        %v1904 = vand.u32 %v594, 4294901760
        %v1905 = vsub.f32 %v594, %v1904
        %1906 = vmatpush1.msra.mxu0 %v1905
        %v1907 = vand.u32 %v589, 4294901760
        %v1908 = vsub.f32 %v589, %v1907
        %1909 = vmatprep.subr.mxu0 %v1908
        %v1910 = vand.u32 %v588, 4294901760
        %v1911 = vsub.f32 %v588, %v1910
        %1912 = vmatpush1.msra.mxu0 %v1911
        %v1913 = vand.u32 %v583, 4294901760
        %v1914 = vsub.f32 %v583, %v1913
        %1915 = vmatprep.subr.mxu0 %v1914
        %v1916 = vand.u32 %v582, 4294901760
        %v1917 = vsub.f32 %v582, %v1916
        %1918 = vmatpush1.msra.mxu0 %v1917
        %v1919 = vand.u32 %v577, 4294901760
        %v1920 = vsub.f32 %v577, %v1919
        %1921 = vmatprep.subr.mxu0 %v1920
        %v1922 = vand.u32 %v576, 4294901760
        %v1923 = vsub.f32 %v576, %v1922
        %1924 = vmatpush1.msra.mxu0 %v1923
        %v1925 = vand.u32 %v571, 4294901760
        %v1926 = vsub.f32 %v571, %v1925
        %1927 = vmatprep.subr.mxu0 %v1926
        %v1928 = vand.u32 %v570, 4294901760
        %v1929 = vsub.f32 %v570, %v1928
        %1930 = vmatpush1.msra.mxu0 %v1929
        %v1931 = vand.u32 %v565, 4294901760
        %v1932 = vsub.f32 %v565, %v1931
        %1933 = vmatprep.subr.mxu0 %v1932
        %v1934 = vand.u32 %v564, 4294901760
        %v1935 = vsub.f32 %v564, %v1934
        %1936 = vmatpush1.msra.mxu0 %v1935
        %v1937 = vand.u32 %v559, 4294901760
        %v1938 = vsub.f32 %v559, %v1937
        %1939 = vmatprep.subr.mxu0 %v1938
        %v1940 = vand.u32 %v558, 4294901760
        %v1941 = vsub.f32 %v558, %v1940
        %1942 = vmatpush1.msra.mxu0 %v1941
        %1943 = vmatprep.subr.mxu0 0.0
        %1944 = vmatpush2.msra.mxu0 0.0
        %1945 = vmatprep.subr.mxu0 0.0
        %1946 = vmatpush2.msra.mxu0 0.0
        %1947 = vmatprep.subr.mxu0 0.0
        %1948 = vmatpush2.msra.mxu0 0.0
        %1949 = vmatprep.subr.mxu0 0.0
        %1950 = vmatpush2.msra.mxu0 0.0
        %1951 = vmatprep.subr.mxu0 0.0
        %1952 = vmatpush2.msra.mxu0 0.0
        %1953 = vmatprep.subr.mxu0 0.0
        %1954 = vmatpush2.msra.mxu0 0.0
        %1955 = vmatprep.subr.mxu0 0.0
        %1956 = vmatpush2.msra.mxu0 0.0
        %1957 = vmatprep.subr.mxu0 0.0
        %1958 = vmatpush2.msra.mxu0 0.0
        %1959 = vmatprep.subr.mxu0 0.0
        %1960 = vmatpush2.msra.mxu0 0.0
        %1961 = vmatprep.subr.mxu0 0.0
        %1962 = vmatpush2.msra.mxu0 0.0
        %1963 = vmatprep.subr.mxu0 0.0
        %1964 = vmatpush2.msra.mxu0 0.0
        %1965 = vmatprep.subr.mxu0 0.0
        %1966 = vmatpush2.msra.mxu0 0.0
        %1967 = vmatprep.subr.mxu0 0.0
        %1968 = vmatpush2.msra.mxu0 0.0
        %1969 = vmatprep.subr.mxu0 0.0
        %1970 = vmatpush2.msra.mxu0 0.0
        %1971 = vmatprep.subr.mxu0 0.0
        %1972 = vmatpush2.msra.mxu0 0.0
        %1973 = vmatprep.subr.mxu0 0.0
        %1974 = vmatpush2.msra.mxu0 0.0
        %1975 = vmatprep.mubr.f32.mxu0 0.0
        %v1976 = vand.u32 %v555, 4294901760
        %v1977 = vsub.f32 %v555, %v1976
        %1978 = vmatmul.mubr.f32.gmra.mxu0 %v1977
        %v1979 = vpop.f32.mrf.mxu0
        %v1980 = vadd.f32 %v1843, %v1979
        %v1981 = vpop.f32.mrf.mxu0
        %v1982 = vadd.f32 %v1845, %v1981
        %1983 = vdwg.mxu0
        %v1984 = vand.u32 %v649, 4294901760
        %1985 = vmatprep.subr.mxu0 %v1984
        %v1986 = vand.u32 %v648, 4294901760
        %1987 = vmatpush1.msra.mxu0 %v1986
        %v1988 = vand.u32 %v643, 4294901760
        %1989 = vmatprep.subr.mxu0 %v1988
        %v1990 = vand.u32 %v642, 4294901760
        %1991 = vmatpush1.msra.mxu0 %v1990
        %v1992 = vand.u32 %v637, 4294901760
        %1993 = vmatprep.subr.mxu0 %v1992
        %v1994 = vand.u32 %v636, 4294901760
        %1995 = vmatpush1.msra.mxu0 %v1994
        %v1996 = vand.u32 %v631, 4294901760
        %1997 = vmatprep.subr.mxu0 %v1996
        %v1998 = vand.u32 %v630, 4294901760
        %1999 = vmatpush1.msra.mxu0 %v1998
        %v2000 = vand.u32 %v625, 4294901760
        %2001 = vmatprep.subr.mxu0 %v2000
        %v2002 = vand.u32 %v624, 4294901760
        %2003 = vmatpush1.msra.mxu0 %v2002
        %v2004 = vand.u32 %v619, 4294901760
        %2005 = vmatprep.subr.mxu0 %v2004
        %v2006 = vand.u32 %v618, 4294901760
        %2007 = vmatpush1.msra.mxu0 %v2006
        %v2008 = vand.u32 %v613, 4294901760
        %2009 = vmatprep.subr.mxu0 %v2008
        %v2010 = vand.u32 %v612, 4294901760
        %2011 = vmatpush1.msra.mxu0 %v2010
        %v2012 = vand.u32 %v607, 4294901760
        %2013 = vmatprep.subr.mxu0 %v2012
        %v2014 = vand.u32 %v606, 4294901760
        %2015 = vmatpush1.msra.mxu0 %v2014
        %v2016 = vand.u32 %v601, 4294901760
        %2017 = vmatprep.subr.mxu0 %v2016
        %v2018 = vand.u32 %v600, 4294901760
        %2019 = vmatpush1.msra.mxu0 %v2018
        %v2020 = vand.u32 %v595, 4294901760
        %2021 = vmatprep.subr.mxu0 %v2020
        %v2022 = vand.u32 %v594, 4294901760
        %2023 = vmatpush1.msra.mxu0 %v2022
        %v2024 = vand.u32 %v589, 4294901760
        %2025 = vmatprep.subr.mxu0 %v2024
        %v2026 = vand.u32 %v588, 4294901760
        %2027 = vmatpush1.msra.mxu0 %v2026
        %v2028 = vand.u32 %v583, 4294901760
        %2029 = vmatprep.subr.mxu0 %v2028
        %v2030 = vand.u32 %v582, 4294901760
        %2031 = vmatpush1.msra.mxu0 %v2030
        %v2032 = vand.u32 %v577, 4294901760
        %2033 = vmatprep.subr.mxu0 %v2032
        %v2034 = vand.u32 %v576, 4294901760
        %2035 = vmatpush1.msra.mxu0 %v2034
        %v2036 = vand.u32 %v571, 4294901760
        %2037 = vmatprep.subr.mxu0 %v2036
        %v2038 = vand.u32 %v570, 4294901760
        %2039 = vmatpush1.msra.mxu0 %v2038
        %v2040 = vand.u32 %v565, 4294901760
        %2041 = vmatprep.subr.mxu0 %v2040
        %v2042 = vand.u32 %v564, 4294901760
        %2043 = vmatpush1.msra.mxu0 %v2042
        %v2044 = vand.u32 %v559, 4294901760
        %2045 = vmatprep.subr.mxu0 %v2044
        %v2046 = vand.u32 %v558, 4294901760
        %2047 = vmatpush1.msra.mxu0 %v2046
        %2048 = vmatprep.subr.mxu0 0.0
        %2049 = vmatpush2.msra.mxu0 0.0
        %2050 = vmatprep.subr.mxu0 0.0
        %2051 = vmatpush2.msra.mxu0 0.0
        %2052 = vmatprep.subr.mxu0 0.0
        %2053 = vmatpush2.msra.mxu0 0.0
        %2054 = vmatprep.subr.mxu0 0.0
        %2055 = vmatpush2.msra.mxu0 0.0
        %2056 = vmatprep.subr.mxu0 0.0
        %2057 = vmatpush2.msra.mxu0 0.0
        %2058 = vmatprep.subr.mxu0 0.0
        %2059 = vmatpush2.msra.mxu0 0.0
        %2060 = vmatprep.subr.mxu0 0.0
        %2061 = vmatpush2.msra.mxu0 0.0
        %2062 = vmatprep.subr.mxu0 0.0
        %2063 = vmatpush2.msra.mxu0 0.0
        %2064 = vmatprep.subr.mxu0 0.0
        %2065 = vmatpush2.msra.mxu0 0.0
        %2066 = vmatprep.subr.mxu0 0.0
        %2067 = vmatpush2.msra.mxu0 0.0
        %2068 = vmatprep.subr.mxu0 0.0
        %2069 = vmatpush2.msra.mxu0 0.0
        %2070 = vmatprep.subr.mxu0 0.0
        %2071 = vmatpush2.msra.mxu0 0.0
        %2072 = vmatprep.subr.mxu0 0.0
        %2073 = vmatpush2.msra.mxu0 0.0
        %2074 = vmatprep.subr.mxu0 0.0
        %2075 = vmatpush2.msra.mxu0 0.0
        %2076 = vmatprep.subr.mxu0 0.0
        %2077 = vmatpush2.msra.mxu0 0.0
        %2078 = vmatprep.subr.mxu0 0.0
        %2079 = vmatpush2.msra.mxu0 0.0
        %2080 = vmatprep.mubr.f32.mxu0 0.0
        %v2081 = vand.u32 %v555, 4294901760
        %v2082 = vsub.f32 %v555, %v2081
        %v2083 = vand.u32 %v2082, 4294901760
        %2084 = vmatmul.mubr.f32.gmra.mxu0 %v2083
        %v2085 = vpop.f32.mrf.mxu0
        %v2086 = vadd.f32 %v1980, %v2085
        %v2087 = vpop.f32.mrf.mxu0
        %v2088 = vadd.f32 %v1982, %v2087
        %2089 = vdwg.mxu0
        %v2090 = vand.u32 %v649, 4294901760
        %v2091 = vsub.f32 %v649, %v2090
        %v2092 = vand.u32 %v2091, 4294901760
        %2093 = vmatprep.subr.mxu0 %v2092
        %v2094 = vand.u32 %v648, 4294901760
        %v2095 = vsub.f32 %v648, %v2094
        %v2096 = vand.u32 %v2095, 4294901760
        %2097 = vmatpush1.msra.mxu0 %v2096
        %v2098 = vand.u32 %v643, 4294901760
        %v2099 = vsub.f32 %v643, %v2098
        %v2100 = vand.u32 %v2099, 4294901760
        %2101 = vmatprep.subr.mxu0 %v2100
        %v2102 = vand.u32 %v642, 4294901760
        %v2103 = vsub.f32 %v642, %v2102
        %v2104 = vand.u32 %v2103, 4294901760
        %2105 = vmatpush1.msra.mxu0 %v2104
        %v2106 = vand.u32 %v637, 4294901760
        %v2107 = vsub.f32 %v637, %v2106
        %v2108 = vand.u32 %v2107, 4294901760
        %2109 = vmatprep.subr.mxu0 %v2108
        %v2110 = vand.u32 %v636, 4294901760
        %v2111 = vsub.f32 %v636, %v2110
        %v2112 = vand.u32 %v2111, 4294901760
        %2113 = vmatpush1.msra.mxu0 %v2112
        %v2114 = vand.u32 %v631, 4294901760
        %v2115 = vsub.f32 %v631, %v2114
        %v2116 = vand.u32 %v2115, 4294901760
        %2117 = vmatprep.subr.mxu0 %v2116
        %v2118 = vand.u32 %v630, 4294901760
        %v2119 = vsub.f32 %v630, %v2118
        %v2120 = vand.u32 %v2119, 4294901760
        %2121 = vmatpush1.msra.mxu0 %v2120
        %v2122 = vand.u32 %v625, 4294901760
        %v2123 = vsub.f32 %v625, %v2122
        %v2124 = vand.u32 %v2123, 4294901760
        %2125 = vmatprep.subr.mxu0 %v2124
        %v2126 = vand.u32 %v624, 4294901760
        %v2127 = vsub.f32 %v624, %v2126
        %v2128 = vand.u32 %v2127, 4294901760
        %2129 = vmatpush1.msra.mxu0 %v2128
        %v2130 = vand.u32 %v619, 4294901760
        %v2131 = vsub.f32 %v619, %v2130
        %v2132 = vand.u32 %v2131, 4294901760
        %2133 = vmatprep.subr.mxu0 %v2132
        %v2134 = vand.u32 %v618, 4294901760
        %v2135 = vsub.f32 %v618, %v2134
        %v2136 = vand.u32 %v2135, 4294901760
        %2137 = vmatpush1.msra.mxu0 %v2136
        %v2138 = vand.u32 %v613, 4294901760
        %v2139 = vsub.f32 %v613, %v2138
        %v2140 = vand.u32 %v2139, 4294901760
        %2141 = vmatprep.subr.mxu0 %v2140
        %v2142 = vand.u32 %v612, 4294901760
        %v2143 = vsub.f32 %v612, %v2142
        %v2144 = vand.u32 %v2143, 4294901760
        %2145 = vmatpush1.msra.mxu0 %v2144
        %v2146 = vand.u32 %v607, 4294901760
        %v2147 = vsub.f32 %v607, %v2146
        %v2148 = vand.u32 %v2147, 4294901760
        %2149 = vmatprep.subr.mxu0 %v2148
        %v2150 = vand.u32 %v606, 4294901760
        %v2151 = vsub.f32 %v606, %v2150
        %v2152 = vand.u32 %v2151, 4294901760
        %2153 = vmatpush1.msra.mxu0 %v2152
        %v2154 = vand.u32 %v601, 4294901760
        %v2155 = vsub.f32 %v601, %v2154
        %v2156 = vand.u32 %v2155, 4294901760
        %2157 = vmatprep.subr.mxu0 %v2156
        %v2158 = vand.u32 %v600, 4294901760
        %v2159 = vsub.f32 %v600, %v2158
        %v2160 = vand.u32 %v2159, 4294901760
        %2161 = vmatpush1.msra.mxu0 %v2160
        %v2162 = vand.u32 %v595, 4294901760
        %v2163 = vsub.f32 %v595, %v2162
        %v2164 = vand.u32 %v2163, 4294901760
        %2165 = vmatprep.subr.mxu0 %v2164
        %v2166 = vand.u32 %v594, 4294901760
        %v2167 = vsub.f32 %v594, %v2166
        %v2168 = vand.u32 %v2167, 4294901760
        %2169 = vmatpush1.msra.mxu0 %v2168
        %v2170 = vand.u32 %v589, 4294901760
        %v2171 = vsub.f32 %v589, %v2170
        %v2172 = vand.u32 %v2171, 4294901760
        %2173 = vmatprep.subr.mxu0 %v2172
        %v2174 = vand.u32 %v588, 4294901760
        %v2175 = vsub.f32 %v588, %v2174
        %v2176 = vand.u32 %v2175, 4294901760
        %2177 = vmatpush1.msra.mxu0 %v2176
        %v2178 = vand.u32 %v583, 4294901760
        %v2179 = vsub.f32 %v583, %v2178
        %v2180 = vand.u32 %v2179, 4294901760
        %2181 = vmatprep.subr.mxu0 %v2180
        %v2182 = vand.u32 %v582, 4294901760
        %v2183 = vsub.f32 %v582, %v2182
        %v2184 = vand.u32 %v2183, 4294901760
        %2185 = vmatpush1.msra.mxu0 %v2184
        %v2186 = vand.u32 %v577, 4294901760
        %v2187 = vsub.f32 %v577, %v2186
        %v2188 = vand.u32 %v2187, 4294901760
        %2189 = vmatprep.subr.mxu0 %v2188
        %v2190 = vand.u32 %v576, 4294901760
        %v2191 = vsub.f32 %v576, %v2190
        %v2192 = vand.u32 %v2191, 4294901760
        %2193 = vmatpush1.msra.mxu0 %v2192
        %v2194 = vand.u32 %v571, 4294901760
        %v2195 = vsub.f32 %v571, %v2194
        %v2196 = vand.u32 %v2195, 4294901760
        %2197 = vmatprep.subr.mxu0 %v2196
        %v2198 = vand.u32 %v570, 4294901760
        %v2199 = vsub.f32 %v570, %v2198
        %v2200 = vand.u32 %v2199, 4294901760
        %2201 = vmatpush1.msra.mxu0 %v2200
        %v2202 = vand.u32 %v565, 4294901760
        %v2203 = vsub.f32 %v565, %v2202
        %v2204 = vand.u32 %v2203, 4294901760
        %2205 = vmatprep.subr.mxu0 %v2204
        %v2206 = vand.u32 %v564, 4294901760
        %v2207 = vsub.f32 %v564, %v2206
        %v2208 = vand.u32 %v2207, 4294901760
        %2209 = vmatpush1.msra.mxu0 %v2208
        %v2210 = vand.u32 %v559, 4294901760
        %v2211 = vsub.f32 %v559, %v2210
        %v2212 = vand.u32 %v2211, 4294901760
        %2213 = vmatprep.subr.mxu0 %v2212
        %v2214 = vand.u32 %v558, 4294901760
        %v2215 = vsub.f32 %v558, %v2214
        %v2216 = vand.u32 %v2215, 4294901760
        %2217 = vmatpush1.msra.mxu0 %v2216
        %2218 = vmatprep.subr.mxu0 0.0
        %2219 = vmatpush2.msra.mxu0 0.0
        %2220 = vmatprep.subr.mxu0 0.0
        %2221 = vmatpush2.msra.mxu0 0.0
        %2222 = vmatprep.subr.mxu0 0.0
        %2223 = vmatpush2.msra.mxu0 0.0
        %2224 = vmatprep.subr.mxu0 0.0
        %2225 = vmatpush2.msra.mxu0 0.0
        %2226 = vmatprep.subr.mxu0 0.0
        %2227 = vmatpush2.msra.mxu0 0.0
        %2228 = vmatprep.subr.mxu0 0.0
        %2229 = vmatpush2.msra.mxu0 0.0
        %2230 = vmatprep.subr.mxu0 0.0
        %2231 = vmatpush2.msra.mxu0 0.0
        %2232 = vmatprep.subr.mxu0 0.0
        %2233 = vmatpush2.msra.mxu0 0.0
        %2234 = vmatprep.subr.mxu0 0.0
        %2235 = vmatpush2.msra.mxu0 0.0
        %2236 = vmatprep.subr.mxu0 0.0
        %2237 = vmatpush2.msra.mxu0 0.0
        %2238 = vmatprep.subr.mxu0 0.0
        %2239 = vmatpush2.msra.mxu0 0.0
        %2240 = vmatprep.subr.mxu0 0.0
        %2241 = vmatpush2.msra.mxu0 0.0
        %2242 = vmatprep.subr.mxu0 0.0
        %2243 = vmatpush2.msra.mxu0 0.0
        %2244 = vmatprep.subr.mxu0 0.0
        %2245 = vmatpush2.msra.mxu0 0.0
        %2246 = vmatprep.subr.mxu0 0.0
        %2247 = vmatpush2.msra.mxu0 0.0
        %2248 = vmatprep.subr.mxu0 0.0
        %2249 = vmatpush2.msra.mxu0 0.0
        %2250 = vmatprep.mubr.f32.mxu0 0.0
        %v2251 = vand.u32 %v555, 4294901760
        %2252 = vmatmul.mubr.f32.gmra.mxu0 %v2251
        %v2253 = vpop.f32.mrf.mxu0
        %v2254 = vadd.f32 %v2086, %v2253
        %v2255 = vpop.f32.mrf.mxu0
        %v2256 = vadd.f32 %v2088, %v2255
        %2257 = vdwg.mxu0
        %v2258 = vand.u32 %v649, 4294901760
        %2259 = vmatprep.subr.mxu0 %v2258
        %v2260 = vand.u32 %v648, 4294901760
        %2261 = vmatpush1.msra.mxu0 %v2260
        %v2262 = vand.u32 %v643, 4294901760
        %2263 = vmatprep.subr.mxu0 %v2262
        %v2264 = vand.u32 %v642, 4294901760
        %2265 = vmatpush1.msra.mxu0 %v2264
        %v2266 = vand.u32 %v637, 4294901760
        %2267 = vmatprep.subr.mxu0 %v2266
        %v2268 = vand.u32 %v636, 4294901760
        %2269 = vmatpush1.msra.mxu0 %v2268
        %v2270 = vand.u32 %v631, 4294901760
        %2271 = vmatprep.subr.mxu0 %v2270
        %v2272 = vand.u32 %v630, 4294901760
        %2273 = vmatpush1.msra.mxu0 %v2272
        %v2274 = vand.u32 %v625, 4294901760
        %2275 = vmatprep.subr.mxu0 %v2274
        %v2276 = vand.u32 %v624, 4294901760
        %2277 = vmatpush1.msra.mxu0 %v2276
        %v2278 = vand.u32 %v619, 4294901760
        %2279 = vmatprep.subr.mxu0 %v2278
        %v2280 = vand.u32 %v618, 4294901760
        %2281 = vmatpush1.msra.mxu0 %v2280
        %v2282 = vand.u32 %v613, 4294901760
        %2283 = vmatprep.subr.mxu0 %v2282
        %v2284 = vand.u32 %v612, 4294901760
        %2285 = vmatpush1.msra.mxu0 %v2284
        %v2286 = vand.u32 %v607, 4294901760
        %2287 = vmatprep.subr.mxu0 %v2286
        %v2288 = vand.u32 %v606, 4294901760
        %2289 = vmatpush1.msra.mxu0 %v2288
        %v2290 = vand.u32 %v601, 4294901760
        %2291 = vmatprep.subr.mxu0 %v2290
        %v2292 = vand.u32 %v600, 4294901760
        %2293 = vmatpush1.msra.mxu0 %v2292
        %v2294 = vand.u32 %v595, 4294901760
        %2295 = vmatprep.subr.mxu0 %v2294
        %v2296 = vand.u32 %v594, 4294901760
        %2297 = vmatpush1.msra.mxu0 %v2296
        %v2298 = vand.u32 %v589, 4294901760
        %2299 = vmatprep.subr.mxu0 %v2298
        %v2300 = vand.u32 %v588, 4294901760
        %2301 = vmatpush1.msra.mxu0 %v2300
        %v2302 = vand.u32 %v583, 4294901760
        %2303 = vmatprep.subr.mxu0 %v2302
        %v2304 = vand.u32 %v582, 4294901760
        %2305 = vmatpush1.msra.mxu0 %v2304
        %v2306 = vand.u32 %v577, 4294901760
        %2307 = vmatprep.subr.mxu0 %v2306
        %v2308 = vand.u32 %v576, 4294901760
        %2309 = vmatpush1.msra.mxu0 %v2308
        %v2310 = vand.u32 %v571, 4294901760
        %2311 = vmatprep.subr.mxu0 %v2310
        %v2312 = vand.u32 %v570, 4294901760
        %2313 = vmatpush1.msra.mxu0 %v2312
        %v2314 = vand.u32 %v565, 4294901760
        %2315 = vmatprep.subr.mxu0 %v2314
        %v2316 = vand.u32 %v564, 4294901760
        %2317 = vmatpush1.msra.mxu0 %v2316
        %v2318 = vand.u32 %v559, 4294901760
        %2319 = vmatprep.subr.mxu0 %v2318
        %v2320 = vand.u32 %v558, 4294901760
        %2321 = vmatpush1.msra.mxu0 %v2320
        %2322 = vmatprep.subr.mxu0 0.0
        %2323 = vmatpush2.msra.mxu0 0.0
        %2324 = vmatprep.subr.mxu0 0.0
        %2325 = vmatpush2.msra.mxu0 0.0
        %2326 = vmatprep.subr.mxu0 0.0
        %2327 = vmatpush2.msra.mxu0 0.0
        %2328 = vmatprep.subr.mxu0 0.0
        %2329 = vmatpush2.msra.mxu0 0.0
        %2330 = vmatprep.subr.mxu0 0.0
        %2331 = vmatpush2.msra.mxu0 0.0
        %2332 = vmatprep.subr.mxu0 0.0
        %2333 = vmatpush2.msra.mxu0 0.0
        %2334 = vmatprep.subr.mxu0 0.0
        %2335 = vmatpush2.msra.mxu0 0.0
        %2336 = vmatprep.subr.mxu0 0.0
        %2337 = vmatpush2.msra.mxu0 0.0
        %2338 = vmatprep.subr.mxu0 0.0
        %2339 = vmatpush2.msra.mxu0 0.0
        %2340 = vmatprep.subr.mxu0 0.0
        %2341 = vmatpush2.msra.mxu0 0.0
        %2342 = vmatprep.subr.mxu0 0.0
        %2343 = vmatpush2.msra.mxu0 0.0
        %2344 = vmatprep.subr.mxu0 0.0
        %2345 = vmatpush2.msra.mxu0 0.0
        %2346 = vmatprep.subr.mxu0 0.0
        %2347 = vmatpush2.msra.mxu0 0.0
        %2348 = vmatprep.subr.mxu0 0.0
        %2349 = vmatpush2.msra.mxu0 0.0
        %2350 = vmatprep.subr.mxu0 0.0
        %2351 = vmatpush2.msra.mxu0 0.0
        %2352 = vmatprep.subr.mxu0 0.0
        %2353 = vmatpush2.msra.mxu0 0.0
        %2354 = vmatprep.mubr.f32.mxu0 0.0
        %v2355 = vand.u32 %v555, 4294901760
        %2356 = vmatmul.mubr.f32.gmra.mxu0 %v2355
        %v2357 = vpop.f32.mrf.mxu0
        %v2358 = vadd.f32 %v2254, %v2357
        %v2359 = vpop.f32.mrf.mxu0
        %v2360 = vadd.f32 %v2256, %v2359
        %2361 = vdwg.mxu0
        %v2362 = vand.u32 %v651, 4294901760
        %2363 = vmatprep.subr.mxu0 %v2362
        %v2364 = vand.u32 %v650, 4294901760
        %2365 = vmatpush1.msra.mxu0 %v2364
        %v2366 = vand.u32 %v645, 4294901760
        %2367 = vmatprep.subr.mxu0 %v2366
        %v2368 = vand.u32 %v644, 4294901760
        %2369 = vmatpush1.msra.mxu0 %v2368
        %v2370 = vand.u32 %v639, 4294901760
        %2371 = vmatprep.subr.mxu0 %v2370
        %v2372 = vand.u32 %v638, 4294901760
        %2373 = vmatpush1.msra.mxu0 %v2372
        %v2374 = vand.u32 %v633, 4294901760
        %2375 = vmatprep.subr.mxu0 %v2374
        %v2376 = vand.u32 %v632, 4294901760
        %2377 = vmatpush1.msra.mxu0 %v2376
        %v2378 = vand.u32 %v627, 4294901760
        %2379 = vmatprep.subr.mxu0 %v2378
        %v2380 = vand.u32 %v626, 4294901760
        %2381 = vmatpush1.msra.mxu0 %v2380
        %v2382 = vand.u32 %v621, 4294901760
        %2383 = vmatprep.subr.mxu0 %v2382
        %v2384 = vand.u32 %v620, 4294901760
        %2385 = vmatpush1.msra.mxu0 %v2384
        %v2386 = vand.u32 %v615, 4294901760
        %2387 = vmatprep.subr.mxu0 %v2386
        %v2388 = vand.u32 %v614, 4294901760
        %2389 = vmatpush1.msra.mxu0 %v2388
        %v2390 = vand.u32 %v609, 4294901760
        %2391 = vmatprep.subr.mxu0 %v2390
        %v2392 = vand.u32 %v608, 4294901760
        %2393 = vmatpush1.msra.mxu0 %v2392
        %v2394 = vand.u32 %v603, 4294901760
        %2395 = vmatprep.subr.mxu0 %v2394
        %v2396 = vand.u32 %v602, 4294901760
        %2397 = vmatpush1.msra.mxu0 %v2396
        %v2398 = vand.u32 %v597, 4294901760
        %2399 = vmatprep.subr.mxu0 %v2398
        %v2400 = vand.u32 %v596, 4294901760
        %2401 = vmatpush1.msra.mxu0 %v2400
        %v2402 = vand.u32 %v591, 4294901760
        %2403 = vmatprep.subr.mxu0 %v2402
        %v2404 = vand.u32 %v590, 4294901760
        %2405 = vmatpush1.msra.mxu0 %v2404
        %v2406 = vand.u32 %v585, 4294901760
        %2407 = vmatprep.subr.mxu0 %v2406
        %v2408 = vand.u32 %v584, 4294901760
        %2409 = vmatpush1.msra.mxu0 %v2408
        %v2410 = vand.u32 %v579, 4294901760
        %2411 = vmatprep.subr.mxu0 %v2410
        %v2412 = vand.u32 %v578, 4294901760
        %2413 = vmatpush1.msra.mxu0 %v2412
        %v2414 = vand.u32 %v573, 4294901760
        %2415 = vmatprep.subr.mxu0 %v2414
        %v2416 = vand.u32 %v572, 4294901760
        %2417 = vmatpush1.msra.mxu0 %v2416
        %v2418 = vand.u32 %v567, 4294901760
        %2419 = vmatprep.subr.mxu0 %v2418
        %v2420 = vand.u32 %v566, 4294901760
        %2421 = vmatpush1.msra.mxu0 %v2420
        %v2422 = vand.u32 %v561, 4294901760
        %2423 = vmatprep.subr.mxu0 %v2422
        %v2424 = vand.u32 %v560, 4294901760
        %2425 = vmatpush1.msra.mxu0 %v2424
        %2426 = vmatprep.subr.mxu0 0.0
        %2427 = vmatpush2.msra.mxu0 0.0
        %2428 = vmatprep.subr.mxu0 0.0
        %2429 = vmatpush2.msra.mxu0 0.0
        %2430 = vmatprep.subr.mxu0 0.0
        %2431 = vmatpush2.msra.mxu0 0.0
        %2432 = vmatprep.subr.mxu0 0.0
        %2433 = vmatpush2.msra.mxu0 0.0
        %2434 = vmatprep.subr.mxu0 0.0
        %2435 = vmatpush2.msra.mxu0 0.0
        %2436 = vmatprep.subr.mxu0 0.0
        %2437 = vmatpush2.msra.mxu0 0.0
        %2438 = vmatprep.subr.mxu0 0.0
        %2439 = vmatpush2.msra.mxu0 0.0
        %2440 = vmatprep.subr.mxu0 0.0
        %2441 = vmatpush2.msra.mxu0 0.0
        %2442 = vmatprep.subr.mxu0 0.0
        %2443 = vmatpush2.msra.mxu0 0.0
        %2444 = vmatprep.subr.mxu0 0.0
        %2445 = vmatpush2.msra.mxu0 0.0
        %2446 = vmatprep.subr.mxu0 0.0
        %2447 = vmatpush2.msra.mxu0 0.0
        %2448 = vmatprep.subr.mxu0 0.0
        %2449 = vmatpush2.msra.mxu0 0.0
        %2450 = vmatprep.subr.mxu0 0.0
        %2451 = vmatpush2.msra.mxu0 0.0
        %2452 = vmatprep.subr.mxu0 0.0
        %2453 = vmatpush2.msra.mxu0 0.0
        %2454 = vmatprep.subr.mxu0 0.0
        %2455 = vmatpush2.msra.mxu0 0.0
        %2456 = vmatprep.subr.mxu0 0.0
        %2457 = vmatpush2.msra.mxu0 0.0
        %2458 = vmatprep.mubr.f32.mxu0 0.0
        %v2459 = vand.u32 %v555, 4294901760
        %v2460 = vsub.f32 %v555, %v2459
        %v2461 = vand.u32 %v2460, 4294901760
        %v2462 = vsub.f32 %v2460, %v2461
        %v2463 = vand.u32 %v2462, 4294901760
        %2464 = vmatmul.mubr.f32.gmra.mxu0 %v2463
        %v2465 = vpop.f32.mrf.mxu0
        %v2466 = vadd.f32 0.0, %v2465
        %v2467 = vpop.f32.mrf.mxu0
        %v2468 = vadd.f32 0.0, %v2467
        %2469 = vdwg.mxu0
        %v2470 = vand.u32 %v651, 4294901760
        %v2471 = vsub.f32 %v651, %v2470
        %v2472 = vand.u32 %v2471, 4294901760
        %v2473 = vsub.f32 %v2471, %v2472
        %v2474 = vand.u32 %v2473, 4294901760
        %2475 = vmatprep.subr.mxu0 %v2474
        %v2476 = vand.u32 %v650, 4294901760
        %v2477 = vsub.f32 %v650, %v2476
        %v2478 = vand.u32 %v2477, 4294901760
        %v2479 = vsub.f32 %v2477, %v2478
        %v2480 = vand.u32 %v2479, 4294901760
        %2481 = vmatpush1.msra.mxu0 %v2480
        %v2482 = vand.u32 %v645, 4294901760
        %v2483 = vsub.f32 %v645, %v2482
        %v2484 = vand.u32 %v2483, 4294901760
        %v2485 = vsub.f32 %v2483, %v2484
        %v2486 = vand.u32 %v2485, 4294901760
        %2487 = vmatprep.subr.mxu0 %v2486
        %v2488 = vand.u32 %v644, 4294901760
        %v2489 = vsub.f32 %v644, %v2488
        %v2490 = vand.u32 %v2489, 4294901760
        %v2491 = vsub.f32 %v2489, %v2490
        %v2492 = vand.u32 %v2491, 4294901760
        %2493 = vmatpush1.msra.mxu0 %v2492
        %v2494 = vand.u32 %v639, 4294901760
        %v2495 = vsub.f32 %v639, %v2494
        %v2496 = vand.u32 %v2495, 4294901760
        %v2497 = vsub.f32 %v2495, %v2496
        %v2498 = vand.u32 %v2497, 4294901760
        %2499 = vmatprep.subr.mxu0 %v2498
        %v2500 = vand.u32 %v638, 4294901760
        %v2501 = vsub.f32 %v638, %v2500
        %v2502 = vand.u32 %v2501, 4294901760
        %v2503 = vsub.f32 %v2501, %v2502
        %v2504 = vand.u32 %v2503, 4294901760
        %2505 = vmatpush1.msra.mxu0 %v2504
        %v2506 = vand.u32 %v633, 4294901760
        %v2507 = vsub.f32 %v633, %v2506
        %v2508 = vand.u32 %v2507, 4294901760
        %v2509 = vsub.f32 %v2507, %v2508
        %v2510 = vand.u32 %v2509, 4294901760
        %2511 = vmatprep.subr.mxu0 %v2510
        %v2512 = vand.u32 %v632, 4294901760
        %v2513 = vsub.f32 %v632, %v2512
        %v2514 = vand.u32 %v2513, 4294901760
        %v2515 = vsub.f32 %v2513, %v2514
        %v2516 = vand.u32 %v2515, 4294901760
        %2517 = vmatpush1.msra.mxu0 %v2516
        %v2518 = vand.u32 %v627, 4294901760
        %v2519 = vsub.f32 %v627, %v2518
        %v2520 = vand.u32 %v2519, 4294901760
        %v2521 = vsub.f32 %v2519, %v2520
        %v2522 = vand.u32 %v2521, 4294901760
        %2523 = vmatprep.subr.mxu0 %v2522
        %v2524 = vand.u32 %v626, 4294901760
        %v2525 = vsub.f32 %v626, %v2524
        %v2526 = vand.u32 %v2525, 4294901760
        %v2527 = vsub.f32 %v2525, %v2526
        %v2528 = vand.u32 %v2527, 4294901760
        %2529 = vmatpush1.msra.mxu0 %v2528
        %v2530 = vand.u32 %v621, 4294901760
        %v2531 = vsub.f32 %v621, %v2530
        %v2532 = vand.u32 %v2531, 4294901760
        %v2533 = vsub.f32 %v2531, %v2532
        %v2534 = vand.u32 %v2533, 4294901760
        %2535 = vmatprep.subr.mxu0 %v2534
        %v2536 = vand.u32 %v620, 4294901760
        %v2537 = vsub.f32 %v620, %v2536
        %v2538 = vand.u32 %v2537, 4294901760
        %v2539 = vsub.f32 %v2537, %v2538
        %v2540 = vand.u32 %v2539, 4294901760
        %2541 = vmatpush1.msra.mxu0 %v2540
        %v2542 = vand.u32 %v615, 4294901760
        %v2543 = vsub.f32 %v615, %v2542
        %v2544 = vand.u32 %v2543, 4294901760
        %v2545 = vsub.f32 %v2543, %v2544
        %v2546 = vand.u32 %v2545, 4294901760
        %2547 = vmatprep.subr.mxu0 %v2546
        %v2548 = vand.u32 %v614, 4294901760
        %v2549 = vsub.f32 %v614, %v2548
        %v2550 = vand.u32 %v2549, 4294901760
        %v2551 = vsub.f32 %v2549, %v2550
        %v2552 = vand.u32 %v2551, 4294901760
        %2553 = vmatpush1.msra.mxu0 %v2552
        %v2554 = vand.u32 %v609, 4294901760
        %v2555 = vsub.f32 %v609, %v2554
        %v2556 = vand.u32 %v2555, 4294901760
        %v2557 = vsub.f32 %v2555, %v2556
        %v2558 = vand.u32 %v2557, 4294901760
        %2559 = vmatprep.subr.mxu0 %v2558
        %v2560 = vand.u32 %v608, 4294901760
        %v2561 = vsub.f32 %v608, %v2560
        %v2562 = vand.u32 %v2561, 4294901760
        %v2563 = vsub.f32 %v2561, %v2562
        %v2564 = vand.u32 %v2563, 4294901760
        %2565 = vmatpush1.msra.mxu0 %v2564
        %v2566 = vand.u32 %v603, 4294901760
        %v2567 = vsub.f32 %v603, %v2566
        %v2568 = vand.u32 %v2567, 4294901760
        %v2569 = vsub.f32 %v2567, %v2568
        %v2570 = vand.u32 %v2569, 4294901760
        %2571 = vmatprep.subr.mxu0 %v2570
        %v2572 = vand.u32 %v602, 4294901760
        %v2573 = vsub.f32 %v602, %v2572
        %v2574 = vand.u32 %v2573, 4294901760
        %v2575 = vsub.f32 %v2573, %v2574
        %v2576 = vand.u32 %v2575, 4294901760
        %2577 = vmatpush1.msra.mxu0 %v2576
        %v2578 = vand.u32 %v597, 4294901760
        %v2579 = vsub.f32 %v597, %v2578
        %v2580 = vand.u32 %v2579, 4294901760
        %v2581 = vsub.f32 %v2579, %v2580
        %v2582 = vand.u32 %v2581, 4294901760
        %2583 = vmatprep.subr.mxu0 %v2582
        %v2584 = vand.u32 %v596, 4294901760
        %v2585 = vsub.f32 %v596, %v2584
        %v2586 = vand.u32 %v2585, 4294901760
        %v2587 = vsub.f32 %v2585, %v2586
        %v2588 = vand.u32 %v2587, 4294901760
        %2589 = vmatpush1.msra.mxu0 %v2588
        %v2590 = vand.u32 %v591, 4294901760
        %v2591 = vsub.f32 %v591, %v2590
        %v2592 = vand.u32 %v2591, 4294901760
        %v2593 = vsub.f32 %v2591, %v2592
        %v2594 = vand.u32 %v2593, 4294901760
        %2595 = vmatprep.subr.mxu0 %v2594
        %v2596 = vand.u32 %v590, 4294901760
        %v2597 = vsub.f32 %v590, %v2596
        %v2598 = vand.u32 %v2597, 4294901760
        %v2599 = vsub.f32 %v2597, %v2598
        %v2600 = vand.u32 %v2599, 4294901760
        %2601 = vmatpush1.msra.mxu0 %v2600
        %v2602 = vand.u32 %v585, 4294901760
        %v2603 = vsub.f32 %v585, %v2602
        %v2604 = vand.u32 %v2603, 4294901760
        %v2605 = vsub.f32 %v2603, %v2604
        %v2606 = vand.u32 %v2605, 4294901760
        %2607 = vmatprep.subr.mxu0 %v2606
        %v2608 = vand.u32 %v584, 4294901760
        %v2609 = vsub.f32 %v584, %v2608
        %v2610 = vand.u32 %v2609, 4294901760
        %v2611 = vsub.f32 %v2609, %v2610
        %v2612 = vand.u32 %v2611, 4294901760
        %2613 = vmatpush1.msra.mxu0 %v2612
        %v2614 = vand.u32 %v579, 4294901760
        %v2615 = vsub.f32 %v579, %v2614
        %v2616 = vand.u32 %v2615, 4294901760
        %v2617 = vsub.f32 %v2615, %v2616
        %v2618 = vand.u32 %v2617, 4294901760
        %2619 = vmatprep.subr.mxu0 %v2618
        %v2620 = vand.u32 %v578, 4294901760
        %v2621 = vsub.f32 %v578, %v2620
        %v2622 = vand.u32 %v2621, 4294901760
        %v2623 = vsub.f32 %v2621, %v2622
        %v2624 = vand.u32 %v2623, 4294901760
        %2625 = vmatpush1.msra.mxu0 %v2624
        %v2626 = vand.u32 %v573, 4294901760
        %v2627 = vsub.f32 %v573, %v2626
        %v2628 = vand.u32 %v2627, 4294901760
        %v2629 = vsub.f32 %v2627, %v2628
        %v2630 = vand.u32 %v2629, 4294901760
        %2631 = vmatprep.subr.mxu0 %v2630
        %v2632 = vand.u32 %v572, 4294901760
        %v2633 = vsub.f32 %v572, %v2632
        %v2634 = vand.u32 %v2633, 4294901760
        %v2635 = vsub.f32 %v2633, %v2634
        %v2636 = vand.u32 %v2635, 4294901760
        %2637 = vmatpush1.msra.mxu0 %v2636
        %v2638 = vand.u32 %v567, 4294901760
        %v2639 = vsub.f32 %v567, %v2638
        %v2640 = vand.u32 %v2639, 4294901760
        %v2641 = vsub.f32 %v2639, %v2640
        %v2642 = vand.u32 %v2641, 4294901760
        %2643 = vmatprep.subr.mxu0 %v2642
        %v2644 = vand.u32 %v566, 4294901760
        %v2645 = vsub.f32 %v566, %v2644
        %v2646 = vand.u32 %v2645, 4294901760
        %v2647 = vsub.f32 %v2645, %v2646
        %v2648 = vand.u32 %v2647, 4294901760
        %2649 = vmatpush1.msra.mxu0 %v2648
        %v2650 = vand.u32 %v561, 4294901760
        %v2651 = vsub.f32 %v561, %v2650
        %v2652 = vand.u32 %v2651, 4294901760
        %v2653 = vsub.f32 %v2651, %v2652
        %v2654 = vand.u32 %v2653, 4294901760
        %2655 = vmatprep.subr.mxu0 %v2654
        %v2656 = vand.u32 %v560, 4294901760
        %v2657 = vsub.f32 %v560, %v2656
        %v2658 = vand.u32 %v2657, 4294901760
        %v2659 = vsub.f32 %v2657, %v2658
        %v2660 = vand.u32 %v2659, 4294901760
        %2661 = vmatpush1.msra.mxu0 %v2660
        %2662 = vmatprep.subr.mxu0 0.0
        %2663 = vmatpush2.msra.mxu0 0.0
        %2664 = vmatprep.subr.mxu0 0.0
        %2665 = vmatpush2.msra.mxu0 0.0
        %2666 = vmatprep.subr.mxu0 0.0
        %2667 = vmatpush2.msra.mxu0 0.0
        %2668 = vmatprep.subr.mxu0 0.0
        %2669 = vmatpush2.msra.mxu0 0.0
        %2670 = vmatprep.subr.mxu0 0.0
        %2671 = vmatpush2.msra.mxu0 0.0
        %2672 = vmatprep.subr.mxu0 0.0
        %2673 = vmatpush2.msra.mxu0 0.0
        %2674 = vmatprep.subr.mxu0 0.0
        %2675 = vmatpush2.msra.mxu0 0.0
        %2676 = vmatprep.subr.mxu0 0.0
        %2677 = vmatpush2.msra.mxu0 0.0
        %2678 = vmatprep.subr.mxu0 0.0
        %2679 = vmatpush2.msra.mxu0 0.0
        %2680 = vmatprep.subr.mxu0 0.0
        %2681 = vmatpush2.msra.mxu0 0.0
        %2682 = vmatprep.subr.mxu0 0.0
        %2683 = vmatpush2.msra.mxu0 0.0
        %2684 = vmatprep.subr.mxu0 0.0
        %2685 = vmatpush2.msra.mxu0 0.0
        %2686 = vmatprep.subr.mxu0 0.0
        %2687 = vmatpush2.msra.mxu0 0.0
        %2688 = vmatprep.subr.mxu0 0.0
        %2689 = vmatpush2.msra.mxu0 0.0
        %2690 = vmatprep.subr.mxu0 0.0
        %2691 = vmatpush2.msra.mxu0 0.0
        %2692 = vmatprep.subr.mxu0 0.0
        %2693 = vmatpush2.msra.mxu0 0.0
        %2694 = vmatprep.mubr.f32.mxu0 0.0
        %v2695 = vand.u32 %v555, 4294901760
        %2696 = vmatmul.mubr.f32.gmra.mxu0 %v2695
        %v2697 = vpop.f32.mrf.mxu0
        %v2698 = vadd.f32 %v2466, %v2697
        %v2699 = vpop.f32.mrf.mxu0
        %v2700 = vadd.f32 %v2468, %v2699
        %2701 = vdwg.mxu0
        %v2702 = vand.u32 %v651, 4294901760
        %v2703 = vsub.f32 %v651, %v2702
        %2704 = vmatprep.subr.mxu0 %v2703
        %v2705 = vand.u32 %v650, 4294901760
        %v2706 = vsub.f32 %v650, %v2705
        %2707 = vmatpush1.msra.mxu0 %v2706
        %v2708 = vand.u32 %v645, 4294901760
        %v2709 = vsub.f32 %v645, %v2708
        %2710 = vmatprep.subr.mxu0 %v2709
        %v2711 = vand.u32 %v644, 4294901760
        %v2712 = vsub.f32 %v644, %v2711
        %2713 = vmatpush1.msra.mxu0 %v2712
        %v2714 = vand.u32 %v639, 4294901760
        %v2715 = vsub.f32 %v639, %v2714
        %2716 = vmatprep.subr.mxu0 %v2715
        %v2717 = vand.u32 %v638, 4294901760
        %v2718 = vsub.f32 %v638, %v2717
        %2719 = vmatpush1.msra.mxu0 %v2718
        %v2720 = vand.u32 %v633, 4294901760
        %v2721 = vsub.f32 %v633, %v2720
        %2722 = vmatprep.subr.mxu0 %v2721
        %v2723 = vand.u32 %v632, 4294901760
        %v2724 = vsub.f32 %v632, %v2723
        %2725 = vmatpush1.msra.mxu0 %v2724
        %v2726 = vand.u32 %v627, 4294901760
        %v2727 = vsub.f32 %v627, %v2726
        %2728 = vmatprep.subr.mxu0 %v2727
        %v2729 = vand.u32 %v626, 4294901760
        %v2730 = vsub.f32 %v626, %v2729
        %2731 = vmatpush1.msra.mxu0 %v2730
        %v2732 = vand.u32 %v621, 4294901760
        %v2733 = vsub.f32 %v621, %v2732
        %2734 = vmatprep.subr.mxu0 %v2733
        %v2735 = vand.u32 %v620, 4294901760
        %v2736 = vsub.f32 %v620, %v2735
        %2737 = vmatpush1.msra.mxu0 %v2736
        %v2738 = vand.u32 %v615, 4294901760
        %v2739 = vsub.f32 %v615, %v2738
        %2740 = vmatprep.subr.mxu0 %v2739
        %v2741 = vand.u32 %v614, 4294901760
        %v2742 = vsub.f32 %v614, %v2741
        %2743 = vmatpush1.msra.mxu0 %v2742
        %v2744 = vand.u32 %v609, 4294901760
        %v2745 = vsub.f32 %v609, %v2744
        %2746 = vmatprep.subr.mxu0 %v2745
        %v2747 = vand.u32 %v608, 4294901760
        %v2748 = vsub.f32 %v608, %v2747
        %2749 = vmatpush1.msra.mxu0 %v2748
        %v2750 = vand.u32 %v603, 4294901760
        %v2751 = vsub.f32 %v603, %v2750
        %2752 = vmatprep.subr.mxu0 %v2751
        %v2753 = vand.u32 %v602, 4294901760
        %v2754 = vsub.f32 %v602, %v2753
        %2755 = vmatpush1.msra.mxu0 %v2754
        %v2756 = vand.u32 %v597, 4294901760
        %v2757 = vsub.f32 %v597, %v2756
        %2758 = vmatprep.subr.mxu0 %v2757
        %v2759 = vand.u32 %v596, 4294901760
        %v2760 = vsub.f32 %v596, %v2759
        %2761 = vmatpush1.msra.mxu0 %v2760
        %v2762 = vand.u32 %v591, 4294901760
        %v2763 = vsub.f32 %v591, %v2762
        %2764 = vmatprep.subr.mxu0 %v2763
        %v2765 = vand.u32 %v590, 4294901760
        %v2766 = vsub.f32 %v590, %v2765
        %2767 = vmatpush1.msra.mxu0 %v2766
        %v2768 = vand.u32 %v585, 4294901760
        %v2769 = vsub.f32 %v585, %v2768
        %2770 = vmatprep.subr.mxu0 %v2769
        %v2771 = vand.u32 %v584, 4294901760
        %v2772 = vsub.f32 %v584, %v2771
        %2773 = vmatpush1.msra.mxu0 %v2772
        %v2774 = vand.u32 %v579, 4294901760
        %v2775 = vsub.f32 %v579, %v2774
        %2776 = vmatprep.subr.mxu0 %v2775
        %v2777 = vand.u32 %v578, 4294901760
        %v2778 = vsub.f32 %v578, %v2777
        %2779 = vmatpush1.msra.mxu0 %v2778
        %v2780 = vand.u32 %v573, 4294901760
        %v2781 = vsub.f32 %v573, %v2780
        %2782 = vmatprep.subr.mxu0 %v2781
        %v2783 = vand.u32 %v572, 4294901760
        %v2784 = vsub.f32 %v572, %v2783
        %2785 = vmatpush1.msra.mxu0 %v2784
        %v2786 = vand.u32 %v567, 4294901760
        %v2787 = vsub.f32 %v567, %v2786
        %2788 = vmatprep.subr.mxu0 %v2787
        %v2789 = vand.u32 %v566, 4294901760
        %v2790 = vsub.f32 %v566, %v2789
        %2791 = vmatpush1.msra.mxu0 %v2790
        %v2792 = vand.u32 %v561, 4294901760
        %v2793 = vsub.f32 %v561, %v2792
        %2794 = vmatprep.subr.mxu0 %v2793
        %v2795 = vand.u32 %v560, 4294901760
        %v2796 = vsub.f32 %v560, %v2795
        %2797 = vmatpush1.msra.mxu0 %v2796
        %2798 = vmatprep.subr.mxu0 0.0
        %2799 = vmatpush2.msra.mxu0 0.0
        %2800 = vmatprep.subr.mxu0 0.0
        %2801 = vmatpush2.msra.mxu0 0.0
        %2802 = vmatprep.subr.mxu0 0.0
        %2803 = vmatpush2.msra.mxu0 0.0
        %2804 = vmatprep.subr.mxu0 0.0
        %2805 = vmatpush2.msra.mxu0 0.0
        %2806 = vmatprep.subr.mxu0 0.0
        %2807 = vmatpush2.msra.mxu0 0.0
        %2808 = vmatprep.subr.mxu0 0.0
        %2809 = vmatpush2.msra.mxu0 0.0
        %2810 = vmatprep.subr.mxu0 0.0
        %2811 = vmatpush2.msra.mxu0 0.0
        %2812 = vmatprep.subr.mxu0 0.0
        %2813 = vmatpush2.msra.mxu0 0.0
        %2814 = vmatprep.subr.mxu0 0.0
        %2815 = vmatpush2.msra.mxu0 0.0
        %2816 = vmatprep.subr.mxu0 0.0
        %2817 = vmatpush2.msra.mxu0 0.0
        %2818 = vmatprep.subr.mxu0 0.0
        %2819 = vmatpush2.msra.mxu0 0.0
        %2820 = vmatprep.subr.mxu0 0.0
        %2821 = vmatpush2.msra.mxu0 0.0
        %2822 = vmatprep.subr.mxu0 0.0
        %2823 = vmatpush2.msra.mxu0 0.0
        %2824 = vmatprep.subr.mxu0 0.0
        %2825 = vmatpush2.msra.mxu0 0.0
        %2826 = vmatprep.subr.mxu0 0.0
        %2827 = vmatpush2.msra.mxu0 0.0
        %2828 = vmatprep.subr.mxu0 0.0
        %2829 = vmatpush2.msra.mxu0 0.0
        %2830 = vmatprep.mubr.f32.mxu0 0.0
        %v2831 = vand.u32 %v555, 4294901760
        %v2832 = vsub.f32 %v555, %v2831
        %2833 = vmatmul.mubr.f32.gmra.mxu0 %v2832
        %v2834 = vpop.f32.mrf.mxu0
        %v2835 = vadd.f32 %v2698, %v2834
        %v2836 = vpop.f32.mrf.mxu0
        %v2837 = vadd.f32 %v2700, %v2836
        %2838 = vdwg.mxu0
        %v2839 = vand.u32 %v651, 4294901760
        %2840 = vmatprep.subr.mxu0 %v2839
        %v2841 = vand.u32 %v650, 4294901760
        %2842 = vmatpush1.msra.mxu0 %v2841
        %v2843 = vand.u32 %v645, 4294901760
        %2844 = vmatprep.subr.mxu0 %v2843
        %v2845 = vand.u32 %v644, 4294901760
        %2846 = vmatpush1.msra.mxu0 %v2845
        %v2847 = vand.u32 %v639, 4294901760
        %2848 = vmatprep.subr.mxu0 %v2847
        %v2849 = vand.u32 %v638, 4294901760
        %2850 = vmatpush1.msra.mxu0 %v2849
        %v2851 = vand.u32 %v633, 4294901760
        %2852 = vmatprep.subr.mxu0 %v2851
        %v2853 = vand.u32 %v632, 4294901760
        %2854 = vmatpush1.msra.mxu0 %v2853
        %v2855 = vand.u32 %v627, 4294901760
        %2856 = vmatprep.subr.mxu0 %v2855
        %v2857 = vand.u32 %v626, 4294901760
        %2858 = vmatpush1.msra.mxu0 %v2857
        %v2859 = vand.u32 %v621, 4294901760
        %2860 = vmatprep.subr.mxu0 %v2859
        %v2861 = vand.u32 %v620, 4294901760
        %2862 = vmatpush1.msra.mxu0 %v2861
        %v2863 = vand.u32 %v615, 4294901760
        %2864 = vmatprep.subr.mxu0 %v2863
        %v2865 = vand.u32 %v614, 4294901760
        %2866 = vmatpush1.msra.mxu0 %v2865
        %v2867 = vand.u32 %v609, 4294901760
        %2868 = vmatprep.subr.mxu0 %v2867
        %v2869 = vand.u32 %v608, 4294901760
        %2870 = vmatpush1.msra.mxu0 %v2869
        %v2871 = vand.u32 %v603, 4294901760
        %2872 = vmatprep.subr.mxu0 %v2871
        %v2873 = vand.u32 %v602, 4294901760
        %2874 = vmatpush1.msra.mxu0 %v2873
        %v2875 = vand.u32 %v597, 4294901760
        %2876 = vmatprep.subr.mxu0 %v2875
        %v2877 = vand.u32 %v596, 4294901760
        %2878 = vmatpush1.msra.mxu0 %v2877
        %v2879 = vand.u32 %v591, 4294901760
        %2880 = vmatprep.subr.mxu0 %v2879
        %v2881 = vand.u32 %v590, 4294901760
        %2882 = vmatpush1.msra.mxu0 %v2881
        %v2883 = vand.u32 %v585, 4294901760
        %2884 = vmatprep.subr.mxu0 %v2883
        %v2885 = vand.u32 %v584, 4294901760
        %2886 = vmatpush1.msra.mxu0 %v2885
        %v2887 = vand.u32 %v579, 4294901760
        %2888 = vmatprep.subr.mxu0 %v2887
        %v2889 = vand.u32 %v578, 4294901760
        %2890 = vmatpush1.msra.mxu0 %v2889
        %v2891 = vand.u32 %v573, 4294901760
        %2892 = vmatprep.subr.mxu0 %v2891
        %v2893 = vand.u32 %v572, 4294901760
        %2894 = vmatpush1.msra.mxu0 %v2893
        %v2895 = vand.u32 %v567, 4294901760
        %2896 = vmatprep.subr.mxu0 %v2895
        %v2897 = vand.u32 %v566, 4294901760
        %2898 = vmatpush1.msra.mxu0 %v2897
        %v2899 = vand.u32 %v561, 4294901760
        %2900 = vmatprep.subr.mxu0 %v2899
        %v2901 = vand.u32 %v560, 4294901760
        %2902 = vmatpush1.msra.mxu0 %v2901
        %2903 = vmatprep.subr.mxu0 0.0
        %2904 = vmatpush2.msra.mxu0 0.0
        %2905 = vmatprep.subr.mxu0 0.0
        %2906 = vmatpush2.msra.mxu0 0.0
        %2907 = vmatprep.subr.mxu0 0.0
        %2908 = vmatpush2.msra.mxu0 0.0
        %2909 = vmatprep.subr.mxu0 0.0
        %2910 = vmatpush2.msra.mxu0 0.0
        %2911 = vmatprep.subr.mxu0 0.0
        %2912 = vmatpush2.msra.mxu0 0.0
        %2913 = vmatprep.subr.mxu0 0.0
        %2914 = vmatpush2.msra.mxu0 0.0
        %2915 = vmatprep.subr.mxu0 0.0
        %2916 = vmatpush2.msra.mxu0 0.0
        %2917 = vmatprep.subr.mxu0 0.0
        %2918 = vmatpush2.msra.mxu0 0.0
        %2919 = vmatprep.subr.mxu0 0.0
        %2920 = vmatpush2.msra.mxu0 0.0
        %2921 = vmatprep.subr.mxu0 0.0
        %2922 = vmatpush2.msra.mxu0 0.0
        %2923 = vmatprep.subr.mxu0 0.0
        %2924 = vmatpush2.msra.mxu0 0.0
        %2925 = vmatprep.subr.mxu0 0.0
        %2926 = vmatpush2.msra.mxu0 0.0
        %2927 = vmatprep.subr.mxu0 0.0
        %2928 = vmatpush2.msra.mxu0 0.0
        %2929 = vmatprep.subr.mxu0 0.0
        %2930 = vmatpush2.msra.mxu0 0.0
        %2931 = vmatprep.subr.mxu0 0.0
        %2932 = vmatpush2.msra.mxu0 0.0
        %2933 = vmatprep.subr.mxu0 0.0
        %2934 = vmatpush2.msra.mxu0 0.0
        %2935 = vmatprep.mubr.f32.mxu0 0.0
        %v2936 = vand.u32 %v555, 4294901760
        %v2937 = vsub.f32 %v555, %v2936
        %v2938 = vand.u32 %v2937, 4294901760
        %2939 = vmatmul.mubr.f32.gmra.mxu0 %v2938
        %v2940 = vpop.f32.mrf.mxu0
        %v2941 = vadd.f32 %v2835, %v2940
        %v2942 = vpop.f32.mrf.mxu0
        %v2943 = vadd.f32 %v2837, %v2942
        %2944 = vdwg.mxu0
        %v2945 = vand.u32 %v651, 4294901760
        %v2946 = vsub.f32 %v651, %v2945
        %v2947 = vand.u32 %v2946, 4294901760
        %2948 = vmatprep.subr.mxu0 %v2947
        %v2949 = vand.u32 %v650, 4294901760
        %v2950 = vsub.f32 %v650, %v2949
        %v2951 = vand.u32 %v2950, 4294901760
        %2952 = vmatpush1.msra.mxu0 %v2951
        %v2953 = vand.u32 %v645, 4294901760
        %v2954 = vsub.f32 %v645, %v2953
        %v2955 = vand.u32 %v2954, 4294901760
        %2956 = vmatprep.subr.mxu0 %v2955
        %v2957 = vand.u32 %v644, 4294901760
        %v2958 = vsub.f32 %v644, %v2957
        %v2959 = vand.u32 %v2958, 4294901760
        %2960 = vmatpush1.msra.mxu0 %v2959
        %v2961 = vand.u32 %v639, 4294901760
        %v2962 = vsub.f32 %v639, %v2961
        %v2963 = vand.u32 %v2962, 4294901760
        %2964 = vmatprep.subr.mxu0 %v2963
        %v2965 = vand.u32 %v638, 4294901760
        %v2966 = vsub.f32 %v638, %v2965
        %v2967 = vand.u32 %v2966, 4294901760
        %2968 = vmatpush1.msra.mxu0 %v2967
        %v2969 = vand.u32 %v633, 4294901760
        %v2970 = vsub.f32 %v633, %v2969
        %v2971 = vand.u32 %v2970, 4294901760
        %2972 = vmatprep.subr.mxu0 %v2971
        %v2973 = vand.u32 %v632, 4294901760
        %v2974 = vsub.f32 %v632, %v2973
        %v2975 = vand.u32 %v2974, 4294901760
        %2976 = vmatpush1.msra.mxu0 %v2975
        %v2977 = vand.u32 %v627, 4294901760
        %v2978 = vsub.f32 %v627, %v2977
        %v2979 = vand.u32 %v2978, 4294901760
        %2980 = vmatprep.subr.mxu0 %v2979
        %v2981 = vand.u32 %v626, 4294901760
        %v2982 = vsub.f32 %v626, %v2981
        %v2983 = vand.u32 %v2982, 4294901760
        %2984 = vmatpush1.msra.mxu0 %v2983
        %v2985 = vand.u32 %v621, 4294901760
        %v2986 = vsub.f32 %v621, %v2985
        %v2987 = vand.u32 %v2986, 4294901760
        %2988 = vmatprep.subr.mxu0 %v2987
        %v2989 = vand.u32 %v620, 4294901760
        %v2990 = vsub.f32 %v620, %v2989
        %v2991 = vand.u32 %v2990, 4294901760
        %2992 = vmatpush1.msra.mxu0 %v2991
        %v2993 = vand.u32 %v615, 4294901760
        %v2994 = vsub.f32 %v615, %v2993
        %v2995 = vand.u32 %v2994, 4294901760
        %2996 = vmatprep.subr.mxu0 %v2995
        %v2997 = vand.u32 %v614, 4294901760
        %v2998 = vsub.f32 %v614, %v2997
        %v2999 = vand.u32 %v2998, 4294901760
        %3000 = vmatpush1.msra.mxu0 %v2999
        %v3001 = vand.u32 %v609, 4294901760
        %v3002 = vsub.f32 %v609, %v3001
        %v3003 = vand.u32 %v3002, 4294901760
        %3004 = vmatprep.subr.mxu0 %v3003
        %v3005 = vand.u32 %v608, 4294901760
        %v3006 = vsub.f32 %v608, %v3005
        %v3007 = vand.u32 %v3006, 4294901760
        %3008 = vmatpush1.msra.mxu0 %v3007
        %v3009 = vand.u32 %v603, 4294901760
        %v3010 = vsub.f32 %v603, %v3009
        %v3011 = vand.u32 %v3010, 4294901760
        %3012 = vmatprep.subr.mxu0 %v3011
        %v3013 = vand.u32 %v602, 4294901760
        %v3014 = vsub.f32 %v602, %v3013
        %v3015 = vand.u32 %v3014, 4294901760
        %3016 = vmatpush1.msra.mxu0 %v3015
        %v3017 = vand.u32 %v597, 4294901760
        %v3018 = vsub.f32 %v597, %v3017
        %v3019 = vand.u32 %v3018, 4294901760
        %3020 = vmatprep.subr.mxu0 %v3019
        %v3021 = vand.u32 %v596, 4294901760
        %v3022 = vsub.f32 %v596, %v3021
        %v3023 = vand.u32 %v3022, 4294901760
        %3024 = vmatpush1.msra.mxu0 %v3023
        %v3025 = vand.u32 %v591, 4294901760
        %v3026 = vsub.f32 %v591, %v3025
        %v3027 = vand.u32 %v3026, 4294901760
        %3028 = vmatprep.subr.mxu0 %v3027
        %v3029 = vand.u32 %v590, 4294901760
        %v3030 = vsub.f32 %v590, %v3029
        %v3031 = vand.u32 %v3030, 4294901760
        %3032 = vmatpush1.msra.mxu0 %v3031
        %v3033 = vand.u32 %v585, 4294901760
        %v3034 = vsub.f32 %v585, %v3033
        %v3035 = vand.u32 %v3034, 4294901760
        %3036 = vmatprep.subr.mxu0 %v3035
        %v3037 = vand.u32 %v584, 4294901760
        %v3038 = vsub.f32 %v584, %v3037
        %v3039 = vand.u32 %v3038, 4294901760
        %3040 = vmatpush1.msra.mxu0 %v3039
        %v3041 = vand.u32 %v579, 4294901760
        %v3042 = vsub.f32 %v579, %v3041
        %v3043 = vand.u32 %v3042, 4294901760
        %3044 = vmatprep.subr.mxu0 %v3043
        %v3045 = vand.u32 %v578, 4294901760
        %v3046 = vsub.f32 %v578, %v3045
        %v3047 = vand.u32 %v3046, 4294901760
        %3048 = vmatpush1.msra.mxu0 %v3047
        %v3049 = vand.u32 %v573, 4294901760
        %v3050 = vsub.f32 %v573, %v3049
        %v3051 = vand.u32 %v3050, 4294901760
        %3052 = vmatprep.subr.mxu0 %v3051
        %v3053 = vand.u32 %v572, 4294901760
        %v3054 = vsub.f32 %v572, %v3053
        %v3055 = vand.u32 %v3054, 4294901760
        %3056 = vmatpush1.msra.mxu0 %v3055
        %v3057 = vand.u32 %v567, 4294901760
        %v3058 = vsub.f32 %v567, %v3057
        %v3059 = vand.u32 %v3058, 4294901760
        %3060 = vmatprep.subr.mxu0 %v3059
        %v3061 = vand.u32 %v566, 4294901760
        %v3062 = vsub.f32 %v566, %v3061
        %v3063 = vand.u32 %v3062, 4294901760
        %3064 = vmatpush1.msra.mxu0 %v3063
        %v3065 = vand.u32 %v561, 4294901760
        %v3066 = vsub.f32 %v561, %v3065
        %v3067 = vand.u32 %v3066, 4294901760
        %3068 = vmatprep.subr.mxu0 %v3067
        %v3069 = vand.u32 %v560, 4294901760
        %v3070 = vsub.f32 %v560, %v3069
        %v3071 = vand.u32 %v3070, 4294901760
        %3072 = vmatpush1.msra.mxu0 %v3071
        %3073 = vmatprep.subr.mxu0 0.0
        %3074 = vmatpush2.msra.mxu0 0.0
        %3075 = vmatprep.subr.mxu0 0.0
        %3076 = vmatpush2.msra.mxu0 0.0
        %3077 = vmatprep.subr.mxu0 0.0
        %3078 = vmatpush2.msra.mxu0 0.0
        %3079 = vmatprep.subr.mxu0 0.0
        %3080 = vmatpush2.msra.mxu0 0.0
        %3081 = vmatprep.subr.mxu0 0.0
        %3082 = vmatpush2.msra.mxu0 0.0
        %3083 = vmatprep.subr.mxu0 0.0
        %3084 = vmatpush2.msra.mxu0 0.0
        %3085 = vmatprep.subr.mxu0 0.0
        %3086 = vmatpush2.msra.mxu0 0.0
        %3087 = vmatprep.subr.mxu0 0.0
        %3088 = vmatpush2.msra.mxu0 0.0
        %3089 = vmatprep.subr.mxu0 0.0
        %3090 = vmatpush2.msra.mxu0 0.0
        %3091 = vmatprep.subr.mxu0 0.0
        %3092 = vmatpush2.msra.mxu0 0.0
        %3093 = vmatprep.subr.mxu0 0.0
        %3094 = vmatpush2.msra.mxu0 0.0
        %3095 = vmatprep.subr.mxu0 0.0
        %3096 = vmatpush2.msra.mxu0 0.0
        %3097 = vmatprep.subr.mxu0 0.0
        %3098 = vmatpush2.msra.mxu0 0.0
        %3099 = vmatprep.subr.mxu0 0.0
        %3100 = vmatpush2.msra.mxu0 0.0
        %3101 = vmatprep.subr.mxu0 0.0
        %3102 = vmatpush2.msra.mxu0 0.0
        %3103 = vmatprep.subr.mxu0 0.0
        %3104 = vmatpush2.msra.mxu0 0.0
        %3105 = vmatprep.mubr.f32.mxu0 0.0
        %v3106 = vand.u32 %v555, 4294901760
        %3107 = vmatmul.mubr.f32.gmra.mxu0 %v3106
        %v3108 = vpop.f32.mrf.mxu0
        %v3109 = vadd.f32 %v2941, %v3108
        %v3110 = vpop.f32.mrf.mxu0
        %v3111 = vadd.f32 %v2943, %v3110
        %3112 = vdwg.mxu0
        %v3113 = vand.u32 %v651, 4294901760
        %3114 = vmatprep.subr.mxu0 %v3113
        %v3115 = vand.u32 %v650, 4294901760
        %3116 = vmatpush1.msra.mxu0 %v3115
        %v3117 = vand.u32 %v645, 4294901760
        %3118 = vmatprep.subr.mxu0 %v3117
        %v3119 = vand.u32 %v644, 4294901760
        %3120 = vmatpush1.msra.mxu0 %v3119
        %v3121 = vand.u32 %v639, 4294901760
        %3122 = vmatprep.subr.mxu0 %v3121
        %v3123 = vand.u32 %v638, 4294901760
        %3124 = vmatpush1.msra.mxu0 %v3123
        %v3125 = vand.u32 %v633, 4294901760
        %3126 = vmatprep.subr.mxu0 %v3125
        %v3127 = vand.u32 %v632, 4294901760
        %3128 = vmatpush1.msra.mxu0 %v3127
        %v3129 = vand.u32 %v627, 4294901760
        %3130 = vmatprep.subr.mxu0 %v3129
        %v3131 = vand.u32 %v626, 4294901760
        %3132 = vmatpush1.msra.mxu0 %v3131
        %v3133 = vand.u32 %v621, 4294901760
        %3134 = vmatprep.subr.mxu0 %v3133
        %v3135 = vand.u32 %v620, 4294901760
        %3136 = vmatpush1.msra.mxu0 %v3135
        %v3137 = vand.u32 %v615, 4294901760
        %3138 = vmatprep.subr.mxu0 %v3137
        %v3139 = vand.u32 %v614, 4294901760
        %3140 = vmatpush1.msra.mxu0 %v3139
        %v3141 = vand.u32 %v609, 4294901760
        %3142 = vmatprep.subr.mxu0 %v3141
        %v3143 = vand.u32 %v608, 4294901760
        %3144 = vmatpush1.msra.mxu0 %v3143
        %v3145 = vand.u32 %v603, 4294901760
        %3146 = vmatprep.subr.mxu0 %v3145
        %v3147 = vand.u32 %v602, 4294901760
        %3148 = vmatpush1.msra.mxu0 %v3147
        %v3149 = vand.u32 %v597, 4294901760
        %3150 = vmatprep.subr.mxu0 %v3149
        %v3151 = vand.u32 %v596, 4294901760
        %3152 = vmatpush1.msra.mxu0 %v3151
        %v3153 = vand.u32 %v591, 4294901760
        %3154 = vmatprep.subr.mxu0 %v3153
        %v3155 = vand.u32 %v590, 4294901760
        %3156 = vmatpush1.msra.mxu0 %v3155
        %v3157 = vand.u32 %v585, 4294901760
        %3158 = vmatprep.subr.mxu0 %v3157
        %v3159 = vand.u32 %v584, 4294901760
        %3160 = vmatpush1.msra.mxu0 %v3159
        %v3161 = vand.u32 %v579, 4294901760
        %3162 = vmatprep.subr.mxu0 %v3161
        %v3163 = vand.u32 %v578, 4294901760
        %3164 = vmatpush1.msra.mxu0 %v3163
        %v3165 = vand.u32 %v573, 4294901760
        %3166 = vmatprep.subr.mxu0 %v3165
        %v3167 = vand.u32 %v572, 4294901760
        %3168 = vmatpush1.msra.mxu0 %v3167
        %v3169 = vand.u32 %v567, 4294901760
        %3170 = vmatprep.subr.mxu0 %v3169
        %v3171 = vand.u32 %v566, 4294901760
        %3172 = vmatpush1.msra.mxu0 %v3171
        %v3173 = vand.u32 %v561, 4294901760
        %3174 = vmatprep.subr.mxu0 %v3173
        %v3175 = vand.u32 %v560, 4294901760
        %3176 = vmatpush1.msra.mxu0 %v3175
        %3177 = vmatprep.subr.mxu0 0.0
        %3178 = vmatpush2.msra.mxu0 0.0
        %3179 = vmatprep.subr.mxu0 0.0
        %3180 = vmatpush2.msra.mxu0 0.0
        %3181 = vmatprep.subr.mxu0 0.0
        %3182 = vmatpush2.msra.mxu0 0.0
        %3183 = vmatprep.subr.mxu0 0.0
        %3184 = vmatpush2.msra.mxu0 0.0
        %3185 = vmatprep.subr.mxu0 0.0
        %3186 = vmatpush2.msra.mxu0 0.0
        %3187 = vmatprep.subr.mxu0 0.0
        %3188 = vmatpush2.msra.mxu0 0.0
        %3189 = vmatprep.subr.mxu0 0.0
        %3190 = vmatpush2.msra.mxu0 0.0
        %3191 = vmatprep.subr.mxu0 0.0
        %3192 = vmatpush2.msra.mxu0 0.0
        %3193 = vmatprep.subr.mxu0 0.0
        %3194 = vmatpush2.msra.mxu0 0.0
        %3195 = vmatprep.subr.mxu0 0.0
        %3196 = vmatpush2.msra.mxu0 0.0
        %3197 = vmatprep.subr.mxu0 0.0
        %3198 = vmatpush2.msra.mxu0 0.0
        %3199 = vmatprep.subr.mxu0 0.0
        %3200 = vmatpush2.msra.mxu0 0.0
        %3201 = vmatprep.subr.mxu0 0.0
        %3202 = vmatpush2.msra.mxu0 0.0
        %3203 = vmatprep.subr.mxu0 0.0
        %3204 = vmatpush2.msra.mxu0 0.0
        %3205 = vmatprep.subr.mxu0 0.0
        %3206 = vmatpush2.msra.mxu0 0.0
        %3207 = vmatprep.subr.mxu0 0.0
        %3208 = vmatpush2.msra.mxu0 0.0
        %3209 = vmatprep.mubr.f32.mxu0 0.0
        %v3210 = vand.u32 %v555, 4294901760
        %3211 = vmatmul.mubr.f32.gmra.mxu0 %v3210
        %v3212 = vpop.f32.mrf.mxu0
        %v3213 = vadd.f32 %v3109, %v3212
        %v3214 = vpop.f32.mrf.mxu0
        %v3215 = vadd.f32 %v3111, %v3214
        %3216 = vdwg.mxu0
        %v3217 = vadd.f32 %v549, %v1503
        %v3218 = vadd.f32 %v550, %v1505
        %v3219 = vadd.f32 %v551, %v2358
        %v3220 = vadd.f32 %v552, %v2360
        %v3221 = vadd.f32 %v553, %v3213
        %v3222 = vadd.f32 %v554, %v3215
        %3223 = vst [vmem:[#allocation2] sm:$0xff] %v3217
        %3224 = vst [vmem:[#allocation2 + $0x8] sm:$0xff] %v3218
        %3225 = vst [vmem:[#allocation2 + $0x10] sm:$0xff] %v3219
        %3226 = vst [vmem:[#allocation2 + $0x18] sm:$0xff] %v3220
        %3227 = vst [vmem:[#allocation2 + $0x20] sm:$0xff] %v3221
        %3228 = vst [vmem:[#allocation2 + $0x28] sm:$0xff] %v3222
        %p3229 = scmp.eq.s32.totalorder %s44, 1
        // Predicated region
        $region73: #{tpu_custom_call.1} parent=51 // pred_check
          %p3230 = pneg %p3229
        $region74: #{tpu_custom_call.1} parent=51 // pred_check_branch
          %3232 = sbr.rel (%p3230) target = $region76
        $region75: #{tpu_custom_call.1} parent=51 // pred_region
          %v3233 = vld [vmem:[#allocation2] sm:$0xff]
          %v3234 = vld [vmem:[#allocation2 + $0x8] sm:$0xff]
          %v3235 = vld [vmem:[#allocation2 + $0x10] sm:$0xff]
          %v3236 = vld [vmem:[#allocation2 + $0x18] sm:$0xff]
          %v3237 = vld [vmem:[#allocation2 + $0x20] sm:$0xff]
          %v3238 = vld [vmem:[#allocation2 + $0x28] sm:$0xff]
          %v3239 = vld [vmem:[%s2] sm:$0x3]
          %v3240 = vld [vmem:[%s3] sm:$0x3]
          %v3241 = vadd.f32 %v3233, %v3234
          %3242 = vadd.xlane.f32.xlu0 %v3241
          %v3243 = vpop.xlane.xlu0 %3242
          %v3244 = vrcp.pop 256.0
          %v3245 = vmul.f32 %v3243, %v3244
          %v3246 = vsub.f32 %v3233, %v3245
          %v3247 = vsub.f32 %v3234, %v3245
          %v3248 = vmul.f32 %v3246, %v3246
          %v3249 = vmul.f32 %v3247, %v3247
          %v3250 = vadd.f32 %v3248, %v3249
          %3251 = vadd.xlane.f32.xlu0 %v3250
          %v3252 = vpop.xlane.xlu0 %3251
          %v3253 = vmul.f32 %v3252, %v3244
          %v3254 = vadd.f32 %v3253, 1e-05
          %v3255 = vrsqrt.pop %v3254
          %v3256 = vmul.f32 %v3246, %v3255
          %v3257 = vmul.f32 %v3247, %v3255
          %v3259 = vlaneseq
          %v3260 = vshrl.u32 %v3259, 7
          %v3261 = vsub.s32 0, %v3260
          %v3262 = vrot.slane %v3239, %v3261
          %v3263 = vlaneseq
          %v3264 = vshrl.u32 %v3263, 7
          %v3265 = vsub.s32 1, %v3264
          %v3266 = vrot.slane %v3239, %v3265
          %v3269 = vmul.f32 %v3256, %v3262
          %v3270 = vmul.f32 %v3257, %v3266
          %v3272 = vlaneseq
          %v3273 = vshrl.u32 %v3272, 7
          %v3274 = vsub.s32 0, %v3273
          %v3275 = vrot.slane %v3240, %v3274
          %v3276 = vlaneseq
          %v3277 = vshrl.u32 %v3276, 7
          %v3278 = vsub.s32 1, %v3277
          %v3279 = vrot.slane %v3240, %v3278
          %v3282 = vadd.f32 %v3269, %v3275
          %v3283 = vadd.f32 %v3270, %v3279
          %v3284 = vld [vmem:[%s4] sm:$0x3]
          %v3285 = vld [vmem:[%s5] sm:$0x3]
          %v3286 = vadd.f32 %v3235, %v3236
          %3287 = vadd.xlane.f32.xlu0 %v3286
          %v3288 = vpop.xlane.xlu0 %3287
          %v3289 = vmul.f32 %v3288, %v3244
          %v3290 = vsub.f32 %v3235, %v3289
          %v3291 = vsub.f32 %v3236, %v3289
          %v3292 = vmul.f32 %v3290, %v3290
          %v3293 = vmul.f32 %v3291, %v3291
          %v3294 = vadd.f32 %v3292, %v3293
          %3295 = vadd.xlane.f32.xlu0 %v3294
          %v3296 = vpop.xlane.xlu0 %3295
          %v3297 = vmul.f32 %v3296, %v3244
          %v3298 = vadd.f32 %v3297, 1e-05
          %v3299 = vrsqrt.pop %v3298
          %v3300 = vmul.f32 %v3290, %v3299
          %v3301 = vmul.f32 %v3291, %v3299
          %v3303 = vlaneseq
          %v3304 = vshrl.u32 %v3303, 7
          %v3305 = vsub.s32 0, %v3304
          %v3306 = vrot.slane %v3284, %v3305
          %v3307 = vlaneseq
          %v3308 = vshrl.u32 %v3307, 7
          %v3309 = vsub.s32 1, %v3308
          %v3310 = vrot.slane %v3284, %v3309
          %v3313 = vmul.f32 %v3300, %v3306
          %v3314 = vmul.f32 %v3301, %v3310
          %v3316 = vlaneseq
          %v3317 = vshrl.u32 %v3316, 7
          %v3318 = vsub.s32 0, %v3317
          %v3319 = vrot.slane %v3285, %v3318
          %v3320 = vlaneseq
          %v3321 = vshrl.u32 %v3320, 7
          %v3322 = vsub.s32 1, %v3321
          %v3323 = vrot.slane %v3285, %v3322
          %v3326 = vadd.f32 %v3313, %v3319
          %v3327 = vadd.f32 %v3314, %v3323
          %v3328 = vld [vmem:[%s467] sm:$0xff]
          %v3329 = vld [vmem:[%s476] sm:$0xff]
          %v3330 = vmul.f32 %v3282, %v3328
          %3332 = vrot.lane.b32.xlu0 %v3329, 32
          %v3333 = vpop.permute.xlu0 %3332
          %v3335 = vmul.f32 %v3282, %v3333
          %3337 = vrot.lane.b32.xlu0 %v3335, 96
          %v3338 = vpop.permute.xlu0 %3337
          %v3340 = vsub.f32 %v3330, %v3338
          %v3341 = vmul.f32 %v3282, %v3329
          %3343 = vrot.lane.b32.xlu0 %v3328, 32
          %v3344 = vpop.permute.xlu0 %3343
          %v3346 = vmul.f32 %v3282, %v3344
          %3348 = vrot.lane.b32.xlu0 %v3346, 96
          %v3349 = vpop.permute.xlu0 %3348
          %v3351 = vadd.f32 %v3341, %v3349
          %3353 = vrot.lane.b32.xlu0 %v3351, 32
          %v3354 = vpop.permute.xlu0 %3353
          %vm3356 = vcmask 261120
          %v3357 = vsel %vm3356, %v3340, %v3354
          %vm3358 = vcmask 523264
          %3359 = vst.msk [vmem:[%s523] sm:$0xff] %vm3358, %v3357
          %3360 = vrot.lane.b32.xlu0 %v3328, 64
          %v3361 = vpop.permute.xlu0 %3360
          %v3363 = vmul.f32 %v3282, %v3361
          %3364 = vrot.lane.b32.xlu0 %v3329, 96
          %v3365 = vpop.permute.xlu0 %3364
          %v3367 = vmul.f32 %v3282, %v3365
          %3369 = vrot.lane.b32.xlu0 %v3367, 96
          %v3370 = vpop.permute.xlu0 %3369
          %v3372 = vsub.f32 %v3363, %v3370
          %3373 = vrot.lane.b32.xlu0 %v3329, 64
          %v3374 = vpop.permute.xlu0 %3373
          %v3376 = vmul.f32 %v3282, %v3374
          %3377 = vrot.lane.b32.xlu0 %v3328, 96
          %v3378 = vpop.permute.xlu0 %3377
          %v3380 = vmul.f32 %v3282, %v3378
          %3382 = vrot.lane.b32.xlu0 %v3380, 96
          %v3383 = vpop.permute.xlu0 %3382
          %v3385 = vadd.f32 %v3376, %v3383
          %3387 = vrot.lane.b32.xlu0 %v3372, 64
          %v3388 = vpop.permute.xlu0 %3387
          %3391 = vrot.lane.b32.xlu0 %v3385, 96
          %v3392 = vpop.permute.xlu0 %3391
          %v3394 = vsel %vm3356, %v3388, %v3392
          %s3395 = scalar_lea.vmem %s523, 8 [#allocation11]
          %3396 = vst.msk [vmem:[%s3395] sm:$0xff] %vm3358, %v3394
          %v3397 = vmul.f32 %v3283, %v3328
          %v3398 = vmul.f32 %v3283, %v3333
          %3400 = vrot.lane.b32.xlu0 %v3398, 96
          %v3401 = vpop.permute.xlu0 %3400
          %v3403 = vsub.f32 %v3397, %v3401
          %v3404 = vmul.f32 %v3283, %v3329
          %v3405 = vmul.f32 %v3283, %v3344
          %3407 = vrot.lane.b32.xlu0 %v3405, 96
          %v3408 = vpop.permute.xlu0 %3407
          %v3410 = vadd.f32 %v3404, %v3408
          %3412 = vrot.lane.b32.xlu0 %v3410, 32
          %v3413 = vpop.permute.xlu0 %3412
          %v3415 = vsel %vm3356, %v3403, %v3413
          %s3416 = scalar_lea.vmem %s523, 16 [#allocation11]
          %3417 = vst.msk [vmem:[%s3416] sm:$0xff] %vm3358, %v3415
          %v3418 = vmul.f32 %v3283, %v3361
          %v3419 = vmul.f32 %v3283, %v3365
          %3421 = vrot.lane.b32.xlu0 %v3419, 96
          %v3422 = vpop.permute.xlu0 %3421
          %v3424 = vsub.f32 %v3418, %v3422
          %v3425 = vmul.f32 %v3283, %v3374
          %v3426 = vmul.f32 %v3283, %v3378
          %3428 = vrot.lane.b32.xlu0 %v3426, 96
          %v3429 = vpop.permute.xlu0 %3428
          %v3431 = vadd.f32 %v3425, %v3429
          %3433 = vrot.lane.b32.xlu0 %v3424, 64
          %v3434 = vpop.permute.xlu0 %3433
          %3437 = vrot.lane.b32.xlu0 %v3431, 96
          %v3438 = vpop.permute.xlu0 %3437
          %v3440 = vsel %vm3356, %v3434, %v3438
          %s3441 = scalar_lea.vmem %s523, 24 [#allocation11]
          %3442 = vst.msk [vmem:[%s3441] sm:$0xff] %vm3358, %v3440
          %v3443 = vmul.f32 %v3326, %v3328
          %v3444 = vmul.f32 %v3326, %v3333
          %3446 = vrot.lane.b32.xlu0 %v3444, 96
          %v3447 = vpop.permute.xlu0 %3446
          %v3449 = vsub.f32 %v3443, %v3447
          %v3450 = vmul.f32 %v3326, %v3329
          %v3451 = vmul.f32 %v3326, %v3344
          %3453 = vrot.lane.b32.xlu0 %v3451, 96
          %v3454 = vpop.permute.xlu0 %3453
          %v3456 = vadd.f32 %v3450, %v3454
          %3458 = vrot.lane.b32.xlu0 %v3456, 32
          %v3459 = vpop.permute.xlu0 %3458
          %v3461 = vsel %vm3356, %v3449, %v3459
          %3462 = vst.msk [vmem:[%s530] sm:$0xff] %vm3358, %v3461
          %3463 = vst.msk [vmem:[%s537] sm:$0xff] %vm3358, %v3237
          %v3464 = vmul.f32 %v3326, %v3361
          %v3465 = vmul.f32 %v3326, %v3365
          %3467 = vrot.lane.b32.xlu0 %v3465, 96
          %v3468 = vpop.permute.xlu0 %3467
          %v3470 = vsub.f32 %v3464, %v3468
          %v3471 = vmul.f32 %v3326, %v3374
          %v3472 = vmul.f32 %v3326, %v3378
          %3474 = vrot.lane.b32.xlu0 %v3472, 96
          %v3475 = vpop.permute.xlu0 %3474
          %v3477 = vadd.f32 %v3471, %v3475
          %3479 = vrot.lane.b32.xlu0 %v3470, 64
          %v3480 = vpop.permute.xlu0 %3479
          %3483 = vrot.lane.b32.xlu0 %v3477, 96
          %v3484 = vpop.permute.xlu0 %3483
          %v3486 = vsel %vm3356, %v3480, %v3484
          %s3487 = scalar_lea.vmem %s530, 8 [#allocation12]
          %3488 = vst.msk [vmem:[%s3487] sm:$0xff] %vm3358, %v3486
          %3490 = vrot.lane.b32.xlu0 %v3237, 64
          %v3491 = vpop.permute.xlu0 %3490
          %s3493 = scalar_lea.vmem %s537, 8 [#allocation14]
          %3494 = vst.msk [vmem:[%s3493] sm:$0xff] %vm3358, %v3491
          %v3495 = vmul.f32 %v3327, %v3328
          %v3496 = vmul.f32 %v3327, %v3333
          %3498 = vrot.lane.b32.xlu0 %v3496, 96
          %v3499 = vpop.permute.xlu0 %3498
          %v3501 = vsub.f32 %v3495, %v3499
          %v3502 = vmul.f32 %v3327, %v3329
          %v3503 = vmul.f32 %v3327, %v3344
          %3505 = vrot.lane.b32.xlu0 %v3503, 96
          %v3506 = vpop.permute.xlu0 %3505
          %v3508 = vadd.f32 %v3502, %v3506
          %3510 = vrot.lane.b32.xlu0 %v3508, 32
          %v3511 = vpop.permute.xlu0 %3510
          %v3513 = vsel %vm3356, %v3501, %v3511
          %s3514 = scalar_lea.vmem %s530, 16 [#allocation12]
          %3515 = vst.msk [vmem:[%s3514] sm:$0xff] %vm3358, %v3513
          %s3516 = scalar_lea.vmem %s537, 16 [#allocation14]
          %3517 = vst.msk [vmem:[%s3516] sm:$0xff] %vm3358, %v3238
          %v3518 = vmul.f32 %v3327, %v3361
          %v3519 = vmul.f32 %v3327, %v3365
          %3521 = vrot.lane.b32.xlu0 %v3519, 96
          %v3522 = vpop.permute.xlu0 %3521
          %v3524 = vsub.f32 %v3518, %v3522
          %v3525 = vmul.f32 %v3327, %v3374
          %v3526 = vmul.f32 %v3327, %v3378
          %3528 = vrot.lane.b32.xlu0 %v3526, 96
          %v3529 = vpop.permute.xlu0 %3528
          %v3531 = vadd.f32 %v3525, %v3529
          %3533 = vrot.lane.b32.xlu0 %v3524, 64
          %v3534 = vpop.permute.xlu0 %3533
          %3537 = vrot.lane.b32.xlu0 %v3531, 96
          %v3538 = vpop.permute.xlu0 %3537
          %v3540 = vsel %vm3356, %v3534, %v3538
          %s3541 = scalar_lea.vmem %s530, 24 [#allocation12]
          %3542 = vst.msk [vmem:[%s3541] sm:$0xff] %vm3358, %v3540
          %3544 = vrot.lane.b32.xlu0 %v3238, 64
          %v3545 = vpop.permute.xlu0 %3544
          %s3547 = scalar_lea.vmem %s537, 24 [#allocation14]
          %3548 = vst.msk [vmem:[%s3547] sm:$0xff] %vm3358, %v3545
        $region76: #{tpu_custom_call.1} parent=51 // pred_fallthru
          _
        %s3549 = sand.u32 %s258, 1
        %s3550 = scalar_lea.sflag [#allocation5], %s3549
        %s3551 = sand.u32 %s258, 1
        %s3552 = smul.addr %s3551, 32
        %s3553 = scalar_lea.vmem [#allocation11], %s3552
        %s3554 = sand.u32 %s37, 1
        %s3555 = scalar_lea.sflag [#allocation13], %s3554
        %s3556 = sand.u32 %s286, 1
        %s3557 = smul.addr %s3556, 32
        %s3558 = scalar_lea.vmem [#allocation12], %s3557
        %s3559 = sand.u32 %s37, 1
        %s3560 = scalar_lea.sflag [#allocation13], %s3559
        %s3561 = sand.u32 %s314, 1
        %s3562 = smul.addr %s3561, 32
        %s3563 = scalar_lea.vmem [#allocation14], %s3562
        // Predicated region
        $region77: #{tpu_custom_call.1} parent=51 // pred_check
          %p3564 = pneg %p268
        $region78: #{tpu_custom_call.1} parent=51 // pred_check_branch
          %3566 = sbr.rel (%p3564) target = $region80
        $region79: #{tpu_custom_call.1} parent=51 // pred_region
          %s3568 = ssub.s32 512, 512
          %3569 = vsyncadd %s3550, %s3568
          %s3570 = smul.addr %s42, 8
          %s3571 = sadd.s32 %s43, %s3570
          %s3572 = smul.addr %s3571, 128
          %s3573 = scalar_lea.hbm %s8, %s3572
          %s3574 = sshll.u32 %s3553, 4
          %s3575 = int_to_ptr.vmem [resolvable:$true] %s3574
          %3580 = dma.vmem_to_hbm [thread:$0]  %s3575, 512, %s3573, %s3550, 128, 256, 8
        $region80: #{tpu_custom_call.1} parent=51 // pred_fallthru
          _
        // Predicated region
        $region81: #{tpu_custom_call.1} parent=51 // pred_check
          %p3581 = pneg %p296
        $region82: #{tpu_custom_call.1} parent=51 // pred_check_branch
          %3583 = sbr.rel (%p3581) target = $region84
        $region83: #{tpu_custom_call.1} parent=51 // pred_region
          %s3585 = ssub.s32 512, 512
          %3586 = vsyncadd %s3555, %s3585
          %s3587 = smul.addr %s42, 8
          %s3588 = sadd.s32 %s43, %s3587
          %s3589 = smul.addr %s3588, 128
          %s3590 = scalar_lea.hbm %s9, %s3589
          %s3591 = sshll.u32 %s3558, 4
          %s3592 = int_to_ptr.vmem [resolvable:$true] %s3591
          %3597 = dma.vmem_to_hbm [thread:$0]  %s3592, 512, %s3590, %s3555, 128, 256, 8
        $region84: #{tpu_custom_call.1} parent=51 // pred_fallthru
          _
        // Predicated region
        $region85: #{tpu_custom_call.1} parent=51 // pred_check
          %p3598 = pneg %p324
        $region86: #{tpu_custom_call.1} parent=51 // pred_check_branch
          %3600 = sbr.rel (%p3598) target = $region88
        $region87: #{tpu_custom_call.1} parent=51 // pred_region
          %s3602 = ssub.s32 512, 512
          %3603 = vsyncadd %s3560, %s3602
          %s3604 = smul.addr %s42, 8
          %s3605 = sadd.s32 %s43, %s3604
          %s3606 = smul.addr %s3605, 128
          %s3607 = scalar_lea.hbm %s10, %s3606
          %s3608 = sshll.u32 %s3563, 4
          %s3609 = int_to_ptr.vmem [resolvable:$true] %s3608
          %3614 = dma.vmem_to_hbm [thread:$0]  %s3609, 512, %s3607, %s3560, 128, 256, 8
        $region88: #{tpu_custom_call.1} parent=51 // pred_fallthru
          _
      $region52: #{tpu_custom_call.1} parent=5 // pred_fallthru
        _
      %p3615 = scmp.le.s32.totalorder 2, %s32
      // Predicated region
      $region89: #{tpu_custom_call.1} parent=5 // pred_check
        %p3616 = pneg %p3615
      $region90: #{tpu_custom_call.1} parent=5 // pred_check_branch
        %3618 = sbr.rel (%p3616) target = $region92
      $region91: #{tpu_custom_call.1} parent=5 // pred_region
        %s3619 = ssub.s32 %s32, 2
        // Predicated region
        $region93: #{tpu_custom_call.1} parent=91 // pred_check
          %p3620 = pneg %p274
        $region94: #{tpu_custom_call.1} parent=91 // pred_check_branch
          %3622 = sbr.rel (%p3620) target = $region96
        $region95: #{tpu_custom_call.1} parent=91 // pred_region
          %s3623 = sand.u32 %s259, 1
          %s3624 = scalar_lea.sflag [#allocation5], %s3623
          %s3625 = sand.u32 %s259, 1
          %s3626 = smul.addr %s3625, 32
          %s3627 = scalar_lea.vmem [#allocation11], %s3626
          %3628 = dma.done %s3624, 512
        $region96: #{tpu_custom_call.1} parent=91 // pred_fallthru
          _
        // Predicated region
        $region97: #{tpu_custom_call.1} parent=91 // pred_check
          %p3629 = pneg %p302
        $region98: #{tpu_custom_call.1} parent=91 // pred_check_branch
          %3631 = sbr.rel (%p3629) target = $region100
        $region99: #{tpu_custom_call.1} parent=91 // pred_region
          %s3632 = sand.u32 %s38, 1
          %s3633 = scalar_lea.sflag [#allocation13], %s3632
          %s3634 = sand.u32 %s287, 1
          %s3635 = smul.addr %s3634, 32
          %s3636 = scalar_lea.vmem [#allocation12], %s3635
          %3637 = dma.done %s3633, 512
        $region100: #{tpu_custom_call.1} parent=91 // pred_fallthru
          _
        // Predicated region
        $region101: #{tpu_custom_call.1} parent=91 // pred_check
          %p3638 = pneg %p330
        $region102: #{tpu_custom_call.1} parent=91 // pred_check_branch
          %3640 = sbr.rel (%p3638) target = $region104
        $region103: #{tpu_custom_call.1} parent=91 // pred_region
          %s3641 = sand.u32 %s38, 1
          %s3642 = scalar_lea.sflag [#allocation13], %s3641
          %s3643 = sand.u32 %s315, 1
          %s3644 = smul.addr %s3643, 32
          %s3645 = scalar_lea.vmem [#allocation14], %s3644
          %3646 = dma.done %s3642, 512
        $region104: #{tpu_custom_call.1} parent=91 // pred_fallthru
          _
      $region92: #{tpu_custom_call.1} parent=5 // pred_fallthru
        _
    $region6: #{tpu_custom_call.1} parent=1 // loop_footer
      %s36 = sadd.s32 1, %s32
    $region7: #{tpu_custom_call.1} parent=1 // loop_footer_branch
      %31 = sbr.rel target = $region3
    $region8: #{tpu_custom_call.1} parent=1 // loop_exit
      _
    %3647 = vsyncpa [#allocation4], 1
    %s3648 = scalar_lea.sflag [#allocation4], 1
    %3649 = vsyncpa %s3648, 1
    %3650 = vsyncpa [#allocation7], 1
    %s3651 = scalar_lea.sflag [#allocation7], 1
    %3652 = vsyncpa %s3651, 1
    %3653 = vsyncpa [#allocation10], 1
    %s3654 = scalar_lea.sflag [#allocation10], 1
    %3655 = vsyncpa %s3654, 1
    %3656 = vsyncpa [#allocation5], 1
    %s3657 = scalar_lea.sflag [#allocation5], 1
    %3658 = vsyncpa %s3657, 1
    %3659 = vsyncpa [#allocation13], 1
    %s3660 = scalar_lea.sflag [#allocation13], 1
    %3661 = vsyncpa %s3660, 1

</llo_original>
